<compile_context>
chip_gen: v7x
topology: tpu7x:2x2x1
jax: 0.10.0
libtpu: 0.0.40
codegen_flags: <defaults>
</compile_context>

<pallas_src>
import functools
import math

import jax
import jax.numpy as jnp
from jax.experimental import pallas as pl
from jax.experimental.pallas import tpu as pltpu


# ----------------------------------------------------------------------------
# Fused forward kernel (one grid step = one sequence)
# ----------------------------------------------------------------------------
def fused_transformer_kernel(tok_ref,      # SMEM (B, P) int32   (scalar prefetch)
                             we_t_ref,     # (V, D)         f32
                             wpos_ref,     # (P, D)         f32
                             wqkv_ref,     # (L, D, 3*H*dh) bf16
                             wot_ref,      # (L, H*dh, D)   bf16
                             wint_ref,     # (L, D, d_mlp)  bf16
                             bin_ref,      # (L, 1, d_mlp)  f32
                             woutt_ref,    # (L, d_mlp, D)  bf16
                             bout_ref,     # (L, 1, D)      f32
                             wu_ref,       # (D, Vpad)      bf16
                             out_ref,      # (1, P, Vpad)   f32
                             z_scratch,    # VMEM (P, H*dh) f32
                             *, num_heads, d_head):
    b = pl.program_id(0)
    P, D = wpos_ref.shape
    V = we_t_ref.shape[0]
    L = wqkv_ref.shape[0]
    H, dh = num_heads, d_head
    Hdh = H * dh
    inv_sqrt_dh = 1.0 / math.sqrt(float(dh))

    # ---- Embed + PosEmbed: one-hot(tokens) @ W_E.T  (exact row gather) ------
    row_p = jax.lax.broadcasted_iota(jnp.int32, (P, 1), 0)
    tok_col = jnp.zeros((P, 1), jnp.int32)
    for p in range(P):                              # P scalar SMEM reads
        tok_col = jnp.where(row_p == p, tok_ref[b, p], tok_col)
    onehot = (jax.lax.broadcasted_iota(jnp.int32, (P, V), 1) == tok_col
              ).astype(jnp.float32)                 # (P, V)
    x = jnp.dot(onehot, we_t_ref[...], preferred_element_type=jnp.float32)
    x = x + wpos_ref[...]                           # (P, D) f32 residual stream

    # ---- causal additive bias, hoisted once ---------------------------------
    qi = jax.lax.broadcasted_iota(jnp.int32, (P, P), 0)
    ki = jax.lax.broadcasted_iota(jnp.int32, (P, P), 1)
    neg_bias = jnp.where(ki <= qi, 0.0, -1e10 * inv_sqrt_dh).astype(jnp.float32)

    for l in range(L):
        # --- fused QKV projection: one lane-dense (P, D) @ (D, 3*H*dh) -------
        qkv = jnp.dot(x.astype(jnp.bfloat16), wqkv_ref[l],
                      preferred_element_type=jnp.float32)       # (P, 3*Hdh)

        # --- per-head attention (tiny (P, P) matmuls only) -------------------
        for h in range(H):
            q_h = qkv[:, h * dh:(h + 1) * dh]                       # (P, dh)
            k_h = qkv[:, Hdh + h * dh:Hdh + (h + 1) * dh]
            v_h = qkv[:, 2 * Hdh + h * dh:2 * Hdh + (h + 1) * dh]

            s = jax.lax.dot_general(q_h, k_h, (((1,), (1,)), ((), ())),
                                    preferred_element_type=jnp.float32)
            s = s * inv_sqrt_dh + neg_bias                          # (P, P)
            s = s - jnp.max(s, axis=-1, keepdims=True)
            e = jnp.exp(s)
            attn = e * pl.reciprocal(jnp.sum(e, axis=-1, keepdims=True),
                                     approx=True)
            z_h = jnp.dot(attn, v_h, preferred_element_type=jnp.float32)
            z_scratch[:, h * dh:(h + 1) * dh] = z_h                 # static lane offset

        attn_out = jnp.dot(z_scratch[...].astype(jnp.bfloat16), wot_ref[l],
                           preferred_element_type=jnp.float32)      # (P, D)
        x = x + attn_out

        # --- MLP (ReLU) -------------------------------------------------------
        pre = jnp.dot(x.astype(jnp.bfloat16), wint_ref[l],
                      preferred_element_type=jnp.float32) + bin_ref[l]
        post = jnp.maximum(pre, 0.0)
        mlp = jnp.dot(post.astype(jnp.bfloat16), woutt_ref[l],
                      preferred_element_type=jnp.float32) + bout_ref[l]
        x = x + mlp

    # ---- Unembed (lane-dense padded write) -----------------------------------
    logits = jnp.dot(x.astype(jnp.bfloat16), wu_ref[...],
                     preferred_element_type=jnp.float32)            # (P, Vpad)
    out_ref[0] = logits


# ----------------------------------------------------------------------------
# Wrapper: weight prep + single fused pallas_call
# ----------------------------------------------------------------------------
def transformer_forward(tokens, params, *, num_heads, d_head):
    B, P = tokens.shape
    D, V = params['W_E'].shape
    L = len(params['blocks'])
    d_mlp = params['blocks'][0]['W_in'].shape[0]
    Hdh = num_heads * d_head
    Vpad = max(128, ((V + 127) // 128) * 128)       # lane-dense output store

    # ---- weight prep (trivial, done once by XLA; matmul operands in bf16) ----
    we_t = params['W_E'].T.astype(jnp.float32)                          # (V, D)
    wpos = params['W_pos'][:P].astype(jnp.float32)                      # (P, D)
    wqkv = jnp.stack([jnp.concatenate([blk['W_Q'], blk['W_K'], blk['W_V']],
                                      axis=0).T
                      for blk in params['blocks']]).astype(jnp.bfloat16)  # (L, D, 3*Hdh)
    wot = jnp.stack([blk['W_O'].T for blk in params['blocks']]
                    ).astype(jnp.bfloat16)                              # (L, Hdh, D)
    wint = jnp.stack([blk['W_in'].T for blk in params['blocks']]
                     ).astype(jnp.bfloat16)                             # (L, D, d_mlp)
    bin_ = jnp.stack([blk['b_in'] for blk in params['blocks']]
                     ).astype(jnp.float32)                              # (L, 1, d_mlp)
    woutt = jnp.stack([blk['W_out'].T for blk in params['blocks']]
                      ).astype(jnp.bfloat16)                            # (L, d_mlp, D)
    bout = jnp.stack([blk['b_out'] for blk in params['blocks']]
                     ).astype(jnp.float32)                              # (L, 1, D)
    wu = jnp.zeros((D, Vpad), jnp.float32).at[:, :V].set(params['W_U']
                                                         ).astype(jnp.bfloat16)

    kernel = functools.partial(fused_transformer_kernel,
                               num_heads=num_heads, d_head=d_head)

    grid_spec = pltpu.PrefetchScalarGridSpec(
        num_scalar_prefetch=1,                     # tokens -> SMEM
        grid=(B,),
        in_specs=[
            pl.BlockSpec((V, P and D), lambda b, tok: (0, 0)) if False else
            pl.BlockSpec((V, D), lambda b, tok: (0, 0)),            # W_E.T
            pl.BlockSpec((P, D), lambda b, tok: (0, 0)),            # W_pos
            pl.BlockSpec((L, D, 3 * Hdh), lambda b, tok: (0, 0, 0)),  # W_qkv
            pl.BlockSpec((L, Hdh, D), lambda b, tok: (0, 0, 0)),    # W_O.T
            pl.BlockSpec((L, D, d_mlp), lambda b, tok: (0, 0, 0)),  # W_in.T
            pl.BlockSpec((L, 1, d_mlp), lambda b, tok: (0, 0, 0)),  # b_in
            pl.BlockSpec((L, d_mlp, D), lambda b, tok: (0, 0, 0)),  # W_out.T
            pl.BlockSpec((L, 1, D), lambda b, tok: (0, 0, 0)),      # b_out
            pl.BlockSpec((D, Vpad), lambda b, tok: (0, 0)),         # W_U (padded)
        ],
        out_specs=pl.BlockSpec((1, P, Vpad), lambda b, tok: (b, 0, 0)),
        scratch_shapes=[pltpu.VMEM((P, Hdh), jnp.float32)],
    )

    padded_logits = pl.pallas_call(
        kernel,
        out_shape=jax.ShapeDtypeStruct((B, P, Vpad), jnp.float32),
        grid_spec=grid_spec,
        compiler_params=pltpu.CompilerParams(
            dimension_semantics=("parallel",)),     # shard batch over v7x cores
    )(tokens, we_t, wpos, wqkv, wot, wint, bin_, woutt, bout, wu)

    return padded_logits[:, :, :V]


# ----------------------------------------------------------------------------
# Pure-JAX f32 reference (mirrors the PyTorch forward exactly)
# ----------------------------------------------------------------------------
def reference_forward(tokens, params, *, num_heads, d_head):
    x = params['W_E'].T[tokens]
    P = tokens.shape[-1]
    x = x + params['W_pos'][:P]
    row = jnp.arange(P)[:, None]
    col = jnp.arange(P)[None, :]
    mask = (col <= row).astype(jnp.float32)
    for blk in params['blocks']:
        B = x.shape[0]
        H, dh = num_heads, d_head
        WK = blk['W_K'].reshape(H, dh, -1)
        WQ = blk['W_Q'].reshape(H, dh, -1)
        WV = blk['W_V'].reshape(H, dh, -1)
        k = jnp.einsum('ihd,bpd->biph', WK, x)
        q = jnp.einsum('ihd,bpd->biph', WQ, x)
        v = jnp.einsum('ihd,bpd->biph', WV, x)
        scores = jnp.einsum('biph,biqh->biqp', k, q)
        scores = scores * mask - 1e10 * (1.0 - mask)
        attn = jax.nn.softmax(scores / math.sqrt(dh), axis=-1)
        z = jnp.einsum('biph,biqp->biqh', v, attn)
        z_flat = jnp.transpose(z, (0, 2, 1, 3)).reshape(B, P, H * dh)
        attn_out = jnp.einsum('df,bqf->bqd', blk['W_O'], z_flat)
        x = x + attn_out
        pre = jnp.einsum('md,bpd->bpm', blk['W_in'], x) + blk['b_in'][0]
        post = jnp.maximum(pre, 0.0)
        mlp = jnp.einsum('dm,bpm->bpd', blk['W_out'], post) + blk['b_out'][0]
        x = x + mlp
    return x @ params['W_U']


# ----------------------------------------------------------------------------
# Parameter init (deterministic, mirrors the torch init shapes/scales)
# ----------------------------------------------------------------------------
def init_params(key, *, num_layers, d_vocab, d_model, d_mlp, d_head,
                num_heads, n_ctx):
    keys = iter(jax.random.split(key, 3 + 6 * num_layers))
    p = {
        'W_E': jax.random.normal(next(keys), (d_model, d_vocab),
                                 jnp.float32) / math.sqrt(d_model),
        'W_pos': jax.random.normal(next(keys), (n_ctx, d_model),
                                   jnp.float32) / math.sqrt(d_model),
        'W_U': jax.random.normal(next(keys), (d_model, d_vocab),
                                 jnp.float32) / math.sqrt(d_vocab),
        'blocks': [],
    }
    for _ in range(num_layers):
        blk = {
            'W_K': jax.random.normal(next(keys), (num_heads * d_head, d_model),
                                     jnp.float32) / math.sqrt(d_model),
            'W_Q': jax.random.normal(next(keys), (num_heads * d_head, d_model),
                                     jnp.float32) / math.sqrt(d_model),
            'W_V': jax.random.normal(next(keys), (num_heads * d_head, d_model),
                                     jnp.float32) / math.sqrt(d_model),
            'W_O': jax.random.normal(next(keys), (d_model, num_heads * d_head),
                                     jnp.float32) / math.sqrt(d_model),
            'W_in': jax.random.normal(next(keys), (d_mlp, d_model),
                                      jnp.float32) / math.sqrt(d_model),
            'b_in': jnp.zeros((1, d_mlp), jnp.float32),
            'W_out': jax.random.normal(next(keys), (d_model, d_mlp),
                                       jnp.float32) / math.sqrt(d_model),
            'b_out': jnp.zeros((1, d_model), jnp.float32),
        }
        p['blocks'].append(blk)
    return p


# ----------------------------------------------------------------------------
if __name__ == "__main__":
    num_layers = 2
    d_vocab = 64
    d_model = 128
    d_mlp = 512
    d_head = 32
    num_heads = 4
    n_ctx = 8
    batch = 4

    key = jax.random.PRNGKey(0)
    pkey, tkey = jax.random.split(key)
    params = init_params(pkey, num_layers=num_layers, d_vocab=d_vocab,
                         d_model=d_model, d_mlp=d_mlp, d_head=d_head,
                         num_heads=num_heads, n_ctx=n_ctx)
    tokens = jax.random.randint(tkey, (batch, n_ctx), 0, d_vocab, jnp.int32)

    fwd = jax.jit(functools.partial(transformer_forward,
                                    num_heads=num_heads, d_head=d_head))
    logits = jax.block_until_ready(fwd(tokens, params))

    ref = jax.block_until_ready(
        reference_forward(tokens, params, num_heads=num_heads, d_head=d_head))

    max_err = float(jnp.max(jnp.abs(logits - ref)))
    scale = float(jnp.max(jnp.abs(ref))) + 1.0
    assert logits.shape == (batch, n_ctx, d_vocab)
    # bf16 MXU operands introduce ~1e-3 relative drift (flagged in review).
    assert max_err / scale < 2e-2, f"mismatch: max_err={max_err}, scale={scale}"

    print("KERNEL_OK")
</pallas_src>

<mosaic_0001>
module attributes {stable_mosaic.version = 11 : i64} {
  func.func @fused_transformer_kernel(%arg0: i32, %arg1: memref<4x8xi32, #tpu.memory_space<smem>>, %arg2: memref<64x128xf32, #tpu.memory_space<vmem>>, %arg3: memref<8x128xf32, #tpu.memory_space<vmem>>, %arg4: memref<2x128x384xbf16, #tpu.memory_space<vmem>>, %arg5: memref<2x128x128xbf16, #tpu.memory_space<vmem>>, %arg6: memref<2x128x512xbf16, #tpu.memory_space<vmem>>, %arg7: memref<2x1x512xf32, #tpu.memory_space<vmem>>, %arg8: memref<2x512x128xbf16, #tpu.memory_space<vmem>>, %arg9: memref<2x1x128xf32, #tpu.memory_space<vmem>>, %arg10: memref<128x128xbf16, #tpu.memory_space<vmem>>, %arg11: memref<1x8x128xf32, #tpu.memory_space<vmem>>, %arg12: memref<8x128xf32, #tpu.memory_space<vmem>>) attributes {dimension_semantics = [#tpu.dimension_semantics<parallel>], iteration_bounds = array<i64: 4>, scalar_prefetch = 1 : i64, scratch_operands = 1 : i64, tpu.core_type = #tpu.core_type<tc>, window_params = [{pipeline_mode = #tpu.pipeline_mode<synchronous>, transform_indices = @transform_0, window_bounds = array<i64: 64, 128>}, {pipeline_mode = #tpu.pipeline_mode<synchronous>, transform_indices = @transform_1, window_bounds = array<i64: 8, 128>}, {pipeline_mode = #tpu.pipeline_mode<synchronous>, transform_indices = @transform_2, window_bounds = array<i64: 2, 128, 384>}, {pipeline_mode = #tpu.pipeline_mode<synchronous>, transform_indices = @transform_3, window_bounds = array<i64: 2, 128, 128>}, {pipeline_mode = #tpu.pipeline_mode<synchronous>, transform_indices = @transform_4, window_bounds = array<i64: 2, 128, 512>}, {pipeline_mode = #tpu.pipeline_mode<synchronous>, transform_indices = @transform_5, window_bounds = array<i64: 2, 1, 512>}, {pipeline_mode = #tpu.pipeline_mode<synchronous>, transform_indices = @transform_6, window_bounds = array<i64: 2, 512, 128>}, {pipeline_mode = #tpu.pipeline_mode<synchronous>, transform_indices = @transform_7, window_bounds = array<i64: 2, 1, 128>}, {pipeline_mode = #tpu.pipeline_mode<synchronous>, transform_indices = @transform_8, window_bounds = array<i64: 128, 128>}, {transform_indices = @transform_9, window_bounds = array<i64: 1, 8, 128>}]} {
    %0 = tpu.iota {dimensions = array<i32: 0>} : vector<8x1xi32>
    %c0_i32 = arith.constant 0 : i32
    %1 = vector.broadcast %c0_i32 : i32 to vector<8x1xi32>
    %c0_i32_0 = arith.constant 0 : i32
    %2 = vector.broadcast %c0_i32_0 : i32 to vector<8x1xi32>
    %3 = arith.cmpi eq, %0, %2 : vector<8x1xi32>
    %4 = arith.index_cast %arg0 : i32 to index
    %c0 = arith.constant 0 : index
    %5 = memref.load %arg1[%4, %c0] : memref<4x8xi32, #tpu.memory_space<smem>>
    %6 = vector.broadcast %5 : i32 to vector<8x1xi32>
    %7 = arith.select %3, %6, %1 : vector<8x1xi1>, vector<8x1xi32>
    %c1_i32 = arith.constant 1 : i32
    %8 = vector.broadcast %c1_i32 : i32 to vector<8x1xi32>
    %9 = arith.cmpi eq, %0, %8 : vector<8x1xi32>
    %10 = arith.index_cast %arg0 : i32 to index
    %c1 = arith.constant 1 : index
    %11 = memref.load %arg1[%10, %c1] : memref<4x8xi32, #tpu.memory_space<smem>>
    %12 = vector.broadcast %11 : i32 to vector<8x1xi32>
    %13 = arith.select %9, %12, %7 : vector<8x1xi1>, vector<8x1xi32>
    %c2_i32 = arith.constant 2 : i32
    %14 = vector.broadcast %c2_i32 : i32 to vector<8x1xi32>
    %15 = arith.cmpi eq, %0, %14 : vector<8x1xi32>
    %16 = arith.index_cast %arg0 : i32 to index
    %c2 = arith.constant 2 : index
    %17 = memref.load %arg1[%16, %c2] : memref<4x8xi32, #tpu.memory_space<smem>>
    %18 = vector.broadcast %17 : i32 to vector<8x1xi32>
    %19 = arith.select %15, %18, %13 : vector<8x1xi1>, vector<8x1xi32>
    %c3_i32 = arith.constant 3 : i32
    %20 = vector.broadcast %c3_i32 : i32 to vector<8x1xi32>
    %21 = arith.cmpi eq, %0, %20 : vector<8x1xi32>
    %22 = arith.index_cast %arg0 : i32 to index
    %c3 = arith.constant 3 : index
    %23 = memref.load %arg1[%22, %c3] : memref<4x8xi32, #tpu.memory_space<smem>>
    %24 = vector.broadcast %23 : i32 to vector<8x1xi32>
    %25 = arith.select %21, %24, %19 : vector<8x1xi1>, vector<8x1xi32>
    %c4_i32 = arith.constant 4 : i32
    %26 = vector.broadcast %c4_i32 : i32 to vector<8x1xi32>
    %27 = arith.cmpi eq, %0, %26 : vector<8x1xi32>
    %28 = arith.index_cast %arg0 : i32 to index
    %c4 = arith.constant 4 : index
    %29 = memref.load %arg1[%28, %c4] : memref<4x8xi32, #tpu.memory_space<smem>>
    %30 = vector.broadcast %29 : i32 to vector<8x1xi32>
    %31 = arith.select %27, %30, %25 : vector<8x1xi1>, vector<8x1xi32>
    %c5_i32 = arith.constant 5 : i32
    %32 = vector.broadcast %c5_i32 : i32 to vector<8x1xi32>
    %33 = arith.cmpi eq, %0, %32 : vector<8x1xi32>
    %34 = arith.index_cast %arg0 : i32 to index
    %c5 = arith.constant 5 : index
    %35 = memref.load %arg1[%34, %c5] : memref<4x8xi32, #tpu.memory_space<smem>>
    %36 = vector.broadcast %35 : i32 to vector<8x1xi32>
    %37 = arith.select %33, %36, %31 : vector<8x1xi1>, vector<8x1xi32>
    %c6_i32 = arith.constant 6 : i32
    %38 = vector.broadcast %c6_i32 : i32 to vector<8x1xi32>
    %39 = arith.cmpi eq, %0, %38 : vector<8x1xi32>
    %40 = arith.index_cast %arg0 : i32 to index
    %c6 = arith.constant 6 : index
    %41 = memref.load %arg1[%40, %c6] : memref<4x8xi32, #tpu.memory_space<smem>>
    %42 = vector.broadcast %41 : i32 to vector<8x1xi32>
    %43 = arith.select %39, %42, %37 : vector<8x1xi1>, vector<8x1xi32>
    %c7_i32 = arith.constant 7 : i32
    %44 = vector.broadcast %c7_i32 : i32 to vector<8x1xi32>
    %45 = arith.cmpi eq, %0, %44 : vector<8x1xi32>
    %46 = arith.index_cast %arg0 : i32 to index
    %c7 = arith.constant 7 : index
    %47 = memref.load %arg1[%46, %c7] : memref<4x8xi32, #tpu.memory_space<smem>>
    %48 = vector.broadcast %47 : i32 to vector<8x1xi32>
    %49 = arith.select %45, %48, %43 : vector<8x1xi1>, vector<8x1xi32>
    %50 = tpu.iota {dimensions = array<i32: 1>} : vector<8x64xi32>
    %51 = vector.broadcast %49 : vector<8x1xi32> to vector<8x64xi32>
    %52 = arith.cmpi eq, %50, %51 : vector<8x64xi32>
    %53 = arith.extui %52 : vector<8x64xi1> to vector<8x64xi32>
    %54 = arith.sitofp %53 : vector<8x64xi32> to vector<8x64xf32>
    %c0_1 = arith.constant 0 : index
    %c0_2 = arith.constant 0 : index
    %55 = vector.load %arg2[%c0_1, %c0_2] : memref<64x128xf32, #tpu.memory_space<vmem>>, vector<64x128xf32>
    %cst = arith.constant dense<0.000000e+00> : vector<8x128xf32>
    %56 = tpu.matmul %54, %55, %cst {dimension_numbers = #tpu.dot_dimension_numbers<[1], [0], [0], [1], [0, 0, 1, 1], [], []>} : vector<8x64xf32>, vector<64x128xf32>, vector<8x128xf32> -> vector<8x128xf32>
    %c0_3 = arith.constant 0 : index
    %c0_4 = arith.constant 0 : index
    %57 = vector.load %arg3[%c0_3, %c0_4] : memref<8x128xf32, #tpu.memory_space<vmem>>, vector<8x128xf32>
    %58 = arith.addf %56, %57 : vector<8x128xf32>
    %59 = tpu.iota {dimensions = array<i32: 0>} : vector<8x8xi32>
    %60 = tpu.iota {dimensions = array<i32: 1>} : vector<8x8xi32>
    %61 = arith.cmpi sle, %60, %59 : vector<8x8xi32>
    %cst_5 = arith.constant 0.000000e+00 : f32
    %cst_6 = arith.constant -1.76776691E+9 : f32
    %62 = vector.broadcast %cst_5 : f32 to vector<8x8xf32>
    %63 = vector.broadcast %cst_6 : f32 to vector<8x8xf32>
    %64 = arith.select %61, %62, %63 : vector<8x8xi1>, vector<8x8xf32>
    %65 = arith.truncf %58 : vector<8x128xf32> to vector<8x128xbf16>
    %c0_7 = arith.constant 0 : index
    %c0_8 = arith.constant 0 : index
    %c0_9 = arith.constant 0 : index
    %66 = vector.load %arg4[%c0_7, %c0_8, %c0_9] : memref<2x128x384xbf16, #tpu.memory_space<vmem>>, vector<1x128x384xbf16>
    %67 = vector.shape_cast %66 : vector<1x128x384xbf16> to vector<128x384xbf16>
    %cst_10 = arith.constant dense<0.000000e+00> : vector<8x384xf32>
    %68 = tpu.matmul %65, %67, %cst_10 {dimension_numbers = #tpu.dot_dimension_numbers<[1], [0], [0], [1], [0, 0, 1, 1], [], []>} : vector<8x128xbf16>, vector<128x384xbf16>, vector<8x384xf32> -> vector<8x384xf32>
    %69 = vector.extract_strided_slice %68 {offsets = [0, 0], sizes = [8, 32], strides = [1, 1]} : vector<8x384xf32> to vector<8x32xf32>
    %70 = vector.extract_strided_slice %68 {offsets = [0, 128], sizes = [8, 32], strides = [1, 1]} : vector<8x384xf32> to vector<8x32xf32>
    %71 = vector.extract_strided_slice %68 {offsets = [0, 256], sizes = [8, 32], strides = [1, 1]} : vector<8x384xf32> to vector<8x32xf32>
    %cst_11 = arith.constant dense<0.000000e+00> : vector<8x8xf32>
    %72 = tpu.matmul %69, %70, %cst_11 {dimension_numbers = #tpu.dot_dimension_numbers<[1], [1], [0], [0], [0, 0, 1, 0], [], []>} : vector<8x32xf32>, vector<8x32xf32>, vector<8x8xf32> -> vector<8x8xf32>
    %cst_12 = arith.constant 0.176776692 : f32
    %73 = vector.broadcast %cst_12 : f32 to vector<8x8xf32>
    %74 = arith.mulf %72, %73 : vector<8x8xf32>
    %75 = arith.addf %74, %64 : vector<8x8xf32>
    %cst_13 = arith.constant dense<0xFF800000> : vector<8xf32>
    %76 = vector.multi_reduction <maximumf>, %75, %cst_13 [1] : vector<8x8xf32> to vector<8xf32>
    %77 = vector.shape_cast %76 : vector<8xf32> to vector<8x1xf32>
    %78 = vector.broadcast %77 : vector<8x1xf32> to vector<8x8xf32>
    %79 = arith.subf %75, %78 : vector<8x8xf32>
    %80 = math.exp %79 : vector<8x8xf32>
    %cst_14 = arith.constant dense<0.000000e+00> : vector<8xf32>
    %81 = vector.multi_reduction <add>, %80, %cst_14 [1] : vector<8x8xf32> to vector<8xf32>
    %82 = vector.shape_cast %81 : vector<8xf32> to vector<8x1xf32>
    %83 = tpu.reciprocal %82 {approx = true} : vector<8x1xf32> -> vector<8x1xf32>
    %84 = vector.broadcast %83 : vector<8x1xf32> to vector<8x8xf32>
    %85 = arith.mulf %80, %84 : vector<8x8xf32>
    %cst_15 = arith.constant dense<0.000000e+00> : vector<8x32xf32>
    %86 = tpu.matmul %85, %71, %cst_15 {dimension_numbers = #tpu.dot_dimension_numbers<[1], [0], [0], [1], [0, 0, 1, 1], [], []>} : vector<8x8xf32>, vector<8x32xf32>, vector<8x32xf32> -> vector<8x32xf32>
    %c0_16 = arith.constant 0 : index
    %c0_17 = arith.constant 0 : index
    %87 = vector.load %arg12[%c0_16, %c0_17] : memref<8x128xf32, #tpu.memory_space<vmem>>, vector<8x32xf32>
    tpu.vector_store %arg12[%c0_16, %c0_17], %86 {strides = array<i32>} : memref<8x128xf32, #tpu.memory_space<vmem>>, vector<8x32xf32>,
    %88 = vector.extract_strided_slice %68 {offsets = [0, 32], sizes = [8, 32], strides = [1, 1]} : vector<8x384xf32> to vector<8x32xf32>
    %89 = vector.extract_strided_slice %68 {offsets = [0, 160], sizes = [8, 32], strides = [1, 1]} : vector<8x384xf32> to vector<8x32xf32>
    %90 = vector.extract_strided_slice %68 {offsets = [0, 288], sizes = [8, 32], strides = [1, 1]} : vector<8x384xf32> to vector<8x32xf32>
    %cst_18 = arith.constant dense<0.000000e+00> : vector<8x8xf32>
    %91 = tpu.matmul %88, %89, %cst_18 {dimension_numbers = #tpu.dot_dimension_numbers<[1], [1], [0], [0], [0, 0, 1, 0], [], []>} : vector<8x32xf32>, vector<8x32xf32>, vector<8x8xf32> -> vector<8x8xf32>
    %cst_19 = arith.constant 0.176776692 : f32
    %92 = vector.broadcast %cst_19 : f32 to vector<8x8xf32>
    %93 = arith.mulf %91, %92 : vector<8x8xf32>
    %94 = arith.addf %93, %64 : vector<8x8xf32>
    %cst_20 = arith.constant dense<0xFF800000> : vector<8xf32>
    %95 = vector.multi_reduction <maximumf>, %94, %cst_20 [1] : vector<8x8xf32> to vector<8xf32>
    %96 = vector.shape_cast %95 : vector<8xf32> to vector<8x1xf32>
    %97 = vector.broadcast %96 : vector<8x1xf32> to vector<8x8xf32>
    %98 = arith.subf %94, %97 : vector<8x8xf32>
    %99 = math.exp %98 : vector<8x8xf32>
    %cst_21 = arith.constant dense<0.000000e+00> : vector<8xf32>
    %100 = vector.multi_reduction <add>, %99, %cst_21 [1] : vector<8x8xf32> to vector<8xf32>
    %101 = vector.shape_cast %100 : vector<8xf32> to vector<8x1xf32>
    %102 = tpu.reciprocal %101 {approx = true} : vector<8x1xf32> -> vector<8x1xf32>
    %103 = vector.broadcast %102 : vector<8x1xf32> to vector<8x8xf32>
    %104 = arith.mulf %99, %103 : vector<8x8xf32>
    %cst_22 = arith.constant dense<0.000000e+00> : vector<8x32xf32>
    %105 = tpu.matmul %104, %90, %cst_22 {dimension_numbers = #tpu.dot_dimension_numbers<[1], [0], [0], [1], [0, 0, 1, 1], [], []>} : vector<8x8xf32>, vector<8x32xf32>, vector<8x32xf32> -> vector<8x32xf32>
    %c0_23 = arith.constant 0 : index
    %c32 = arith.constant 32 : index
    %106 = vector.load %arg12[%c0_23, %c32] : memref<8x128xf32, #tpu.memory_space<vmem>>, vector<8x32xf32>
    tpu.vector_store %arg12[%c0_23, %c32], %105 {strides = array<i32>} : memref<8x128xf32, #tpu.memory_space<vmem>>, vector<8x32xf32>,
    %107 = vector.extract_strided_slice %68 {offsets = [0, 64], sizes = [8, 32], strides = [1, 1]} : vector<8x384xf32> to vector<8x32xf32>
    %108 = vector.extract_strided_slice %68 {offsets = [0, 192], sizes = [8, 32], strides = [1, 1]} : vector<8x384xf32> to vector<8x32xf32>
    %109 = vector.extract_strided_slice %68 {offsets = [0, 320], sizes = [8, 32], strides = [1, 1]} : vector<8x384xf32> to vector<8x32xf32>
    %cst_24 = arith.constant dense<0.000000e+00> : vector<8x8xf32>
    %110 = tpu.matmul %107, %108, %cst_24 {dimension_numbers = #tpu.dot_dimension_numbers<[1], [1], [0], [0], [0, 0, 1, 0], [], []>} : vector<8x32xf32>, vector<8x32xf32>, vector<8x8xf32> -> vector<8x8xf32>
    %cst_25 = arith.constant 0.176776692 : f32
    %111 = vector.broadcast %cst_25 : f32 to vector<8x8xf32>
    %112 = arith.mulf %110, %111 : vector<8x8xf32>
    %113 = arith.addf %112, %64 : vector<8x8xf32>
    %cst_26 = arith.constant dense<0xFF800000> : vector<8xf32>
    %114 = vector.multi_reduction <maximumf>, %113, %cst_26 [1] : vector<8x8xf32> to vector<8xf32>
    %115 = vector.shape_cast %114 : vector<8xf32> to vector<8x1xf32>
    %116 = vector.broadcast %115 : vector<8x1xf32> to vector<8x8xf32>
    %117 = arith.subf %113, %116 : vector<8x8xf32>
    %118 = math.exp %117 : vector<8x8xf32>
    %cst_27 = arith.constant dense<0.000000e+00> : vector<8xf32>
    %119 = vector.multi_reduction <add>, %118, %cst_27 [1] : vector<8x8xf32> to vector<8xf32>
    %120 = vector.shape_cast %119 : vector<8xf32> to vector<8x1xf32>
    %121 = tpu.reciprocal %120 {approx = true} : vector<8x1xf32> -> vector<8x1xf32>
    %122 = vector.broadcast %121 : vector<8x1xf32> to vector<8x8xf32>
    %123 = arith.mulf %118, %122 : vector<8x8xf32>
    %cst_28 = arith.constant dense<0.000000e+00> : vector<8x32xf32>
    %124 = tpu.matmul %123, %109, %cst_28 {dimension_numbers = #tpu.dot_dimension_numbers<[1], [0], [0], [1], [0, 0, 1, 1], [], []>} : vector<8x8xf32>, vector<8x32xf32>, vector<8x32xf32> -> vector<8x32xf32>
    %c0_29 = arith.constant 0 : index
    %c64 = arith.constant 64 : index
    %125 = vector.load %arg12[%c0_29, %c64] : memref<8x128xf32, #tpu.memory_space<vmem>>, vector<8x32xf32>
    tpu.vector_store %arg12[%c0_29, %c64], %124 {strides = array<i32>} : memref<8x128xf32, #tpu.memory_space<vmem>>, vector<8x32xf32>,
    %126 = vector.extract_strided_slice %68 {offsets = [0, 96], sizes = [8, 32], strides = [1, 1]} : vector<8x384xf32> to vector<8x32xf32>
    %127 = vector.extract_strided_slice %68 {offsets = [0, 224], sizes = [8, 32], strides = [1, 1]} : vector<8x384xf32> to vector<8x32xf32>
    %128 = vector.extract_strided_slice %68 {offsets = [0, 352], sizes = [8, 32], strides = [1, 1]} : vector<8x384xf32> to vector<8x32xf32>
    %cst_30 = arith.constant dense<0.000000e+00> : vector<8x8xf32>
    %129 = tpu.matmul %126, %127, %cst_30 {dimension_numbers = #tpu.dot_dimension_numbers<[1], [1], [0], [0], [0, 0, 1, 0], [], []>} : vector<8x32xf32>, vector<8x32xf32>, vector<8x8xf32> -> vector<8x8xf32>
    %cst_31 = arith.constant 0.176776692 : f32
    %130 = vector.broadcast %cst_31 : f32 to vector<8x8xf32>
    %131 = arith.mulf %129, %130 : vector<8x8xf32>
    %132 = arith.addf %131, %64 : vector<8x8xf32>
    %cst_32 = arith.constant dense<0xFF800000> : vector<8xf32>
    %133 = vector.multi_reduction <maximumf>, %132, %cst_32 [1] : vector<8x8xf32> to vector<8xf32>
    %134 = vector.shape_cast %133 : vector<8xf32> to vector<8x1xf32>
    %135 = vector.broadcast %134 : vector<8x1xf32> to vector<8x8xf32>
    %136 = arith.subf %132, %135 : vector<8x8xf32>
    %137 = math.exp %136 : vector<8x8xf32>
    %cst_33 = arith.constant dense<0.000000e+00> : vector<8xf32>
    %138 = vector.multi_reduction <add>, %137, %cst_33 [1] : vector<8x8xf32> to vector<8xf32>
    %139 = vector.shape_cast %138 : vector<8xf32> to vector<8x1xf32>
    %140 = tpu.reciprocal %139 {approx = true} : vector<8x1xf32> -> vector<8x1xf32>
    %141 = vector.broadcast %140 : vector<8x1xf32> to vector<8x8xf32>
    %142 = arith.mulf %137, %141 : vector<8x8xf32>
    %cst_34 = arith.constant dense<0.000000e+00> : vector<8x32xf32>
    %143 = tpu.matmul %142, %128, %cst_34 {dimension_numbers = #tpu.dot_dimension_numbers<[1], [0], [0], [1], [0, 0, 1, 1], [], []>} : vector<8x8xf32>, vector<8x32xf32>, vector<8x32xf32> -> vector<8x32xf32>
    %c0_35 = arith.constant 0 : index
    %c96 = arith.constant 96 : index
    %144 = vector.load %arg12[%c0_35, %c96] : memref<8x128xf32, #tpu.memory_space<vmem>>, vector<8x32xf32>
    tpu.vector_store %arg12[%c0_35, %c96], %143 {strides = array<i32>} : memref<8x128xf32, #tpu.memory_space<vmem>>, vector<8x32xf32>,
    %c0_36 = arith.constant 0 : index
    %c0_37 = arith.constant 0 : index
    %145 = vector.load %arg12[%c0_36, %c0_37] : memref<8x128xf32, #tpu.memory_space<vmem>>, vector<8x128xf32>
    %146 = arith.truncf %145 : vector<8x128xf32> to vector<8x128xbf16>
    %c0_38 = arith.constant 0 : index
    %c0_39 = arith.constant 0 : index
    %c0_40 = arith.constant 0 : index
    %147 = vector.load %arg5[%c0_38, %c0_39, %c0_40] : memref<2x128x128xbf16, #tpu.memory_space<vmem>>, vector<1x128x128xbf16>
    %148 = vector.shape_cast %147 : vector<1x128x128xbf16> to vector<128x128xbf16>
    %cst_41 = arith.constant dense<0.000000e+00> : vector<8x128xf32>
    %149 = tpu.matmul %146, %148, %cst_41 {dimension_numbers = #tpu.dot_dimension_numbers<[1], [0], [0], [1], [0, 0, 1, 1], [], []>} : vector<8x128xbf16>, vector<128x128xbf16>, vector<8x128xf32> -> vector<8x128xf32>
    %150 = arith.addf %58, %149 : vector<8x128xf32>
    %151 = arith.truncf %150 : vector<8x128xf32> to vector<8x128xbf16>
    %c0_42 = arith.constant 0 : index
    %c0_43 = arith.constant 0 : index
    %c0_44 = arith.constant 0 : index
    %152 = vector.load %arg6[%c0_42, %c0_43, %c0_44] : memref<2x128x512xbf16, #tpu.memory_space<vmem>>, vector<1x128x512xbf16>
    %153 = vector.shape_cast %152 : vector<1x128x512xbf16> to vector<128x512xbf16>
    %cst_45 = arith.constant dense<0.000000e+00> : vector<8x512xf32>
    %154 = tpu.matmul %151, %153, %cst_45 {dimension_numbers = #tpu.dot_dimension_numbers<[1], [0], [0], [1], [0, 0, 1, 1], [], []>} : vector<8x128xbf16>, vector<128x512xbf16>, vector<8x512xf32> -> vector<8x512xf32>
    %c0_46 = arith.constant 0 : index
    %c0_47 = arith.constant 0 : index
    %c0_48 = arith.constant 0 : index
    %155 = vector.load %arg7[%c0_46, %c0_47, %c0_48] : memref<2x1x512xf32, #tpu.memory_space<vmem>>, vector<1x1x512xf32>
    %156 = vector.shape_cast %155 : vector<1x1x512xf32> to vector<1x512xf32>
    %157 = vector.broadcast %156 : vector<1x512xf32> to vector<8x512xf32>
    %158 = arith.addf %154, %157 : vector<8x512xf32>
    %cst_49 = arith.constant 0.000000e+00 : f32
    %159 = vector.broadcast %cst_49 : f32 to vector<8x512xf32>
    %160 = arith.maximumf %158, %159 : vector<8x512xf32>
    %161 = arith.truncf %160 : vector<8x512xf32> to vector<8x512xbf16>
    %c0_50 = arith.constant 0 : index
    %c0_51 = arith.constant 0 : index
    %c0_52 = arith.constant 0 : index
    %162 = vector.load %arg8[%c0_50, %c0_51, %c0_52] : memref<2x512x128xbf16, #tpu.memory_space<vmem>>, vector<1x512x128xbf16>
    %163 = vector.shape_cast %162 : vector<1x512x128xbf16> to vector<512x128xbf16>
    %cst_53 = arith.constant dense<0.000000e+00> : vector<8x128xf32>
    %164 = tpu.matmul %161, %163, %cst_53 {dimension_numbers = #tpu.dot_dimension_numbers<[1], [0], [0], [1], [0, 0, 1, 1], [], []>} : vector<8x512xbf16>, vector<512x128xbf16>, vector<8x128xf32> -> vector<8x128xf32>
    %c0_54 = arith.constant 0 : index
    %c0_55 = arith.constant 0 : index
    %c0_56 = arith.constant 0 : index
    %165 = vector.load %arg9[%c0_54, %c0_55, %c0_56] : memref<2x1x128xf32, #tpu.memory_space<vmem>>, vector<1x1x128xf32>
    %166 = vector.shape_cast %165 : vector<1x1x128xf32> to vector<1x128xf32>
    %167 = vector.broadcast %166 : vector<1x128xf32> to vector<8x128xf32>
    %168 = arith.addf %164, %167 : vector<8x128xf32>
    %169 = arith.addf %150, %168 : vector<8x128xf32>
    %170 = arith.truncf %169 : vector<8x128xf32> to vector<8x128xbf16>
    %c1_57 = arith.constant 1 : index
    %c0_58 = arith.constant 0 : index
    %c0_59 = arith.constant 0 : index
    %171 = vector.load %arg4[%c1_57, %c0_58, %c0_59] : memref<2x128x384xbf16, #tpu.memory_space<vmem>>, vector<1x128x384xbf16>
    %172 = vector.shape_cast %171 : vector<1x128x384xbf16> to vector<128x384xbf16>
    %cst_60 = arith.constant dense<0.000000e+00> : vector<8x384xf32>
    %173 = tpu.matmul %170, %172, %cst_60 {dimension_numbers = #tpu.dot_dimension_numbers<[1], [0], [0], [1], [0, 0, 1, 1], [], []>} : vector<8x128xbf16>, vector<128x384xbf16>, vector<8x384xf32> -> vector<8x384xf32>
    %174 = vector.extract_strided_slice %173 {offsets = [0, 0], sizes = [8, 32], strides = [1, 1]} : vector<8x384xf32> to vector<8x32xf32>
    %175 = vector.extract_strided_slice %173 {offsets = [0, 128], sizes = [8, 32], strides = [1, 1]} : vector<8x384xf32> to vector<8x32xf32>
    %176 = vector.extract_strided_slice %173 {offsets = [0, 256], sizes = [8, 32], strides = [1, 1]} : vector<8x384xf32> to vector<8x32xf32>
    %cst_61 = arith.constant dense<0.000000e+00> : vector<8x8xf32>
    %177 = tpu.matmul %174, %175, %cst_61 {dimension_numbers = #tpu.dot_dimension_numbers<[1], [1], [0], [0], [0, 0, 1, 0], [], []>} : vector<8x32xf32>, vector<8x32xf32>, vector<8x8xf32> -> vector<8x8xf32>
    %cst_62 = arith.constant 0.176776692 : f32
    %178 = vector.broadcast %cst_62 : f32 to vector<8x8xf32>
    %179 = arith.mulf %177, %178 : vector<8x8xf32>
    %180 = arith.addf %179, %64 : vector<8x8xf32>
    %cst_63 = arith.constant dense<0xFF800000> : vector<8xf32>
    %181 = vector.multi_reduction <maximumf>, %180, %cst_63 [1] : vector<8x8xf32> to vector<8xf32>
    %182 = vector.shape_cast %181 : vector<8xf32> to vector<8x1xf32>
    %183 = vector.broadcast %182 : vector<8x1xf32> to vector<8x8xf32>
    %184 = arith.subf %180, %183 : vector<8x8xf32>
    %185 = math.exp %184 : vector<8x8xf32>
    %cst_64 = arith.constant dense<0.000000e+00> : vector<8xf32>
    %186 = vector.multi_reduction <add>, %185, %cst_64 [1] : vector<8x8xf32> to vector<8xf32>
    %187 = vector.shape_cast %186 : vector<8xf32> to vector<8x1xf32>
    %188 = tpu.reciprocal %187 {approx = true} : vector<8x1xf32> -> vector<8x1xf32>
    %189 = vector.broadcast %188 : vector<8x1xf32> to vector<8x8xf32>
    %190 = arith.mulf %185, %189 : vector<8x8xf32>
    %cst_65 = arith.constant dense<0.000000e+00> : vector<8x32xf32>
    %191 = tpu.matmul %190, %176, %cst_65 {dimension_numbers = #tpu.dot_dimension_numbers<[1], [0], [0], [1], [0, 0, 1, 1], [], []>} : vector<8x8xf32>, vector<8x32xf32>, vector<8x32xf32> -> vector<8x32xf32>
    %c0_66 = arith.constant 0 : index
    %c0_67 = arith.constant 0 : index
    %192 = vector.load %arg12[%c0_66, %c0_67] : memref<8x128xf32, #tpu.memory_space<vmem>>, vector<8x32xf32>
    tpu.vector_store %arg12[%c0_66, %c0_67], %191 {strides = array<i32>} : memref<8x128xf32, #tpu.memory_space<vmem>>, vector<8x32xf32>,
    %193 = vector.extract_strided_slice %173 {offsets = [0, 32], sizes = [8, 32], strides = [1, 1]} : vector<8x384xf32> to vector<8x32xf32>
    %194 = vector.extract_strided_slice %173 {offsets = [0, 160], sizes = [8, 32], strides = [1, 1]} : vector<8x384xf32> to vector<8x32xf32>
    %195 = vector.extract_strided_slice %173 {offsets = [0, 288], sizes = [8, 32], strides = [1, 1]} : vector<8x384xf32> to vector<8x32xf32>
    %cst_68 = arith.constant dense<0.000000e+00> : vector<8x8xf32>
    %196 = tpu.matmul %193, %194, %cst_68 {dimension_numbers = #tpu.dot_dimension_numbers<[1], [1], [0], [0], [0, 0, 1, 0], [], []>} : vector<8x32xf32>, vector<8x32xf32>, vector<8x8xf32> -> vector<8x8xf32>
    %cst_69 = arith.constant 0.176776692 : f32
    %197 = vector.broadcast %cst_69 : f32 to vector<8x8xf32>
    %198 = arith.mulf %196, %197 : vector<8x8xf32>
    %199 = arith.addf %198, %64 : vector<8x8xf32>
    %cst_70 = arith.constant dense<0xFF800000> : vector<8xf32>
    %200 = vector.multi_reduction <maximumf>, %199, %cst_70 [1] : vector<8x8xf32> to vector<8xf32>
    %201 = vector.shape_cast %200 : vector<8xf32> to vector<8x1xf32>
    %202 = vector.broadcast %201 : vector<8x1xf32> to vector<8x8xf32>
    %203 = arith.subf %199, %202 : vector<8x8xf32>
    %204 = math.exp %203 : vector<8x8xf32>
    %cst_71 = arith.constant dense<0.000000e+00> : vector<8xf32>
    %205 = vector.multi_reduction <add>, %204, %cst_71 [1] : vector<8x8xf32> to vector<8xf32>
    %206 = vector.shape_cast %205 : vector<8xf32> to vector<8x1xf32>
    %207 = tpu.reciprocal %206 {approx = true} : vector<8x1xf32> -> vector<8x1xf32>
    %208 = vector.broadcast %207 : vector<8x1xf32> to vector<8x8xf32>
    %209 = arith.mulf %204, %208 : vector<8x8xf32>
    %cst_72 = arith.constant dense<0.000000e+00> : vector<8x32xf32>
    %210 = tpu.matmul %209, %195, %cst_72 {dimension_numbers = #tpu.dot_dimension_numbers<[1], [0], [0], [1], [0, 0, 1, 1], [], []>} : vector<8x8xf32>, vector<8x32xf32>, vector<8x32xf32> -> vector<8x32xf32>
    %c0_73 = arith.constant 0 : index
    %c32_74 = arith.constant 32 : index
    %211 = vector.load %arg12[%c0_73, %c32_74] : memref<8x128xf32, #tpu.memory_space<vmem>>, vector<8x32xf32>
    tpu.vector_store %arg12[%c0_73, %c32_74], %210 {strides = array<i32>} : memref<8x128xf32, #tpu.memory_space<vmem>>, vector<8x32xf32>,
    %212 = vector.extract_strided_slice %173 {offsets = [0, 64], sizes = [8, 32], strides = [1, 1]} : vector<8x384xf32> to vector<8x32xf32>
    %213 = vector.extract_strided_slice %173 {offsets = [0, 192], sizes = [8, 32], strides = [1, 1]} : vector<8x384xf32> to vector<8x32xf32>
    %214 = vector.extract_strided_slice %173 {offsets = [0, 320], sizes = [8, 32], strides = [1, 1]} : vector<8x384xf32> to vector<8x32xf32>
    %cst_75 = arith.constant dense<0.000000e+00> : vector<8x8xf32>
    %215 = tpu.matmul %212, %213, %cst_75 {dimension_numbers = #tpu.dot_dimension_numbers<[1], [1], [0], [0], [0, 0, 1, 0], [], []>} : vector<8x32xf32>, vector<8x32xf32>, vector<8x8xf32> -> vector<8x8xf32>
    %cst_76 = arith.constant 0.176776692 : f32
    %216 = vector.broadcast %cst_76 : f32 to vector<8x8xf32>
    %217 = arith.mulf %215, %216 : vector<8x8xf32>
    %218 = arith.addf %217, %64 : vector<8x8xf32>
    %cst_77 = arith.constant dense<0xFF800000> : vector<8xf32>
    %219 = vector.multi_reduction <maximumf>, %218, %cst_77 [1] : vector<8x8xf32> to vector<8xf32>
    %220 = vector.shape_cast %219 : vector<8xf32> to vector<8x1xf32>
    %221 = vector.broadcast %220 : vector<8x1xf32> to vector<8x8xf32>
    %222 = arith.subf %218, %221 : vector<8x8xf32>
    %223 = math.exp %222 : vector<8x8xf32>
    %cst_78 = arith.constant dense<0.000000e+00> : vector<8xf32>
    %224 = vector.multi_reduction <add>, %223, %cst_78 [1] : vector<8x8xf32> to vector<8xf32>
    %225 = vector.shape_cast %224 : vector<8xf32> to vector<8x1xf32>
    %226 = tpu.reciprocal %225 {approx = true} : vector<8x1xf32> -> vector<8x1xf32>
    %227 = vector.broadcast %226 : vector<8x1xf32> to vector<8x8xf32>
    %228 = arith.mulf %223, %227 : vector<8x8xf32>
    %cst_79 = arith.constant dense<0.000000e+00> : vector<8x32xf32>
    %229 = tpu.matmul %228, %214, %cst_79 {dimension_numbers = #tpu.dot_dimension_numbers<[1], [0], [0], [1], [0, 0, 1, 1], [], []>} : vector<8x8xf32>, vector<8x32xf32>, vector<8x32xf32> -> vector<8x32xf32>
    %c0_80 = arith.constant 0 : index
    %c64_81 = arith.constant 64 : index
    %230 = vector.load %arg12[%c0_80, %c64_81] : memref<8x128xf32, #tpu.memory_space<vmem>>, vector<8x32xf32>
    tpu.vector_store %arg12[%c0_80, %c64_81], %229 {strides = array<i32>} : memref<8x128xf32, #tpu.memory_space<vmem>>, vector<8x32xf32>,
    %231 = vector.extract_strided_slice %173 {offsets = [0, 96], sizes = [8, 32], strides = [1, 1]} : vector<8x384xf32> to vector<8x32xf32>
    %232 = vector.extract_strided_slice %173 {offsets = [0, 224], sizes = [8, 32], strides = [1, 1]} : vector<8x384xf32> to vector<8x32xf32>
    %233 = vector.extract_strided_slice %173 {offsets = [0, 352], sizes = [8, 32], strides = [1, 1]} : vector<8x384xf32> to vector<8x32xf32>
    %cst_82 = arith.constant dense<0.000000e+00> : vector<8x8xf32>
    %234 = tpu.matmul %231, %232, %cst_82 {dimension_numbers = #tpu.dot_dimension_numbers<[1], [1], [0], [0], [0, 0, 1, 0], [], []>} : vector<8x32xf32>, vector<8x32xf32>, vector<8x8xf32> -> vector<8x8xf32>
    %cst_83 = arith.constant 0.176776692 : f32
    %235 = vector.broadcast %cst_83 : f32 to vector<8x8xf32>
    %236 = arith.mulf %234, %235 : vector<8x8xf32>
    %237 = arith.addf %236, %64 : vector<8x8xf32>
    %cst_84 = arith.constant dense<0xFF800000> : vector<8xf32>
    %238 = vector.multi_reduction <maximumf>, %237, %cst_84 [1] : vector<8x8xf32> to vector<8xf32>
    %239 = vector.shape_cast %238 : vector<8xf32> to vector<8x1xf32>
    %240 = vector.broadcast %239 : vector<8x1xf32> to vector<8x8xf32>
    %241 = arith.subf %237, %240 : vector<8x8xf32>
    %242 = math.exp %241 : vector<8x8xf32>
    %cst_85 = arith.constant dense<0.000000e+00> : vector<8xf32>
    %243 = vector.multi_reduction <add>, %242, %cst_85 [1] : vector<8x8xf32> to vector<8xf32>
    %244 = vector.shape_cast %243 : vector<8xf32> to vector<8x1xf32>
    %245 = tpu.reciprocal %244 {approx = true} : vector<8x1xf32> -> vector<8x1xf32>
    %246 = vector.broadcast %245 : vector<8x1xf32> to vector<8x8xf32>
    %247 = arith.mulf %242, %246 : vector<8x8xf32>
    %cst_86 = arith.constant dense<0.000000e+00> : vector<8x32xf32>
    %248 = tpu.matmul %247, %233, %cst_86 {dimension_numbers = #tpu.dot_dimension_numbers<[1], [0], [0], [1], [0, 0, 1, 1], [], []>} : vector<8x8xf32>, vector<8x32xf32>, vector<8x32xf32> -> vector<8x32xf32>
    %c0_87 = arith.constant 0 : index
    %c96_88 = arith.constant 96 : index
    %249 = vector.load %arg12[%c0_87, %c96_88] : memref<8x128xf32, #tpu.memory_space<vmem>>, vector<8x32xf32>
    tpu.vector_store %arg12[%c0_87, %c96_88], %248 {strides = array<i32>} : memref<8x128xf32, #tpu.memory_space<vmem>>, vector<8x32xf32>,
    %c0_89 = arith.constant 0 : index
    %c0_90 = arith.constant 0 : index
    %250 = vector.load %arg12[%c0_89, %c0_90] : memref<8x128xf32, #tpu.memory_space<vmem>>, vector<8x128xf32>
    %251 = arith.truncf %250 : vector<8x128xf32> to vector<8x128xbf16>
    %c1_91 = arith.constant 1 : index
    %c0_92 = arith.constant 0 : index
    %c0_93 = arith.constant 0 : index
    %252 = vector.load %arg5[%c1_91, %c0_92, %c0_93] : memref<2x128x128xbf16, #tpu.memory_space<vmem>>, vector<1x128x128xbf16>
    %253 = vector.shape_cast %252 : vector<1x128x128xbf16> to vector<128x128xbf16>
    %cst_94 = arith.constant dense<0.000000e+00> : vector<8x128xf32>
    %254 = tpu.matmul %251, %253, %cst_94 {dimension_numbers = #tpu.dot_dimension_numbers<[1], [0], [0], [1], [0, 0, 1, 1], [], []>} : vector<8x128xbf16>, vector<128x128xbf16>, vector<8x128xf32> -> vector<8x128xf32>
    %255 = arith.addf %169, %254 : vector<8x128xf32>
    %256 = arith.truncf %255 : vector<8x128xf32> to vector<8x128xbf16>
    %c1_95 = arith.constant 1 : index
    %c0_96 = arith.constant 0 : index
    %c0_97 = arith.constant 0 : index
    %257 = vector.load %arg6[%c1_95, %c0_96, %c0_97] : memref<2x128x512xbf16, #tpu.memory_space<vmem>>, vector<1x128x512xbf16>
    %258 = vector.shape_cast %257 : vector<1x128x512xbf16> to vector<128x512xbf16>
    %cst_98 = arith.constant dense<0.000000e+00> : vector<8x512xf32>
    %259 = tpu.matmul %256, %258, %cst_98 {dimension_numbers = #tpu.dot_dimension_numbers<[1], [0], [0], [1], [0, 0, 1, 1], [], []>} : vector<8x128xbf16>, vector<128x512xbf16>, vector<8x512xf32> -> vector<8x512xf32>
    %c1_99 = arith.constant 1 : index
    %c0_100 = arith.constant 0 : index
    %c0_101 = arith.constant 0 : index
    %260 = vector.load %arg7[%c1_99, %c0_100, %c0_101] : memref<2x1x512xf32, #tpu.memory_space<vmem>>, vector<1x1x512xf32>
    %261 = vector.shape_cast %260 : vector<1x1x512xf32> to vector<1x512xf32>
    %262 = vector.broadcast %261 : vector<1x512xf32> to vector<8x512xf32>
    %263 = arith.addf %259, %262 : vector<8x512xf32>
    %cst_102 = arith.constant 0.000000e+00 : f32
    %264 = vector.broadcast %cst_102 : f32 to vector<8x512xf32>
    %265 = arith.maximumf %263, %264 : vector<8x512xf32>
    %266 = arith.truncf %265 : vector<8x512xf32> to vector<8x512xbf16>
    %c1_103 = arith.constant 1 : index
    %c0_104 = arith.constant 0 : index
    %c0_105 = arith.constant 0 : index
    %267 = vector.load %arg8[%c1_103, %c0_104, %c0_105] : memref<2x512x128xbf16, #tpu.memory_space<vmem>>, vector<1x512x128xbf16>
    %268 = vector.shape_cast %267 : vector<1x512x128xbf16> to vector<512x128xbf16>
    %cst_106 = arith.constant dense<0.000000e+00> : vector<8x128xf32>
    %269 = tpu.matmul %266, %268, %cst_106 {dimension_numbers = #tpu.dot_dimension_numbers<[1], [0], [0], [1], [0, 0, 1, 1], [], []>} : vector<8x512xbf16>, vector<512x128xbf16>, vector<8x128xf32> -> vector<8x128xf32>
    %c1_107 = arith.constant 1 : index
    %c0_108 = arith.constant 0 : index
    %c0_109 = arith.constant 0 : index
    %270 = vector.load %arg9[%c1_107, %c0_108, %c0_109] : memref<2x1x128xf32, #tpu.memory_space<vmem>>, vector<1x1x128xf32>
    %271 = vector.shape_cast %270 : vector<1x1x128xf32> to vector<1x128xf32>
    %272 = vector.broadcast %271 : vector<1x128xf32> to vector<8x128xf32>
    %273 = arith.addf %269, %272 : vector<8x128xf32>
    %274 = arith.addf %255, %273 : vector<8x128xf32>
    %275 = arith.truncf %274 : vector<8x128xf32> to vector<8x128xbf16>
    %c0_110 = arith.constant 0 : index
    %c0_111 = arith.constant 0 : index
    %276 = vector.load %arg10[%c0_110, %c0_111] : memref<128x128xbf16, #tpu.memory_space<vmem>>, vector<128x128xbf16>
    %cst_112 = arith.constant dense<0.000000e+00> : vector<8x128xf32>
    %277 = tpu.matmul %275, %276, %cst_112 {dimension_numbers = #tpu.dot_dimension_numbers<[1], [0], [0], [1], [0, 0, 1, 1], [], []>} : vector<8x128xbf16>, vector<128x128xbf16>, vector<8x128xf32> -> vector<8x128xf32>
    %c0_113 = arith.constant 0 : index
    %c0_114 = arith.constant 0 : index
    %c0_115 = arith.constant 0 : index
    %278 = vector.load %arg11[%c0_113, %c0_114, %c0_115] : memref<1x8x128xf32, #tpu.memory_space<vmem>>, vector<1x8x128xf32>
    %279 = vector.shape_cast %278 : vector<1x8x128xf32> to vector<8x128xf32>
    %280 = vector.shape_cast %277 : vector<8x128xf32> to vector<1x8x128xf32>
    tpu.vector_store %arg11[%c0_113, %c0_114, %c0_115], %280 {strides = array<i32>} : memref<1x8x128xf32, #tpu.memory_space<vmem>>, vector<1x8x128xf32>,
    return
  }
  func.func @transform_0(%arg0: i32, %arg1: memref<4x8xi32, #tpu.memory_space<smem>>) -> (i32, i32) {
    %c0_i32 = arith.constant 0 : i32
    %c0_i32_0 = arith.constant 0 : i32
    %c0_i32_1 = arith.constant 0 : i32
    return %c0_i32, %c0_i32_0 : i32, i32
  }
  func.func @transform_1(%arg0: i32, %arg1: memref<4x8xi32, #tpu.memory_space<smem>>) -> (i32, i32) {
    %c0_i32 = arith.constant 0 : i32
    %c0_i32_0 = arith.constant 0 : i32
    %c0_i32_1 = arith.constant 0 : i32
    return %c0_i32, %c0_i32_0 : i32, i32
  }
  func.func @transform_2(%arg0: i32, %arg1: memref<4x8xi32, #tpu.memory_space<smem>>) -> (i32, i32, i32) {
    %c0_i32 = arith.constant 0 : i32
    %c0_i32_0 = arith.constant 0 : i32
    %c0_i32_1 = arith.constant 0 : i32
    %c0_i32_2 = arith.constant 0 : i32
    return %c0_i32, %c0_i32_0, %c0_i32_1 : i32, i32, i32
  }
  func.func @transform_3(%arg0: i32, %arg1: memref<4x8xi32, #tpu.memory_space<smem>>) -> (i32, i32, i32) {
    %c0_i32 = arith.constant 0 : i32
    %c0_i32_0 = arith.constant 0 : i32
    %c0_i32_1 = arith.constant 0 : i32
    %c0_i32_2 = arith.constant 0 : i32
    return %c0_i32, %c0_i32_0, %c0_i32_1 : i32, i32, i32
  }
  func.func @transform_4(%arg0: i32, %arg1: memref<4x8xi32, #tpu.memory_space<smem>>) -> (i32, i32, i32) {
    %c0_i32 = arith.constant 0 : i32
    %c0_i32_0 = arith.constant 0 : i32
    %c0_i32_1 = arith.constant 0 : i32
    %c0_i32_2 = arith.constant 0 : i32
    return %c0_i32, %c0_i32_0, %c0_i32_1 : i32, i32, i32
  }
  func.func @transform_5(%arg0: i32, %arg1: memref<4x8xi32, #tpu.memory_space<smem>>) -> (i32, i32, i32) {
    %c0_i32 = arith.constant 0 : i32
    %c0_i32_0 = arith.constant 0 : i32
    %c0_i32_1 = arith.constant 0 : i32
    %c0_i32_2 = arith.constant 0 : i32
    return %c0_i32, %c0_i32_0, %c0_i32_1 : i32, i32, i32
  }
  func.func @transform_6(%arg0: i32, %arg1: memref<4x8xi32, #tpu.memory_space<smem>>) -> (i32, i32, i32) {
    %c0_i32 = arith.constant 0 : i32
    %c0_i32_0 = arith.constant 0 : i32
    %c0_i32_1 = arith.constant 0 : i32
    %c0_i32_2 = arith.constant 0 : i32
    return %c0_i32, %c0_i32_0, %c0_i32_1 : i32, i32, i32
  }
  func.func @transform_7(%arg0: i32, %arg1: memref<4x8xi32, #tpu.memory_space<smem>>) -> (i32, i32, i32) {
    %c0_i32 = arith.constant 0 : i32
    %c0_i32_0 = arith.constant 0 : i32
    %c0_i32_1 = arith.constant 0 : i32
    %c0_i32_2 = arith.constant 0 : i32
    return %c0_i32, %c0_i32_0, %c0_i32_1 : i32, i32, i32
  }
  func.func @transform_8(%arg0: i32, %arg1: memref<4x8xi32, #tpu.memory_space<smem>>) -> (i32, i32) {
    %c0_i32 = arith.constant 0 : i32
    %c0_i32_0 = arith.constant 0 : i32
    %c0_i32_1 = arith.constant 0 : i32
    return %c0_i32, %c0_i32_0 : i32, i32
  }
  func.func @transform_9(%arg0: i32, %arg1: memref<4x8xi32, #tpu.memory_space<smem>>) -> (i32, i32, i32) {
    %c0_i32 = arith.constant 0 : i32
    %c0_i32_0 = arith.constant 0 : i32
    %c0_i32_1 = arith.constant 0 : i32
    return %arg0, %c0_i32, %c0_i32_0 : i32, i32, i32
  }
}

</mosaic_0001>

<llo_original>
// kernel: transformer_forward.1
$region0: #{transformer_forward.1}
  #allocation0 [shape = 'u32[]', space=smem, size = 0x4, offset = 0x4, fixed_abs, tag = 'smem constant byte address 0x4 - core index']
  #allocation1 [shape = 'u32[144,128]{1,0:T(1,128)}', space=vmem, size = 0x12000, scoped, tag = 'internal scratch']
  #allocation2 [shape = 'f32[8,128]{1,0:T(8,128)}', space=vmem, size = 0x1000, scoped, tag = 'scratch operand']
  #allocation3 [shape = 's32[1]{0}', space=sflag, size = 0x4, scoped, tag = 'scoped memory for transformer_forward.1']
  #allocation4 [shape = 'u8[2048]{0}', space=smem, size = 0x800, scoped, tag = 'prefetched SMEM operand 0']
  %s0 = inlined_call_operand.vmem [shape: s32[4,8], index: 0, kind: input, shape index: {}]
  %s1 = inlined_call_operand.vmem [shape: f32[64,128], index: 1, kind: input, shape index: {}]
  %s2 = inlined_call_operand.vmem [shape: f32[8,128], index: 2, kind: input, shape index: {}]
  %s3 = inlined_call_operand.vmem [shape: bf16[2,128,384], index: 3, kind: input, shape index: {}]
  %s4 = inlined_call_operand.vmem [shape: bf16[2,128,128], index: 4, kind: input, shape index: {}]
  %s5 = inlined_call_operand.vmem [shape: bf16[2,128,512], index: 5, kind: input, shape index: {}]
  %s6 = inlined_call_operand.vmem [shape: f32[2,1,512], index: 6, kind: input, shape index: {}]
  %s7 = inlined_call_operand.vmem [shape: bf16[2,512,128], index: 7, kind: input, shape index: {}]
  %s8 = inlined_call_operand.vmem [shape: f32[2,1,128], index: 8, kind: input, shape index: {}]
  %s9 = inlined_call_operand.vmem [shape: bf16[128,128], index: 9, kind: input, shape index: {}]
  %s10 = inlined_call_operand.hbm [shape: f32[4,8,128], index: 10, kind: output, shape index: {}]
  %s11 = sld [smem:[#allocation0]]
  $region69: #{transformer_forward.1} parent=0
    _
  %s13 = ssub.s32 1, %s11
  %s14 = scalar_select 0, %s13, %s11
  %s15 = sshll.u32 %s0, 4
  %s16 = int_to_ptr.vmem [resolvable:$true] %s15
  %18 = dma.vmem_to_smem %s16, 64, [#allocation4], [#allocation3]
  %19 = dma.done [#allocation3], 64
  %20 = sfence
  $region1: #{transformer_forward.1} parent=0
    #allocation5 [shape = 'u8[8192]{0}', space=vmem, size = 0x2000, scoped, tag = 'output window, operand 0']
    #allocation6 [shape = 's32[2]{0}', space=sflag, size = 0x8, scoped, tag = 'scoped memory for transformer_forward.1']
    %21 = vsyncpa [#allocation6], 0
    %s22 = scalar_lea.sflag [#allocation6], 1
    %23 = vsyncpa %s22, 0
    loop: start=0, step=1, limit=6
    $region2: #{transformer_forward.1} parent=1 // loop_pre_header
      _
    $region3: #{transformer_forward.1} parent=1 // loop_header
      %s25 = sphi 0, %s29
      %p26 = scmp.ge.s32.totalorder %s25, 6
      %s33 = sphi 0, %s33
      %s35 = sphi 0, %s33
      %s36 = sphi 0, %s35
      %s50 = sphi 0, %s36
      %s54 = sphi 0, %s54
      %s56 = sphi 0, %s54
      %s57 = sphi 0, %s56
      %s71 = sphi 0, %s57
      %s75 = sphi 0, %s75
      %s77 = sphi 0, %s75
      %s78 = sphi 0, %s77
      %s92 = sphi 0, %s78
      %s96 = sphi 0, %s96
      %s98 = sphi 0, %s96
      %s99 = sphi 0, %s98
      %s113 = sphi 0, %s99
      %s117 = sphi 0, %s117
      %s119 = sphi 0, %s117
      %s120 = sphi 0, %s119
      %s134 = sphi 0, %s120
      %s138 = sphi 0, %s138
      %s140 = sphi 0, %s138
      %s141 = sphi 0, %s140
      %s155 = sphi 0, %s141
      %s159 = sphi 0, %s159
      %s161 = sphi 0, %s159
      %s162 = sphi 0, %s161
      %s176 = sphi 0, %s162
      %s180 = sphi 0, %s180
      %s182 = sphi 0, %s180
      %s183 = sphi 0, %s182
      %s197 = sphi 0, %s183
      %s201 = sphi 0, %s201
      %s203 = sphi 0, %s201
      %s204 = sphi 0, %s203
      %s218 = sphi 0, %s204
      %s224 = sphi 0, %s226
      %s227 = sphi 0, %s224
      %s228 = sphi 0, %s227
      %s244 = sphi 0, %s228
    $region4: #{transformer_forward.1} parent=1 // loop_header_branch
      %28 = sbr.rel (%p26) target = $region8
    $region5: #{transformer_forward.1} parent=1 // loop_body
      %s30 = ssub.s32 %s25, 1
      %s31 = ssub.s32 %s25, 2
      %s32 = sadd.s32 %s25, 1
      %s34 = sadd.s32 %s33, 1
      %p37 = scmp.eq.s32.totalorder %s25, 3
      %p38 = scmp.ne.s32.totalorder %s33, %s35
      %p39 = scmp.eq.s32.totalorder %s25, 0
      %p40 = por %p38, %p39
      %p41 = scmp.ne.s32.totalorder %s33, %s35
      %p42 = scmp.eq.s32.totalorder %s30, 3
      %p43 = por %p41, %p42
      %p44 = scmp.ne.s32.totalorder %s35, %s36
      %p45 = scmp.eq.s32.totalorder %s30, 0
      %p46 = por %p44, %p45
      %p47 = scmp.ne.s32.totalorder %s35, %s36
      %p48 = scmp.eq.s32.totalorder %s31, 3
      %p49 = por %p47, %p48
      %p51 = scmp.ne.s32.totalorder %s36, %s50
      %p52 = scmp.eq.s32.totalorder %s31, 0
      %p53 = por %p51, %p52
      %s55 = sadd.s32 %s54, 1
      %p58 = scmp.eq.s32.totalorder %s25, 3
      %p59 = scmp.ne.s32.totalorder %s54, %s56
      %p60 = scmp.eq.s32.totalorder %s25, 0
      %p61 = por %p59, %p60
      %p62 = scmp.ne.s32.totalorder %s54, %s56
      %p63 = scmp.eq.s32.totalorder %s30, 3
      %p64 = por %p62, %p63
      %p65 = scmp.ne.s32.totalorder %s56, %s57
      %p66 = scmp.eq.s32.totalorder %s30, 0
      %p67 = por %p65, %p66
      %p68 = scmp.ne.s32.totalorder %s56, %s57
      %p69 = scmp.eq.s32.totalorder %s31, 3
      %p70 = por %p68, %p69
      %p72 = scmp.ne.s32.totalorder %s57, %s71
      %p73 = scmp.eq.s32.totalorder %s31, 0
      %p74 = por %p72, %p73
      %s76 = sadd.s32 %s75, 1
      %p79 = scmp.eq.s32.totalorder %s25, 3
      %p80 = scmp.ne.s32.totalorder %s75, %s77
      %p81 = scmp.eq.s32.totalorder %s25, 0
      %p82 = por %p80, %p81
      %p83 = scmp.ne.s32.totalorder %s75, %s77
      %p84 = scmp.eq.s32.totalorder %s30, 3
      %p85 = por %p83, %p84
      %p86 = scmp.ne.s32.totalorder %s77, %s78
      %p87 = scmp.eq.s32.totalorder %s30, 0
      %p88 = por %p86, %p87
      %p89 = scmp.ne.s32.totalorder %s77, %s78
      %p90 = scmp.eq.s32.totalorder %s31, 3
      %p91 = por %p89, %p90
      %p93 = scmp.ne.s32.totalorder %s78, %s92
      %p94 = scmp.eq.s32.totalorder %s31, 0
      %p95 = por %p93, %p94
      %s97 = sadd.s32 %s96, 1
      %p100 = scmp.eq.s32.totalorder %s25, 3
      %p101 = scmp.ne.s32.totalorder %s96, %s98
      %p102 = scmp.eq.s32.totalorder %s25, 0
      %p103 = por %p101, %p102
      %p104 = scmp.ne.s32.totalorder %s96, %s98
      %p105 = scmp.eq.s32.totalorder %s30, 3
      %p106 = por %p104, %p105
      %p107 = scmp.ne.s32.totalorder %s98, %s99
      %p108 = scmp.eq.s32.totalorder %s30, 0
      %p109 = por %p107, %p108
      %p110 = scmp.ne.s32.totalorder %s98, %s99
      %p111 = scmp.eq.s32.totalorder %s31, 3
      %p112 = por %p110, %p111
      %p114 = scmp.ne.s32.totalorder %s99, %s113
      %p115 = scmp.eq.s32.totalorder %s31, 0
      %p116 = por %p114, %p115
      %s118 = sadd.s32 %s117, 1
      %p121 = scmp.eq.s32.totalorder %s25, 3
      %p122 = scmp.ne.s32.totalorder %s117, %s119
      %p123 = scmp.eq.s32.totalorder %s25, 0
      %p124 = por %p122, %p123
      %p125 = scmp.ne.s32.totalorder %s117, %s119
      %p126 = scmp.eq.s32.totalorder %s30, 3
      %p127 = por %p125, %p126
      %p128 = scmp.ne.s32.totalorder %s119, %s120
      %p129 = scmp.eq.s32.totalorder %s30, 0
      %p130 = por %p128, %p129
      %p131 = scmp.ne.s32.totalorder %s119, %s120
      %p132 = scmp.eq.s32.totalorder %s31, 3
      %p133 = por %p131, %p132
      %p135 = scmp.ne.s32.totalorder %s120, %s134
      %p136 = scmp.eq.s32.totalorder %s31, 0
      %p137 = por %p135, %p136
      %s139 = sadd.s32 %s138, 1
      %p142 = scmp.eq.s32.totalorder %s25, 3
      %p143 = scmp.ne.s32.totalorder %s138, %s140
      %p144 = scmp.eq.s32.totalorder %s25, 0
      %p145 = por %p143, %p144
      %p146 = scmp.ne.s32.totalorder %s138, %s140
      %p147 = scmp.eq.s32.totalorder %s30, 3
      %p148 = por %p146, %p147
      %p149 = scmp.ne.s32.totalorder %s140, %s141
      %p150 = scmp.eq.s32.totalorder %s30, 0
      %p151 = por %p149, %p150
      %p152 = scmp.ne.s32.totalorder %s140, %s141
      %p153 = scmp.eq.s32.totalorder %s31, 3
      %p154 = por %p152, %p153
      %p156 = scmp.ne.s32.totalorder %s141, %s155
      %p157 = scmp.eq.s32.totalorder %s31, 0
      %p158 = por %p156, %p157
      %s160 = sadd.s32 %s159, 1
      %p163 = scmp.eq.s32.totalorder %s25, 3
      %p164 = scmp.ne.s32.totalorder %s159, %s161
      %p165 = scmp.eq.s32.totalorder %s25, 0
      %p166 = por %p164, %p165
      %p167 = scmp.ne.s32.totalorder %s159, %s161
      %p168 = scmp.eq.s32.totalorder %s30, 3
      %p169 = por %p167, %p168
      %p170 = scmp.ne.s32.totalorder %s161, %s162
      %p171 = scmp.eq.s32.totalorder %s30, 0
      %p172 = por %p170, %p171
      %p173 = scmp.ne.s32.totalorder %s161, %s162
      %p174 = scmp.eq.s32.totalorder %s31, 3
      %p175 = por %p173, %p174
      %p177 = scmp.ne.s32.totalorder %s162, %s176
      %p178 = scmp.eq.s32.totalorder %s31, 0
      %p179 = por %p177, %p178
      %s181 = sadd.s32 %s180, 1
      %p184 = scmp.eq.s32.totalorder %s25, 3
      %p185 = scmp.ne.s32.totalorder %s180, %s182
      %p186 = scmp.eq.s32.totalorder %s25, 0
      %p187 = por %p185, %p186
      %p188 = scmp.ne.s32.totalorder %s180, %s182
      %p189 = scmp.eq.s32.totalorder %s30, 3
      %p190 = por %p188, %p189
      %p191 = scmp.ne.s32.totalorder %s182, %s183
      %p192 = scmp.eq.s32.totalorder %s30, 0
      %p193 = por %p191, %p192
      %p194 = scmp.ne.s32.totalorder %s182, %s183
      %p195 = scmp.eq.s32.totalorder %s31, 3
      %p196 = por %p194, %p195
      %p198 = scmp.ne.s32.totalorder %s183, %s197
      %p199 = scmp.eq.s32.totalorder %s31, 0
      %p200 = por %p198, %p199
      %s202 = sadd.s32 %s201, 1
      %p205 = scmp.eq.s32.totalorder %s25, 3
      %p206 = scmp.ne.s32.totalorder %s201, %s203
      %p207 = scmp.eq.s32.totalorder %s25, 0
      %p208 = por %p206, %p207
      %p209 = scmp.ne.s32.totalorder %s201, %s203
      %p210 = scmp.eq.s32.totalorder %s30, 3
      %p211 = por %p209, %p210
      %p212 = scmp.ne.s32.totalorder %s203, %s204
      %p213 = scmp.eq.s32.totalorder %s30, 0
      %p214 = por %p212, %p213
      %p215 = scmp.ne.s32.totalorder %s203, %s204
      %p216 = scmp.eq.s32.totalorder %s31, 3
      %p217 = por %p215, %p216
      %p219 = scmp.ne.s32.totalorder %s204, %s218
      %p220 = scmp.eq.s32.totalorder %s31, 0
      %p221 = por %p219, %p220
      %s222 = ssub.s32 %s25, %s32
      %p223 = scmp.eq.s32.totalorder %s222, 0
      %s225 = sadd.s32 %s224, 1
      %s226 = scalar_select %p223, %s224, %s225
      %p229 = pneg %p223
      %p230 = scmp.eq.s32.totalorder %s25, 3
      %p231 = por %p229, %p230
      %p232 = scmp.ne.s32.totalorder %s224, %s227
      %p233 = scmp.eq.s32.totalorder %s25, 0
      %p234 = por %p232, %p233
      %p235 = scmp.ne.s32.totalorder %s224, %s227
      %p236 = scmp.eq.s32.totalorder %s30, 3
      %p237 = por %p235, %p236
      %p238 = scmp.ne.s32.totalorder %s227, %s228
      %p239 = scmp.eq.s32.totalorder %s30, 0
      %p240 = por %p238, %p239
      %p241 = scmp.ne.s32.totalorder %s227, %s228
      %p242 = scmp.eq.s32.totalorder %s31, 3
      %p243 = por %p241, %p242
      %p245 = scmp.ne.s32.totalorder %s228, %s244
      %p246 = scmp.eq.s32.totalorder %s31, 0
      %p247 = por %p245, %p246
      %p248 = scmp.le.s32.totalorder 1, %s25
      %p249 = scmp.lt.s32.totalorder %s25, 5
      %p250 = pnand %p248, %p249
      %p251 = pneg %p250
      // Predicated region
      $region9: #{transformer_forward.1} parent=5 // pred_check
        _
      $region10: #{transformer_forward.1} parent=5 // pred_check_branch
        %253 = sbr.rel (%p250) target = $region12
      $region11: #{transformer_forward.1} parent=5 // pred_region
        %s254 = ssub.s32 %s25, 1
        // Predicated region
        $region13: #{transformer_forward.1} parent=11 // pred_check
          %p255 = pneg %p46
        $region14: #{transformer_forward.1} parent=11 // pred_check_branch
          %257 = sbr.rel (%p255) target = $region16
        $region15: #{transformer_forward.1} parent=11 // pred_region
          _
        $region16: #{transformer_forward.1} parent=11 // pred_fallthru
          _
        // Predicated region
        $region17: #{transformer_forward.1} parent=11 // pred_check
          %p258 = pneg %p67
        $region18: #{transformer_forward.1} parent=11 // pred_check_branch
          %260 = sbr.rel (%p258) target = $region20
        $region19: #{transformer_forward.1} parent=11 // pred_region
          _
        $region20: #{transformer_forward.1} parent=11 // pred_fallthru
          _
        // Predicated region
        $region21: #{transformer_forward.1} parent=11 // pred_check
          %p261 = pneg %p88
        $region22: #{transformer_forward.1} parent=11 // pred_check_branch
          %263 = sbr.rel (%p261) target = $region24
        $region23: #{transformer_forward.1} parent=11 // pred_region
          _
        $region24: #{transformer_forward.1} parent=11 // pred_fallthru
          _
        // Predicated region
        $region25: #{transformer_forward.1} parent=11 // pred_check
          %p264 = pneg %p109
        $region26: #{transformer_forward.1} parent=11 // pred_check_branch
          %266 = sbr.rel (%p264) target = $region28
        $region27: #{transformer_forward.1} parent=11 // pred_region
          _
        $region28: #{transformer_forward.1} parent=11 // pred_fallthru
          _
        // Predicated region
        $region29: #{transformer_forward.1} parent=11 // pred_check
          %p267 = pneg %p130
        $region30: #{transformer_forward.1} parent=11 // pred_check_branch
          %269 = sbr.rel (%p267) target = $region32
        $region31: #{transformer_forward.1} parent=11 // pred_region
          _
        $region32: #{transformer_forward.1} parent=11 // pred_fallthru
          _
        // Predicated region
        $region33: #{transformer_forward.1} parent=11 // pred_check
          %p270 = pneg %p151
        $region34: #{transformer_forward.1} parent=11 // pred_check_branch
          %272 = sbr.rel (%p270) target = $region36
        $region35: #{transformer_forward.1} parent=11 // pred_region
          _
        $region36: #{transformer_forward.1} parent=11 // pred_fallthru
          _
        // Predicated region
        $region37: #{transformer_forward.1} parent=11 // pred_check
          %p273 = pneg %p172
        $region38: #{transformer_forward.1} parent=11 // pred_check_branch
          %275 = sbr.rel (%p273) target = $region40
        $region39: #{transformer_forward.1} parent=11 // pred_region
          _
        $region40: #{transformer_forward.1} parent=11 // pred_fallthru
          _
        // Predicated region
        $region41: #{transformer_forward.1} parent=11 // pred_check
          %p276 = pneg %p193
        $region42: #{transformer_forward.1} parent=11 // pred_check_branch
          %278 = sbr.rel (%p276) target = $region44
        $region43: #{transformer_forward.1} parent=11 // pred_region
          _
        $region44: #{transformer_forward.1} parent=11 // pred_fallthru
          _
        // Predicated region
        $region45: #{transformer_forward.1} parent=11 // pred_check
          %p279 = pneg %p214
        $region46: #{transformer_forward.1} parent=11 // pred_check_branch
          %281 = sbr.rel (%p279) target = $region48
        $region47: #{transformer_forward.1} parent=11 // pred_region
          _
        $region48: #{transformer_forward.1} parent=11 // pred_fallthru
          _
      $region12: #{transformer_forward.1} parent=5 // pred_fallthru
        _
      %p282 = scmp.lt.s32.totalorder %s25, 4
      // Predicated region
      $region49: #{transformer_forward.1} parent=5 // pred_check
        %p283 = pneg %p282
      $region50: #{transformer_forward.1} parent=5 // pred_check_branch
        %285 = sbr.rel (%p283) target = $region52
      $region51: #{transformer_forward.1} parent=5 // pred_region
        _
      $region52: #{transformer_forward.1} parent=5 // pred_fallthru
        _
      %p286 = scmp.le.s32.totalorder 1, %s25
      %p287 = scmp.lt.s32.totalorder %s25, 5
      %p288 = pnand %p286, %p287
      %p289 = pneg %p288
      // Predicated region
      $region53: #{transformer_forward.1} parent=5 // pred_check
        _
      $region54: #{transformer_forward.1} parent=5 // pred_check_branch
        %291 = sbr.rel (%p288) target = $region56
      $region55: #{transformer_forward.1} parent=5 // pred_region
        %s292 = ssub.s32 %s25, 1
        %p293 = pneg %p46
        %p294 = pneg %p43
        %p295 = pneg %p67
        %p296 = pneg %p64
        %p297 = pneg %p88
        %p298 = pneg %p85
        %p299 = pneg %p109
        %p300 = pneg %p106
        %p301 = pneg %p130
        %p302 = pneg %p127
        %p303 = pneg %p151
        %p304 = pneg %p148
        %p305 = pneg %p172
        %p306 = pneg %p169
        %p307 = pneg %p193
        %p308 = pneg %p190
        %p309 = pneg %p214
        %p310 = pneg %p211
        %p311 = pneg %p240
        %p312 = pneg %p237
        %s313 = sand.u32 %s227, 1
        %s314 = scalar_lea.sflag [#allocation6], %s313
        %s315 = sand.u32 %s227, 1
        %s316 = smul.addr %s315, 8
        %s317 = scalar_lea.vmem [#allocation5], %s316
        %v319 = vlaneseq
        %v320 = vshrl.u32 %v319, 7
        %vm321 = vcmp.eq.s32.totalorder %v320, 0
        %s322 = smul.u32 %s30, 128
        %s323 = sld [smem:[#allocation4 + %s322]]
        %v324 = vstv %s323
        %v325 = vsel %vm321, %v324, 0
        %vm326 = vcmp.eq.s32.totalorder %v320, 1
        %s327 = sadd.s32 %s322, 1
        %s328 = sld [smem:[#allocation4 + %s327]]
        %v329 = vstv %s328
        %v330 = vsel %vm326, %v329, %v325
        %vm331 = vcmp.eq.s32.totalorder %v320, 2
        %s332 = sadd.s32 %s322, 2
        %s333 = sld [smem:[#allocation4 + %s332]]
        %v334 = vstv %s333
        %v335 = vsel %vm331, %v334, %v330
        %vm336 = vcmp.eq.s32.totalorder %v320, 3
        %s337 = sadd.s32 %s322, 3
        %s338 = sld [smem:[#allocation4 + %s337]]
        %v339 = vstv %s338
        %v340 = vsel %vm336, %v339, %v335
        %vm341 = vcmp.eq.s32.totalorder %v320, 4
        %s342 = sadd.s32 %s322, 4
        %s343 = sld [smem:[#allocation4 + %s342]]
        %v344 = vstv %s343
        %v345 = vsel %vm341, %v344, %v340
        %vm346 = vcmp.eq.s32.totalorder %v320, 5
        %s347 = sadd.s32 %s322, 5
        %s348 = sld [smem:[#allocation4 + %s347]]
        %v349 = vstv %s348
        %v350 = vsel %vm346, %v349, %v345
        %vm351 = vcmp.eq.s32.totalorder %v320, 6
        %s352 = sadd.s32 %s322, 6
        %s353 = sld [smem:[#allocation4 + %s352]]
        %v354 = vstv %s353
        %v355 = vsel %vm351, %v354, %v350
        %vm356 = vcmp.eq.s32.totalorder %v320, 7
        %s357 = sadd.s32 %s322, 7
        %s358 = sld [smem:[#allocation4 + %s357]]
        %v359 = vstv %s358
        %v360 = vsel %vm356, %v359, %v355
        %v361 = vlaneseq
        %v362 = vand.u32 %v361, 127
        %vm363 = vcmp.eq.s32.totalorder %v362, %v360
        %v364 = vsel %vm363, 1, 0
        %v365 = vcvt.s32.f32 %v364
        %v366 = vld [vmem:[%s1] sm:$0xff]
        %v367 = vld [vmem:[%s1 + $0x8] sm:$0xff]
        %v368 = vld [vmem:[%s1 + $0x10] sm:$0xff]
        %v369 = vld [vmem:[%s1 + $0x18] sm:$0xff]
        %v370 = vld [vmem:[%s1 + $0x20] sm:$0xff]
        %v371 = vld [vmem:[%s1 + $0x28] sm:$0xff]
        %v372 = vld [vmem:[%s1 + $0x30] sm:$0xff]
        %v373 = vld [vmem:[%s1 + $0x38] sm:$0xff]
        %v374 = vld [vmem:[%s2] sm:$0xff]
        %vm375 = vcmask 523264
        %v377 = vsel %vm375, %v365, 0
        %379 = vmatprep.subr.mxu0 0.0
        %380 = vmatpush1.msra.mxu0 %v366
        %381 = vmatprep.subr.mxu0 0.0
        %382 = vmatpush1.msra.mxu0 %v367
        %383 = vmatprep.subr.mxu0 0.0
        %384 = vmatpush1.msra.mxu0 %v368
        %385 = vmatprep.subr.mxu0 0.0
        %386 = vmatpush1.msra.mxu0 %v369
        %387 = vmatprep.subr.mxu0 0.0
        %388 = vmatpush1.msra.mxu0 %v370
        %389 = vmatprep.subr.mxu0 0.0
        %390 = vmatpush1.msra.mxu0 %v371
        %391 = vmatprep.subr.mxu0 0.0
        %392 = vmatpush1.msra.mxu0 %v372
        %393 = vmatprep.subr.mxu0 0.0
        %394 = vmatpush1.msra.mxu0 %v373
        %395 = vmatprep.subr.mxu0 0.0
        %396 = vmatpush1.msra.mxu0 0.0
        %397 = vmatprep.subr.mxu0 0.0
        %398 = vmatpush1.msra.mxu0 0.0
        %399 = vmatprep.subr.mxu0 0.0
        %400 = vmatpush1.msra.mxu0 0.0
        %401 = vmatprep.subr.mxu0 0.0
        %402 = vmatpush1.msra.mxu0 0.0
        %403 = vmatprep.subr.mxu0 0.0
        %404 = vmatpush1.msra.mxu0 0.0
        %405 = vmatprep.subr.mxu0 0.0
        %406 = vmatpush1.msra.mxu0 0.0
        %407 = vmatprep.subr.mxu0 0.0
        %408 = vmatpush1.msra.mxu0 0.0
        %409 = vmatprep.subr.mxu0 0.0
        %410 = vmatpush1.msra.mxu0 0.0
        %411 = vmatprep.subr.mxu0 0.0
        %412 = vmatpush1.msra.mxu0 0.0
        %413 = vmatprep.subr.mxu0 0.0
        %414 = vmatpush1.msra.mxu0 0.0
        %415 = vmatprep.subr.mxu0 0.0
        %416 = vmatpush1.msra.mxu0 0.0
        %417 = vmatprep.subr.mxu0 0.0
        %418 = vmatpush1.msra.mxu0 0.0
        %419 = vmatprep.subr.mxu0 0.0
        %420 = vmatpush1.msra.mxu0 0.0
        %421 = vmatprep.subr.mxu0 0.0
        %422 = vmatpush1.msra.mxu0 0.0
        %423 = vmatprep.subr.mxu0 0.0
        %424 = vmatpush1.msra.mxu0 0.0
        %425 = vmatprep.subr.mxu0 0.0
        %426 = vmatpush1.msra.mxu0 0.0
        %427 = vmatprep.subr.mxu0 0.0
        %428 = vmatpush1.msra.mxu0 0.0
        %429 = vmatprep.subr.mxu0 0.0
        %430 = vmatpush1.msra.mxu0 0.0
        %431 = vmatprep.subr.mxu0 0.0
        %432 = vmatpush1.msra.mxu0 0.0
        %433 = vmatprep.subr.mxu0 0.0
        %434 = vmatpush1.msra.mxu0 0.0
        %435 = vmatprep.subr.mxu0 0.0
        %436 = vmatpush1.msra.mxu0 0.0
        %437 = vmatprep.subr.mxu0 0.0
        %438 = vmatpush1.msra.mxu0 0.0
        %439 = vmatprep.subr.mxu0 0.0
        %440 = vmatpush1.msra.mxu0 0.0
        %441 = vmatprep.subr.mxu0 0.0
        %442 = vmatpush1.msra.mxu0 0.0
        %443 = vmatprep.mubr.f32.mxu0 0.0
        %444 = vmatmul.mubr.f32.gmra.mrb[0].mxu0 %v377
        %v445 = vpop.f32.mrb[0].mxu0
        %v446 = vadd.f32 %v374, %v445
        %v447 = vpop.f32.mrb[0].mxu0
        %448 = vdwg.mxu0
        %vm449 = vcmp.le.s32.totalorder %v362, %v320
        %v450 = vsel %vm449, 0.0, -1.7677669e+09
        %v451 = vpack.c.bf16 %v446, %v446
        %v452 = vld [vmem:[%s3] sm:$0xff]
        %v453 = vld [vmem:[%s3 + $0x8] sm:$0xf]
        %v454 = vld [vmem:[%s3 + $0xc] sm:$0xff]
        %v455 = vld [vmem:[%s3 + $0x14] sm:$0xf]
        %v456 = vld [vmem:[%s3 + $0x18] sm:$0xff]
        %v457 = vld [vmem:[%s3 + $0x20] sm:$0xf]
        %v458 = vld [vmem:[%s3 + $0x24] sm:$0xff]
        %v459 = vld [vmem:[%s3 + $0x2c] sm:$0xf]
        %v460 = vld [vmem:[%s3 + $0x30] sm:$0xff]
        %v461 = vld [vmem:[%s3 + $0x38] sm:$0xf]
        %v462 = vld [vmem:[%s3 + $0x3c] sm:$0xff]
        %v463 = vld [vmem:[%s3 + $0x44] sm:$0xf]
        %v464 = vld [vmem:[%s3 + $0x48] sm:$0xff]
        %v465 = vld [vmem:[%s3 + $0x50] sm:$0xf]
        %v466 = vld [vmem:[%s3 + $0x54] sm:$0xff]
        %v467 = vld [vmem:[%s3 + $0x5c] sm:$0xf]
        %v468 = vld [vmem:[%s3 + $0x60] sm:$0xff]
        %v469 = vld [vmem:[%s3 + $0x68] sm:$0xf]
        %v470 = vld [vmem:[%s3 + $0x6c] sm:$0xff]
        %v471 = vld [vmem:[%s3 + $0x74] sm:$0xf]
        %v472 = vld [vmem:[%s3 + $0x78] sm:$0xff]
        %v473 = vld [vmem:[%s3 + $0x80] sm:$0xf]
        %v474 = vld [vmem:[%s3 + $0x84] sm:$0xff]
        %v475 = vld [vmem:[%s3 + $0x8c] sm:$0xf]
        %v476 = vld [vmem:[%s3 + $0x90] sm:$0xff]
        %v477 = vld [vmem:[%s3 + $0x98] sm:$0xf]
        %v478 = vld [vmem:[%s3 + $0x9c] sm:$0xff]
        %v479 = vld [vmem:[%s3 + $0xa4] sm:$0xf]
        %v480 = vld [vmem:[%s3 + $0xa8] sm:$0xff]
        %v481 = vld [vmem:[%s3 + $0xb0] sm:$0xf]
        %v482 = vld [vmem:[%s3 + $0xb4] sm:$0xff]
        %v483 = vld [vmem:[%s3 + $0xbc] sm:$0xf]
        %v516 = vunpack.c.l.b16 %v452
        %v517 = vunpack.c.h.b16 %v452
        %v518 = vunpack.c.l.b16 %v453
        %v519 = vunpack.c.l.b16 %v454
        %v520 = vunpack.c.h.b16 %v454
        %v521 = vunpack.c.l.b16 %v455
        %v522 = vunpack.c.l.b16 %v456
        %v523 = vunpack.c.h.b16 %v456
        %v524 = vunpack.c.l.b16 %v457
        %v525 = vunpack.c.l.b16 %v458
        %v526 = vunpack.c.h.b16 %v458
        %v527 = vunpack.c.l.b16 %v459
        %v528 = vunpack.c.l.b16 %v460
        %v529 = vunpack.c.h.b16 %v460
        %v530 = vunpack.c.l.b16 %v461
        %v531 = vunpack.c.l.b16 %v462
        %v532 = vunpack.c.h.b16 %v462
        %v533 = vunpack.c.l.b16 %v463
        %v534 = vunpack.c.l.b16 %v464
        %v535 = vunpack.c.h.b16 %v464
        %v536 = vunpack.c.l.b16 %v465
        %v537 = vunpack.c.l.b16 %v466
        %v538 = vunpack.c.h.b16 %v466
        %v539 = vunpack.c.l.b16 %v467
        %v540 = vunpack.c.l.b16 %v468
        %v541 = vunpack.c.h.b16 %v468
        %v542 = vunpack.c.l.b16 %v469
        %v543 = vunpack.c.l.b16 %v470
        %v544 = vunpack.c.h.b16 %v470
        %v545 = vunpack.c.l.b16 %v471
        %v546 = vunpack.c.l.b16 %v472
        %v547 = vunpack.c.h.b16 %v472
        %v548 = vunpack.c.l.b16 %v473
        %v549 = vunpack.c.l.b16 %v474
        %v550 = vunpack.c.h.b16 %v474
        %v551 = vunpack.c.l.b16 %v475
        %v552 = vunpack.c.l.b16 %v476
        %v553 = vunpack.c.h.b16 %v476
        %v554 = vunpack.c.l.b16 %v477
        %v555 = vunpack.c.l.b16 %v478
        %v556 = vunpack.c.h.b16 %v478
        %v557 = vunpack.c.l.b16 %v479
        %v558 = vunpack.c.l.b16 %v480
        %v559 = vunpack.c.h.b16 %v480
        %v560 = vunpack.c.l.b16 %v481
        %v561 = vunpack.c.l.b16 %v482
        %v562 = vunpack.c.h.b16 %v482
        %v563 = vunpack.c.l.b16 %v483
        %v564 = vpack.c.b16 %v519, %v516
        %v565 = vpack.c.b16 %v520, %v517
        %v566 = vpack.c.b16 %v521, %v518
        %v567 = vpack.c.b16 %v525, %v522
        %v568 = vpack.c.b16 %v526, %v523
        %v569 = vpack.c.b16 %v527, %v524
        %v570 = vpack.c.b16 %v531, %v528
        %v571 = vpack.c.b16 %v532, %v529
        %v572 = vpack.c.b16 %v533, %v530
        %v573 = vpack.c.b16 %v537, %v534
        %v574 = vpack.c.b16 %v538, %v535
        %v575 = vpack.c.b16 %v539, %v536
        %v576 = vpack.c.b16 %v543, %v540
        %v577 = vpack.c.b16 %v544, %v541
        %v578 = vpack.c.b16 %v545, %v542
        %v579 = vpack.c.b16 %v549, %v546
        %v580 = vpack.c.b16 %v550, %v547
        %v581 = vpack.c.b16 %v551, %v548
        %v582 = vpack.c.b16 %v555, %v552
        %v583 = vpack.c.b16 %v556, %v553
        %v584 = vpack.c.b16 %v557, %v554
        %v585 = vpack.c.b16 %v561, %v558
        %v586 = vpack.c.b16 %v562, %v559
        %v587 = vpack.c.b16 %v563, %v560
        %612 = vmatprep.subr.bf16.mxu0 %v565
        %613 = vmatpush1.bf16.msra.mxu0 %v564
        %614 = vmatprep.subr.bf16.mxu0 %v568
        %615 = vmatpush1.bf16.msra.mxu0 %v567
        %616 = vmatprep.subr.bf16.mxu0 %v571
        %617 = vmatpush1.bf16.msra.mxu0 %v570
        %618 = vmatprep.subr.bf16.mxu0 %v574
        %619 = vmatpush1.bf16.msra.mxu0 %v573
        %620 = vmatprep.subr.bf16.mxu0 %v577
        %621 = vmatpush1.bf16.msra.mxu0 %v576
        %622 = vmatprep.subr.bf16.mxu0 %v580
        %623 = vmatpush1.bf16.msra.mxu0 %v579
        %624 = vmatprep.subr.bf16.mxu0 %v583
        %625 = vmatpush1.bf16.msra.mxu0 %v582
        %626 = vmatprep.subr.bf16.mxu0 %v586
        %627 = vmatpush1.bf16.msra.mxu0 %v585
        %628 = vmatprep.subr.bf16.mxu0 0
        %629 = vmatpush1.bf16.msra.mxu0 0
        %630 = vmatprep.subr.bf16.mxu0 0
        %631 = vmatpush1.bf16.msra.mxu0 0
        %632 = vmatprep.subr.bf16.mxu0 0
        %633 = vmatpush1.bf16.msra.mxu0 0
        %634 = vmatprep.subr.bf16.mxu0 0
        %635 = vmatpush1.bf16.msra.mxu0 0
        %636 = vmatprep.subr.bf16.mxu0 0
        %637 = vmatpush1.bf16.msra.mxu0 0
        %638 = vmatprep.subr.bf16.mxu0 0
        %639 = vmatpush1.bf16.msra.mxu0 0
        %640 = vmatprep.subr.bf16.mxu0 0
        %641 = vmatpush1.bf16.msra.mxu0 0
        %642 = vmatprep.subr.bf16.mxu0 0
        %643 = vmatpush1.bf16.msra.mxu0 0
        %644 = vmatprep.mubr.bf16.mxu0 0
        %645 = vmatmul.mubr.bf16.gmra.mrb[0].mxu0 %v451
        %v646 = vpop.f32.mrb[0].mxu0
        %v647 = vadd.f32 0.0, %v646
        %v648 = vpop.f32.mrb[0].mxu0
        %v649 = vadd.f32 0.0, %v648
        %v650 = vpop.f32.mrb[0].mxu0
        %v651 = vpop.f32.mrb[0].mxu0
        %652 = vdwg.mxu0
        %653 = vmatprep.subr.bf16.mxu0 0
        %654 = vmatpush1.bf16.msra.mxu0 %v566
        %655 = vmatprep.subr.bf16.mxu0 0
        %656 = vmatpush1.bf16.msra.mxu0 %v569
        %657 = vmatprep.subr.bf16.mxu0 0
        %658 = vmatpush1.bf16.msra.mxu0 %v572
        %659 = vmatprep.subr.bf16.mxu0 0
        %660 = vmatpush1.bf16.msra.mxu0 %v575
        %661 = vmatprep.subr.bf16.mxu0 0
        %662 = vmatpush1.bf16.msra.mxu0 %v578
        %663 = vmatprep.subr.bf16.mxu0 0
        %664 = vmatpush1.bf16.msra.mxu0 %v581
        %665 = vmatprep.subr.bf16.mxu0 0
        %666 = vmatpush1.bf16.msra.mxu0 %v584
        %667 = vmatprep.subr.bf16.mxu0 0
        %668 = vmatpush1.bf16.msra.mxu0 %v587
        %669 = vmatprep.subr.bf16.mxu0 0
        %670 = vmatpush1.bf16.msra.mxu0 0
        %671 = vmatprep.subr.bf16.mxu0 0
        %672 = vmatpush1.bf16.msra.mxu0 0
        %673 = vmatprep.subr.bf16.mxu0 0
        %674 = vmatpush1.bf16.msra.mxu0 0
        %675 = vmatprep.subr.bf16.mxu0 0
        %676 = vmatpush1.bf16.msra.mxu0 0
        %677 = vmatprep.subr.bf16.mxu0 0
        %678 = vmatpush1.bf16.msra.mxu0 0
        %679 = vmatprep.subr.bf16.mxu0 0
        %680 = vmatpush1.bf16.msra.mxu0 0
        %681 = vmatprep.subr.bf16.mxu0 0
        %682 = vmatpush1.bf16.msra.mxu0 0
        %683 = vmatprep.subr.bf16.mxu0 0
        %684 = vmatpush1.bf16.msra.mxu0 0
        %685 = vmatprep.mubr.bf16.mxu0 0
        %686 = vmatmul.mubr.bf16.gmra.mrb[0].mxu0 %v451
        %v687 = vpop.f32.mrb[0].mxu0
        %v688 = vadd.f32 0.0, %v687
        %v689 = vpop.f32.mrb[0].mxu0
        %v690 = vpop.f32.mrb[0].mxu0
        %v691 = vpop.f32.mrb[0].mxu0
        %692 = vdwg.mxu0
        %vm693 = vcmask 261120
        %v695 = vsel %vm693, %v647, 0
        %v698 = vsel %vm693, %v649, 0
        %700 = vmatprep.subr.mxu0 0.0
        %701 = vmatpush1.xpose.msra.mxu0 %v698
        %702 = vmatprep.subr.mxu0 0.0
        %703 = vmatpush1.xpose.msra.mxu0 0.0
        %704 = vmatprep.subr.mxu0 0.0
        %705 = vmatpush1.xpose.msra.mxu0 0.0
        %706 = vmatprep.subr.mxu0 0.0
        %707 = vmatpush1.xpose.msra.mxu0 0.0
        %708 = vmatprep.subr.mxu0 0.0
        %709 = vmatpush1.xpose.msra.mxu0 0.0
        %710 = vmatprep.subr.mxu0 0.0
        %711 = vmatpush1.xpose.msra.mxu0 0.0
        %712 = vmatprep.subr.mxu0 0.0
        %713 = vmatpush1.xpose.msra.mxu0 0.0
        %714 = vmatprep.subr.mxu0 0.0
        %715 = vmatpush1.xpose.msra.mxu0 0.0
        %716 = vmatprep.subr.mxu0 0.0
        %717 = vmatpush1.xpose.msra.mxu0 0.0
        %718 = vmatprep.subr.mxu0 0.0
        %719 = vmatpush1.xpose.msra.mxu0 0.0
        %720 = vmatprep.subr.mxu0 0.0
        %721 = vmatpush1.xpose.msra.mxu0 0.0
        %722 = vmatprep.subr.mxu0 0.0
        %723 = vmatpush1.xpose.msra.mxu0 0.0
        %724 = vmatprep.subr.mxu0 0.0
        %725 = vmatpush1.xpose.msra.mxu0 0.0
        %726 = vmatprep.subr.mxu0 0.0
        %727 = vmatpush1.xpose.msra.mxu0 0.0
        %728 = vmatprep.subr.mxu0 0.0
        %729 = vmatpush1.xpose.msra.mxu0 0.0
        %730 = vmatprep.subr.mxu0 0.0
        %731 = vmatpush1.xpose.msra.mxu0 0.0
        %732 = vmatprep.subr.mxu0 0.0
        %733 = vmatpush1.xpose.msra.mxu0 0.0
        %734 = vmatprep.subr.mxu0 0.0
        %735 = vmatpush1.xpose.msra.mxu0 0.0
        %736 = vmatprep.subr.mxu0 0.0
        %737 = vmatpush1.xpose.msra.mxu0 0.0
        %738 = vmatprep.subr.mxu0 0.0
        %739 = vmatpush1.xpose.msra.mxu0 0.0
        %740 = vmatprep.subr.mxu0 0.0
        %741 = vmatpush1.xpose.msra.mxu0 0.0
        %742 = vmatprep.subr.mxu0 0.0
        %743 = vmatpush1.xpose.msra.mxu0 0.0
        %744 = vmatprep.subr.mxu0 0.0
        %745 = vmatpush1.xpose.msra.mxu0 0.0
        %746 = vmatprep.subr.mxu0 0.0
        %747 = vmatpush1.xpose.msra.mxu0 0.0
        %748 = vmatprep.subr.mxu0 0.0
        %749 = vmatpush1.xpose.msra.mxu0 0.0
        %750 = vmatprep.subr.mxu0 0.0
        %751 = vmatpush1.xpose.msra.mxu0 0.0
        %752 = vmatprep.subr.mxu0 0.0
        %753 = vmatpush1.xpose.msra.mxu0 0.0
        %754 = vmatprep.subr.mxu0 0.0
        %755 = vmatpush1.xpose.msra.mxu0 0.0
        %756 = vmatprep.subr.mxu0 0.0
        %757 = vmatpush1.xpose.msra.mxu0 0.0
        %758 = vmatprep.subr.mxu0 0.0
        %759 = vmatpush1.xpose.msra.mxu0 0.0
        %760 = vmatprep.subr.mxu0 0.0
        %761 = vmatpush1.xpose.msra.mxu0 0.0
        %762 = vmatprep.subr.mxu0 0.0
        %763 = vmatpush1.xpose.msra.mxu0 0.0
        %764 = vmatprep.mubr.f32.mxu0 0.0
        %765 = vmatmul.mubr.f32.gmra.mrb[0].mxu0 %v695
        %v766 = vpop.f32.mrb[0].mxu0
        %v767 = vadd.f32 0.0, %v766
        %v768 = vpop.f32.mrb[0].mxu0
        %769 = vdwg.mxu0
        %v770 = vmul.f32 %v767, 0.17677669
        %v771 = vadd.f32 %v770, %v450
        %vm772 = vcmask 64512
        %v773 = vsel %vm772, %v771, -inf
        %774 = vmax.xlane.f32.xlu0 %v773
        %v775 = vpop.xlane.xlu0 %774
        %v776 = vsub.f32 %v771, %v775
        %v777 = vmul.f32 %v776, 1.442695
        %v778 = vpow.pop %v777
        %v779 = vsel %vm772, %v778, 0.0
        %780 = vadd.xlane.f32.xlu0 %v779
        %v781 = vpop.xlane.xlu0 %780
        %v782 = vrcp.pop %v781
        %v783 = vmul.f32 %v778, %v782
        %v785 = vsel %vm772, %v783, 0
        %787 = vmatprep.subr.mxu0 0.0
        %788 = vmatpush1.msra.mxu0 %v688
        %789 = vmatprep.subr.mxu0 0.0
        %790 = vmatpush1.msra.mxu0 0.0
        %791 = vmatprep.subr.mxu0 0.0
        %792 = vmatpush1.msra.mxu0 0.0
        %793 = vmatprep.subr.mxu0 0.0
        %794 = vmatpush1.msra.mxu0 0.0
        %795 = vmatprep.subr.mxu0 0.0
        %796 = vmatpush1.msra.mxu0 0.0
        %797 = vmatprep.subr.mxu0 0.0
        %798 = vmatpush1.msra.mxu0 0.0
        %799 = vmatprep.subr.mxu0 0.0
        %800 = vmatpush1.msra.mxu0 0.0
        %801 = vmatprep.subr.mxu0 0.0
        %802 = vmatpush1.msra.mxu0 0.0
        %803 = vmatprep.subr.mxu0 0.0
        %804 = vmatpush1.msra.mxu0 0.0
        %805 = vmatprep.subr.mxu0 0.0
        %806 = vmatpush1.msra.mxu0 0.0
        %807 = vmatprep.subr.mxu0 0.0
        %808 = vmatpush1.msra.mxu0 0.0
        %809 = vmatprep.subr.mxu0 0.0
        %810 = vmatpush1.msra.mxu0 0.0
        %811 = vmatprep.subr.mxu0 0.0
        %812 = vmatpush1.msra.mxu0 0.0
        %813 = vmatprep.subr.mxu0 0.0
        %814 = vmatpush1.msra.mxu0 0.0
        %815 = vmatprep.subr.mxu0 0.0
        %816 = vmatpush1.msra.mxu0 0.0
        %817 = vmatprep.subr.mxu0 0.0
        %818 = vmatpush1.msra.mxu0 0.0
        %819 = vmatprep.subr.mxu0 0.0
        %820 = vmatpush1.msra.mxu0 0.0
        %821 = vmatprep.subr.mxu0 0.0
        %822 = vmatpush1.msra.mxu0 0.0
        %823 = vmatprep.subr.mxu0 0.0
        %824 = vmatpush1.msra.mxu0 0.0
        %825 = vmatprep.subr.mxu0 0.0
        %826 = vmatpush1.msra.mxu0 0.0
        %827 = vmatprep.subr.mxu0 0.0
        %828 = vmatpush1.msra.mxu0 0.0
        %829 = vmatprep.subr.mxu0 0.0
        %830 = vmatpush1.msra.mxu0 0.0
        %831 = vmatprep.subr.mxu0 0.0
        %832 = vmatpush1.msra.mxu0 0.0
        %833 = vmatprep.subr.mxu0 0.0
        %834 = vmatpush1.msra.mxu0 0.0
        %835 = vmatprep.subr.mxu0 0.0
        %836 = vmatpush1.msra.mxu0 0.0
        %837 = vmatprep.subr.mxu0 0.0
        %838 = vmatpush1.msra.mxu0 0.0
        %839 = vmatprep.subr.mxu0 0.0
        %840 = vmatpush1.msra.mxu0 0.0
        %841 = vmatprep.subr.mxu0 0.0
        %842 = vmatpush1.msra.mxu0 0.0
        %843 = vmatprep.subr.mxu0 0.0
        %844 = vmatpush1.msra.mxu0 0.0
        %845 = vmatprep.subr.mxu0 0.0
        %846 = vmatpush1.msra.mxu0 0.0
        %847 = vmatprep.subr.mxu0 0.0
        %848 = vmatpush1.msra.mxu0 0.0
        %849 = vmatprep.subr.mxu0 0.0
        %850 = vmatpush1.msra.mxu0 0.0
        %851 = vmatprep.mubr.f32.mxu0 0.0
        %852 = vmatmul.mubr.f32.gmra.mrb[0].mxu0 %v785
        %v853 = vpop.f32.mrb[0].mxu0
        %v854 = vadd.f32 0.0, %v853
        %v855 = vpop.f32.mrb[0].mxu0
        %856 = vdwg.mxu0
        %857 = vst.msk [vmem:[#allocation2] sm:$0xff] %vm693, %v854
        %858 = vrot.lane.b32.xlu0 %v647, 96
        %v859 = vpop.permute.xlu0 %858
        %860 = vrot.lane.b32.xlu0 %v649, 96
        %v861 = vpop.permute.xlu0 %860
        %v862 = vsel %vm693, %v859, 0
        %v864 = vsel %vm693, %v861, 0
        %866 = vmatprep.subr.mxu0 0.0
        %867 = vmatpush1.xpose.msra.mxu0 %v864
        %868 = vmatprep.subr.mxu0 0.0
        %869 = vmatpush1.xpose.msra.mxu0 0.0
        %870 = vmatprep.subr.mxu0 0.0
        %871 = vmatpush1.xpose.msra.mxu0 0.0
        %872 = vmatprep.subr.mxu0 0.0
        %873 = vmatpush1.xpose.msra.mxu0 0.0
        %874 = vmatprep.subr.mxu0 0.0
        %875 = vmatpush1.xpose.msra.mxu0 0.0
        %876 = vmatprep.subr.mxu0 0.0
        %877 = vmatpush1.xpose.msra.mxu0 0.0
        %878 = vmatprep.subr.mxu0 0.0
        %879 = vmatpush1.xpose.msra.mxu0 0.0
        %880 = vmatprep.subr.mxu0 0.0
        %881 = vmatpush1.xpose.msra.mxu0 0.0
        %882 = vmatprep.subr.mxu0 0.0
        %883 = vmatpush1.xpose.msra.mxu0 0.0
        %884 = vmatprep.subr.mxu0 0.0
        %885 = vmatpush1.xpose.msra.mxu0 0.0
        %886 = vmatprep.subr.mxu0 0.0
        %887 = vmatpush1.xpose.msra.mxu0 0.0
        %888 = vmatprep.subr.mxu0 0.0
        %889 = vmatpush1.xpose.msra.mxu0 0.0
        %890 = vmatprep.subr.mxu0 0.0
        %891 = vmatpush1.xpose.msra.mxu0 0.0
        %892 = vmatprep.subr.mxu0 0.0
        %893 = vmatpush1.xpose.msra.mxu0 0.0
        %894 = vmatprep.subr.mxu0 0.0
        %895 = vmatpush1.xpose.msra.mxu0 0.0
        %896 = vmatprep.subr.mxu0 0.0
        %897 = vmatpush1.xpose.msra.mxu0 0.0
        %898 = vmatprep.subr.mxu0 0.0
        %899 = vmatpush1.xpose.msra.mxu0 0.0
        %900 = vmatprep.subr.mxu0 0.0
        %901 = vmatpush1.xpose.msra.mxu0 0.0
        %902 = vmatprep.subr.mxu0 0.0
        %903 = vmatpush1.xpose.msra.mxu0 0.0
        %904 = vmatprep.subr.mxu0 0.0
        %905 = vmatpush1.xpose.msra.mxu0 0.0
        %906 = vmatprep.subr.mxu0 0.0
        %907 = vmatpush1.xpose.msra.mxu0 0.0
        %908 = vmatprep.subr.mxu0 0.0
        %909 = vmatpush1.xpose.msra.mxu0 0.0
        %910 = vmatprep.subr.mxu0 0.0
        %911 = vmatpush1.xpose.msra.mxu0 0.0
        %912 = vmatprep.subr.mxu0 0.0
        %913 = vmatpush1.xpose.msra.mxu0 0.0
        %914 = vmatprep.subr.mxu0 0.0
        %915 = vmatpush1.xpose.msra.mxu0 0.0
        %916 = vmatprep.subr.mxu0 0.0
        %917 = vmatpush1.xpose.msra.mxu0 0.0
        %918 = vmatprep.subr.mxu0 0.0
        %919 = vmatpush1.xpose.msra.mxu0 0.0
        %920 = vmatprep.subr.mxu0 0.0
        %921 = vmatpush1.xpose.msra.mxu0 0.0
        %922 = vmatprep.subr.mxu0 0.0
        %923 = vmatpush1.xpose.msra.mxu0 0.0
        %924 = vmatprep.subr.mxu0 0.0
        %925 = vmatpush1.xpose.msra.mxu0 0.0
        %926 = vmatprep.subr.mxu0 0.0
        %927 = vmatpush1.xpose.msra.mxu0 0.0
        %928 = vmatprep.subr.mxu0 0.0
        %929 = vmatpush1.xpose.msra.mxu0 0.0
        %930 = vmatprep.mubr.f32.mxu0 0.0
        %931 = vmatmul.mubr.f32.gmra.mrb[0].mxu0 %v862
        %v932 = vpop.f32.mrb[0].mxu0
        %v933 = vadd.f32 0.0, %v932
        %v934 = vpop.f32.mrb[0].mxu0
        %935 = vdwg.mxu0
        %v936 = vmul.f32 %v933, 0.17677669
        %v937 = vadd.f32 %v936, %v450
        %v938 = vsel %vm772, %v937, -inf
        %939 = vmax.xlane.f32.xlu0 %v938
        %v940 = vpop.xlane.xlu0 %939
        %v941 = vsub.f32 %v937, %v940
        %v942 = vmul.f32 %v941, 1.442695
        %v943 = vpow.pop %v942
        %v944 = vsel %vm772, %v943, 0.0
        %945 = vadd.xlane.f32.xlu0 %v944
        %v946 = vpop.xlane.xlu0 %945
        %v947 = vrcp.pop %v946
        %v948 = vmul.f32 %v943, %v947
        %950 = vrot.lane.b32.xlu0 %v688, 96
        %v951 = vpop.permute.xlu0 %950
        %v954 = vsel %vm772, %v948, 0
        %956 = vmatprep.subr.mxu0 0.0
        %957 = vmatpush1.msra.mxu0 %v951
        %958 = vmatprep.subr.mxu0 0.0
        %959 = vmatpush1.msra.mxu0 0.0
        %960 = vmatprep.subr.mxu0 0.0
        %961 = vmatpush1.msra.mxu0 0.0
        %962 = vmatprep.subr.mxu0 0.0
        %963 = vmatpush1.msra.mxu0 0.0
        %964 = vmatprep.subr.mxu0 0.0
        %965 = vmatpush1.msra.mxu0 0.0
        %966 = vmatprep.subr.mxu0 0.0
        %967 = vmatpush1.msra.mxu0 0.0
        %968 = vmatprep.subr.mxu0 0.0
        %969 = vmatpush1.msra.mxu0 0.0
        %970 = vmatprep.subr.mxu0 0.0
        %971 = vmatpush1.msra.mxu0 0.0
        %972 = vmatprep.subr.mxu0 0.0
        %973 = vmatpush1.msra.mxu0 0.0
        %974 = vmatprep.subr.mxu0 0.0
        %975 = vmatpush1.msra.mxu0 0.0
        %976 = vmatprep.subr.mxu0 0.0
        %977 = vmatpush1.msra.mxu0 0.0
        %978 = vmatprep.subr.mxu0 0.0
        %979 = vmatpush1.msra.mxu0 0.0
        %980 = vmatprep.subr.mxu0 0.0
        %981 = vmatpush1.msra.mxu0 0.0
        %982 = vmatprep.subr.mxu0 0.0
        %983 = vmatpush1.msra.mxu0 0.0
        %984 = vmatprep.subr.mxu0 0.0
        %985 = vmatpush1.msra.mxu0 0.0
        %986 = vmatprep.subr.mxu0 0.0
        %987 = vmatpush1.msra.mxu0 0.0
        %988 = vmatprep.subr.mxu0 0.0
        %989 = vmatpush1.msra.mxu0 0.0
        %990 = vmatprep.subr.mxu0 0.0
        %991 = vmatpush1.msra.mxu0 0.0
        %992 = vmatprep.subr.mxu0 0.0
        %993 = vmatpush1.msra.mxu0 0.0
        %994 = vmatprep.subr.mxu0 0.0
        %995 = vmatpush1.msra.mxu0 0.0
        %996 = vmatprep.subr.mxu0 0.0
        %997 = vmatpush1.msra.mxu0 0.0
        %998 = vmatprep.subr.mxu0 0.0
        %999 = vmatpush1.msra.mxu0 0.0
        %1000 = vmatprep.subr.mxu0 0.0
        %1001 = vmatpush1.msra.mxu0 0.0
        %1002 = vmatprep.subr.mxu0 0.0
        %1003 = vmatpush1.msra.mxu0 0.0
        %1004 = vmatprep.subr.mxu0 0.0
        %1005 = vmatpush1.msra.mxu0 0.0
        %1006 = vmatprep.subr.mxu0 0.0
        %1007 = vmatpush1.msra.mxu0 0.0
        %1008 = vmatprep.subr.mxu0 0.0
        %1009 = vmatpush1.msra.mxu0 0.0
        %1010 = vmatprep.subr.mxu0 0.0
        %1011 = vmatpush1.msra.mxu0 0.0
        %1012 = vmatprep.subr.mxu0 0.0
        %1013 = vmatpush1.msra.mxu0 0.0
        %1014 = vmatprep.subr.mxu0 0.0
        %1015 = vmatpush1.msra.mxu0 0.0
        %1016 = vmatprep.subr.mxu0 0.0
        %1017 = vmatpush1.msra.mxu0 0.0
        %1018 = vmatprep.subr.mxu0 0.0
        %1019 = vmatpush1.msra.mxu0 0.0
        %1020 = vmatprep.mubr.f32.mxu0 0.0
        %1021 = vmatmul.mubr.f32.gmra.mrb[0].mxu0 %v954
        %v1022 = vpop.f32.mrb[0].mxu0
        %v1023 = vadd.f32 0.0, %v1022
        %v1024 = vpop.f32.mrb[0].mxu0
        %1025 = vdwg.mxu0
        %1027 = vrot.lane.b32.xlu0 %v1023, 32
        %v1028 = vpop.permute.xlu0 %1027
        %vm1030 = vcmask 523520
        %1031 = vst.msk [vmem:[#allocation2] sm:$0xff] %vm1030, %v1028
        %1032 = vrot.lane.b32.xlu0 %v647, 64
        %v1033 = vpop.permute.xlu0 %1032
        %1034 = vrot.lane.b32.xlu0 %v649, 64
        %v1035 = vpop.permute.xlu0 %1034
        %v1036 = vsel %vm693, %v1033, 0
        %v1038 = vsel %vm693, %v1035, 0
        %1040 = vmatprep.subr.mxu0 0.0
        %1041 = vmatpush1.xpose.msra.mxu0 %v1038
        %1042 = vmatprep.subr.mxu0 0.0
        %1043 = vmatpush1.xpose.msra.mxu0 0.0
        %1044 = vmatprep.subr.mxu0 0.0
        %1045 = vmatpush1.xpose.msra.mxu0 0.0
        %1046 = vmatprep.subr.mxu0 0.0
        %1047 = vmatpush1.xpose.msra.mxu0 0.0
        %1048 = vmatprep.subr.mxu0 0.0
        %1049 = vmatpush1.xpose.msra.mxu0 0.0
        %1050 = vmatprep.subr.mxu0 0.0
        %1051 = vmatpush1.xpose.msra.mxu0 0.0
        %1052 = vmatprep.subr.mxu0 0.0
        %1053 = vmatpush1.xpose.msra.mxu0 0.0
        %1054 = vmatprep.subr.mxu0 0.0
        %1055 = vmatpush1.xpose.msra.mxu0 0.0
        %1056 = vmatprep.subr.mxu0 0.0
        %1057 = vmatpush1.xpose.msra.mxu0 0.0
        %1058 = vmatprep.subr.mxu0 0.0
        %1059 = vmatpush1.xpose.msra.mxu0 0.0
        %1060 = vmatprep.subr.mxu0 0.0
        %1061 = vmatpush1.xpose.msra.mxu0 0.0
        %1062 = vmatprep.subr.mxu0 0.0
        %1063 = vmatpush1.xpose.msra.mxu0 0.0
        %1064 = vmatprep.subr.mxu0 0.0
        %1065 = vmatpush1.xpose.msra.mxu0 0.0
        %1066 = vmatprep.subr.mxu0 0.0
        %1067 = vmatpush1.xpose.msra.mxu0 0.0
        %1068 = vmatprep.subr.mxu0 0.0
        %1069 = vmatpush1.xpose.msra.mxu0 0.0
        %1070 = vmatprep.subr.mxu0 0.0
        %1071 = vmatpush1.xpose.msra.mxu0 0.0
        %1072 = vmatprep.subr.mxu0 0.0
        %1073 = vmatpush1.xpose.msra.mxu0 0.0
        %1074 = vmatprep.subr.mxu0 0.0
        %1075 = vmatpush1.xpose.msra.mxu0 0.0
        %1076 = vmatprep.subr.mxu0 0.0
        %1077 = vmatpush1.xpose.msra.mxu0 0.0
        %1078 = vmatprep.subr.mxu0 0.0
        %1079 = vmatpush1.xpose.msra.mxu0 0.0
        %1080 = vmatprep.subr.mxu0 0.0
        %1081 = vmatpush1.xpose.msra.mxu0 0.0
        %1082 = vmatprep.subr.mxu0 0.0
        %1083 = vmatpush1.xpose.msra.mxu0 0.0
        %1084 = vmatprep.subr.mxu0 0.0
        %1085 = vmatpush1.xpose.msra.mxu0 0.0
        %1086 = vmatprep.subr.mxu0 0.0
        %1087 = vmatpush1.xpose.msra.mxu0 0.0
        %1088 = vmatprep.subr.mxu0 0.0
        %1089 = vmatpush1.xpose.msra.mxu0 0.0
        %1090 = vmatprep.subr.mxu0 0.0
        %1091 = vmatpush1.xpose.msra.mxu0 0.0
        %1092 = vmatprep.subr.mxu0 0.0
        %1093 = vmatpush1.xpose.msra.mxu0 0.0
        %1094 = vmatprep.subr.mxu0 0.0
        %1095 = vmatpush1.xpose.msra.mxu0 0.0
        %1096 = vmatprep.subr.mxu0 0.0
        %1097 = vmatpush1.xpose.msra.mxu0 0.0
        %1098 = vmatprep.subr.mxu0 0.0
        %1099 = vmatpush1.xpose.msra.mxu0 0.0
        %1100 = vmatprep.subr.mxu0 0.0
        %1101 = vmatpush1.xpose.msra.mxu0 0.0
        %1102 = vmatprep.subr.mxu0 0.0
        %1103 = vmatpush1.xpose.msra.mxu0 0.0
        %1104 = vmatprep.mubr.f32.mxu0 0.0
        %1105 = vmatmul.mubr.f32.gmra.mrb[0].mxu0 %v1036
        %v1106 = vpop.f32.mrb[0].mxu0
        %v1107 = vadd.f32 0.0, %v1106
        %v1108 = vpop.f32.mrb[0].mxu0
        %1109 = vdwg.mxu0
        %v1110 = vmul.f32 %v1107, 0.17677669
        %v1111 = vadd.f32 %v1110, %v450
        %v1112 = vsel %vm772, %v1111, -inf
        %1113 = vmax.xlane.f32.xlu0 %v1112
        %v1114 = vpop.xlane.xlu0 %1113
        %v1115 = vsub.f32 %v1111, %v1114
        %v1116 = vmul.f32 %v1115, 1.442695
        %v1117 = vpow.pop %v1116
        %v1118 = vsel %vm772, %v1117, 0.0
        %1119 = vadd.xlane.f32.xlu0 %v1118
        %v1120 = vpop.xlane.xlu0 %1119
        %v1121 = vrcp.pop %v1120
        %v1122 = vmul.f32 %v1117, %v1121
        %1123 = vrot.lane.b32.xlu0 %v688, 64
        %v1124 = vpop.permute.xlu0 %1123
        %v1127 = vsel %vm772, %v1122, 0
        %1129 = vmatprep.subr.mxu0 0.0
        %1130 = vmatpush1.msra.mxu0 %v1124
        %1131 = vmatprep.subr.mxu0 0.0
        %1132 = vmatpush1.msra.mxu0 0.0
        %1133 = vmatprep.subr.mxu0 0.0
        %1134 = vmatpush1.msra.mxu0 0.0
        %1135 = vmatprep.subr.mxu0 0.0
        %1136 = vmatpush1.msra.mxu0 0.0
        %1137 = vmatprep.subr.mxu0 0.0
        %1138 = vmatpush1.msra.mxu0 0.0
        %1139 = vmatprep.subr.mxu0 0.0
        %1140 = vmatpush1.msra.mxu0 0.0
        %1141 = vmatprep.subr.mxu0 0.0
        %1142 = vmatpush1.msra.mxu0 0.0
        %1143 = vmatprep.subr.mxu0 0.0
        %1144 = vmatpush1.msra.mxu0 0.0
        %1145 = vmatprep.subr.mxu0 0.0
        %1146 = vmatpush1.msra.mxu0 0.0
        %1147 = vmatprep.subr.mxu0 0.0
        %1148 = vmatpush1.msra.mxu0 0.0
        %1149 = vmatprep.subr.mxu0 0.0
        %1150 = vmatpush1.msra.mxu0 0.0
        %1151 = vmatprep.subr.mxu0 0.0
        %1152 = vmatpush1.msra.mxu0 0.0
        %1153 = vmatprep.subr.mxu0 0.0
        %1154 = vmatpush1.msra.mxu0 0.0
        %1155 = vmatprep.subr.mxu0 0.0
        %1156 = vmatpush1.msra.mxu0 0.0
        %1157 = vmatprep.subr.mxu0 0.0
        %1158 = vmatpush1.msra.mxu0 0.0
        %1159 = vmatprep.subr.mxu0 0.0
        %1160 = vmatpush1.msra.mxu0 0.0
        %1161 = vmatprep.subr.mxu0 0.0
        %1162 = vmatpush1.msra.mxu0 0.0
        %1163 = vmatprep.subr.mxu0 0.0
        %1164 = vmatpush1.msra.mxu0 0.0
        %1165 = vmatprep.subr.mxu0 0.0
        %1166 = vmatpush1.msra.mxu0 0.0
        %1167 = vmatprep.subr.mxu0 0.0
        %1168 = vmatpush1.msra.mxu0 0.0
        %1169 = vmatprep.subr.mxu0 0.0
        %1170 = vmatpush1.msra.mxu0 0.0
        %1171 = vmatprep.subr.mxu0 0.0
        %1172 = vmatpush1.msra.mxu0 0.0
        %1173 = vmatprep.subr.mxu0 0.0
        %1174 = vmatpush1.msra.mxu0 0.0
        %1175 = vmatprep.subr.mxu0 0.0
        %1176 = vmatpush1.msra.mxu0 0.0
        %1177 = vmatprep.subr.mxu0 0.0
        %1178 = vmatpush1.msra.mxu0 0.0
        %1179 = vmatprep.subr.mxu0 0.0
        %1180 = vmatpush1.msra.mxu0 0.0
        %1181 = vmatprep.subr.mxu0 0.0
        %1182 = vmatpush1.msra.mxu0 0.0
        %1183 = vmatprep.subr.mxu0 0.0
        %1184 = vmatpush1.msra.mxu0 0.0
        %1185 = vmatprep.subr.mxu0 0.0
        %1186 = vmatpush1.msra.mxu0 0.0
        %1187 = vmatprep.subr.mxu0 0.0
        %1188 = vmatpush1.msra.mxu0 0.0
        %1189 = vmatprep.subr.mxu0 0.0
        %1190 = vmatpush1.msra.mxu0 0.0
        %1191 = vmatprep.subr.mxu0 0.0
        %1192 = vmatpush1.msra.mxu0 0.0
        %1193 = vmatprep.mubr.f32.mxu0 0.0
        %1194 = vmatmul.mubr.f32.gmra.mrb[0].mxu0 %v1127
        %v1195 = vpop.f32.mrb[0].mxu0
        %v1196 = vadd.f32 0.0, %v1195
        %v1197 = vpop.f32.mrb[0].mxu0
        %1198 = vdwg.mxu0
        %1200 = vrot.lane.b32.xlu0 %v1196, 64
        %v1201 = vpop.permute.xlu0 %1200
        %vm1203 = vcmask 785920
        %1204 = vst.msk [vmem:[#allocation2] sm:$0xff] %vm1203, %v1201
        %1205 = vrot.lane.b32.xlu0 %v647, 32
        %v1206 = vpop.permute.xlu0 %1205
        %1207 = vrot.lane.b32.xlu0 %v649, 32
        %v1208 = vpop.permute.xlu0 %1207
        %v1209 = vsel %vm693, %v1206, 0
        %v1211 = vsel %vm693, %v1208, 0
        %1213 = vmatprep.subr.mxu0 0.0
        %1214 = vmatpush1.xpose.msra.mxu0 %v1211
        %1215 = vmatprep.subr.mxu0 0.0
        %1216 = vmatpush1.xpose.msra.mxu0 0.0
        %1217 = vmatprep.subr.mxu0 0.0
        %1218 = vmatpush1.xpose.msra.mxu0 0.0
        %1219 = vmatprep.subr.mxu0 0.0
        %1220 = vmatpush1.xpose.msra.mxu0 0.0
        %1221 = vmatprep.subr.mxu0 0.0
        %1222 = vmatpush1.xpose.msra.mxu0 0.0
        %1223 = vmatprep.subr.mxu0 0.0
        %1224 = vmatpush1.xpose.msra.mxu0 0.0
        %1225 = vmatprep.subr.mxu0 0.0
        %1226 = vmatpush1.xpose.msra.mxu0 0.0
        %1227 = vmatprep.subr.mxu0 0.0
        %1228 = vmatpush1.xpose.msra.mxu0 0.0
        %1229 = vmatprep.subr.mxu0 0.0
        %1230 = vmatpush1.xpose.msra.mxu0 0.0
        %1231 = vmatprep.subr.mxu0 0.0
        %1232 = vmatpush1.xpose.msra.mxu0 0.0
        %1233 = vmatprep.subr.mxu0 0.0
        %1234 = vmatpush1.xpose.msra.mxu0 0.0
        %1235 = vmatprep.subr.mxu0 0.0
        %1236 = vmatpush1.xpose.msra.mxu0 0.0
        %1237 = vmatprep.subr.mxu0 0.0
        %1238 = vmatpush1.xpose.msra.mxu0 0.0
        %1239 = vmatprep.subr.mxu0 0.0
        %1240 = vmatpush1.xpose.msra.mxu0 0.0
        %1241 = vmatprep.subr.mxu0 0.0
        %1242 = vmatpush1.xpose.msra.mxu0 0.0
        %1243 = vmatprep.subr.mxu0 0.0
        %1244 = vmatpush1.xpose.msra.mxu0 0.0
        %1245 = vmatprep.subr.mxu0 0.0
        %1246 = vmatpush1.xpose.msra.mxu0 0.0
        %1247 = vmatprep.subr.mxu0 0.0
        %1248 = vmatpush1.xpose.msra.mxu0 0.0
        %1249 = vmatprep.subr.mxu0 0.0
        %1250 = vmatpush1.xpose.msra.mxu0 0.0
        %1251 = vmatprep.subr.mxu0 0.0
        %1252 = vmatpush1.xpose.msra.mxu0 0.0
        %1253 = vmatprep.subr.mxu0 0.0
        %1254 = vmatpush1.xpose.msra.mxu0 0.0
        %1255 = vmatprep.subr.mxu0 0.0
        %1256 = vmatpush1.xpose.msra.mxu0 0.0
        %1257 = vmatprep.subr.mxu0 0.0
        %1258 = vmatpush1.xpose.msra.mxu0 0.0
        %1259 = vmatprep.subr.mxu0 0.0
        %1260 = vmatpush1.xpose.msra.mxu0 0.0
        %1261 = vmatprep.subr.mxu0 0.0
        %1262 = vmatpush1.xpose.msra.mxu0 0.0
        %1263 = vmatprep.subr.mxu0 0.0
        %1264 = vmatpush1.xpose.msra.mxu0 0.0
        %1265 = vmatprep.subr.mxu0 0.0
        %1266 = vmatpush1.xpose.msra.mxu0 0.0
        %1267 = vmatprep.subr.mxu0 0.0
        %1268 = vmatpush1.xpose.msra.mxu0 0.0
        %1269 = vmatprep.subr.mxu0 0.0
        %1270 = vmatpush1.xpose.msra.mxu0 0.0
        %1271 = vmatprep.subr.mxu0 0.0
        %1272 = vmatpush1.xpose.msra.mxu0 0.0
        %1273 = vmatprep.subr.mxu0 0.0
        %1274 = vmatpush1.xpose.msra.mxu0 0.0
        %1275 = vmatprep.subr.mxu0 0.0
        %1276 = vmatpush1.xpose.msra.mxu0 0.0
        %1277 = vmatprep.mubr.f32.mxu0 0.0
        %1278 = vmatmul.mubr.f32.gmra.mrb[0].mxu0 %v1209
        %v1279 = vpop.f32.mrb[0].mxu0
        %v1280 = vadd.f32 0.0, %v1279
        %v1281 = vpop.f32.mrb[0].mxu0
        %1282 = vdwg.mxu0
        %v1283 = vmul.f32 %v1280, 0.17677669
        %v1284 = vadd.f32 %v1283, %v450
        %v1285 = vsel %vm772, %v1284, -inf
        %1286 = vmax.xlane.f32.xlu0 %v1285
        %v1287 = vpop.xlane.xlu0 %1286
        %v1288 = vsub.f32 %v1284, %v1287
        %v1289 = vmul.f32 %v1288, 1.442695
        %v1290 = vpow.pop %v1289
        %v1291 = vsel %vm772, %v1290, 0.0
        %1292 = vadd.xlane.f32.xlu0 %v1291
        %v1293 = vpop.xlane.xlu0 %1292
        %v1294 = vrcp.pop %v1293
        %v1295 = vmul.f32 %v1290, %v1294
        %1296 = vrot.lane.b32.xlu0 %v688, 32
        %v1297 = vpop.permute.xlu0 %1296
        %v1300 = vsel %vm772, %v1295, 0
        %1302 = vmatprep.subr.mxu0 0.0
        %1303 = vmatpush1.msra.mxu0 %v1297
        %1304 = vmatprep.subr.mxu0 0.0
        %1305 = vmatpush1.msra.mxu0 0.0
        %1306 = vmatprep.subr.mxu0 0.0
        %1307 = vmatpush1.msra.mxu0 0.0
        %1308 = vmatprep.subr.mxu0 0.0
        %1309 = vmatpush1.msra.mxu0 0.0
        %1310 = vmatprep.subr.mxu0 0.0
        %1311 = vmatpush1.msra.mxu0 0.0
        %1312 = vmatprep.subr.mxu0 0.0
        %1313 = vmatpush1.msra.mxu0 0.0
        %1314 = vmatprep.subr.mxu0 0.0
        %1315 = vmatpush1.msra.mxu0 0.0
        %1316 = vmatprep.subr.mxu0 0.0
        %1317 = vmatpush1.msra.mxu0 0.0
        %1318 = vmatprep.subr.mxu0 0.0
        %1319 = vmatpush1.msra.mxu0 0.0
        %1320 = vmatprep.subr.mxu0 0.0
        %1321 = vmatpush1.msra.mxu0 0.0
        %1322 = vmatprep.subr.mxu0 0.0
        %1323 = vmatpush1.msra.mxu0 0.0
        %1324 = vmatprep.subr.mxu0 0.0
        %1325 = vmatpush1.msra.mxu0 0.0
        %1326 = vmatprep.subr.mxu0 0.0
        %1327 = vmatpush1.msra.mxu0 0.0
        %1328 = vmatprep.subr.mxu0 0.0
        %1329 = vmatpush1.msra.mxu0 0.0
        %1330 = vmatprep.subr.mxu0 0.0
        %1331 = vmatpush1.msra.mxu0 0.0
        %1332 = vmatprep.subr.mxu0 0.0
        %1333 = vmatpush1.msra.mxu0 0.0
        %1334 = vmatprep.subr.mxu0 0.0
        %1335 = vmatpush1.msra.mxu0 0.0
        %1336 = vmatprep.subr.mxu0 0.0
        %1337 = vmatpush1.msra.mxu0 0.0
        %1338 = vmatprep.subr.mxu0 0.0
        %1339 = vmatpush1.msra.mxu0 0.0
        %1340 = vmatprep.subr.mxu0 0.0
        %1341 = vmatpush1.msra.mxu0 0.0
        %1342 = vmatprep.subr.mxu0 0.0
        %1343 = vmatpush1.msra.mxu0 0.0
        %1344 = vmatprep.subr.mxu0 0.0
        %1345 = vmatpush1.msra.mxu0 0.0
        %1346 = vmatprep.subr.mxu0 0.0
        %1347 = vmatpush1.msra.mxu0 0.0
        %1348 = vmatprep.subr.mxu0 0.0
        %1349 = vmatpush1.msra.mxu0 0.0
        %1350 = vmatprep.subr.mxu0 0.0
        %1351 = vmatpush1.msra.mxu0 0.0
        %1352 = vmatprep.subr.mxu0 0.0
        %1353 = vmatpush1.msra.mxu0 0.0
        %1354 = vmatprep.subr.mxu0 0.0
        %1355 = vmatpush1.msra.mxu0 0.0
        %1356 = vmatprep.subr.mxu0 0.0
        %1357 = vmatpush1.msra.mxu0 0.0
        %1358 = vmatprep.subr.mxu0 0.0
        %1359 = vmatpush1.msra.mxu0 0.0
        %1360 = vmatprep.subr.mxu0 0.0
        %1361 = vmatpush1.msra.mxu0 0.0
        %1362 = vmatprep.subr.mxu0 0.0
        %1363 = vmatpush1.msra.mxu0 0.0
        %1364 = vmatprep.subr.mxu0 0.0
        %1365 = vmatpush1.msra.mxu0 0.0
        %1366 = vmatprep.mubr.f32.mxu0 0.0
        %1367 = vmatmul.mubr.f32.gmra.mrb[0].mxu0 %v1300
        %v1368 = vpop.f32.mrb[0].mxu0
        %v1369 = vadd.f32 0.0, %v1368
        %v1370 = vpop.f32.mrb[0].mxu0
        %1371 = vdwg.mxu0
        %1373 = vrot.lane.b32.xlu0 %v1369, 96
        %v1374 = vpop.permute.xlu0 %1373
        %vm1376 = vcmask 1048320
        %1377 = vst.msk [vmem:[#allocation2] sm:$0xff] %vm1376, %v1374
        %v1378 = vld [vmem:[#allocation2] sm:$0xff]
        %v1379 = vpack.c.bf16 %v1378, %v1378
        %v1380 = vld [vmem:[%s4] sm:$0xf]
        %v1381 = vld [vmem:[%s4 + $0x4] sm:$0xf]
        %v1382 = vld [vmem:[%s4 + $0x8] sm:$0xf]
        %v1383 = vld [vmem:[%s4 + $0xc] sm:$0xf]
        %v1384 = vld [vmem:[%s4 + $0x10] sm:$0xf]
        %v1385 = vld [vmem:[%s4 + $0x14] sm:$0xf]
        %v1386 = vld [vmem:[%s4 + $0x18] sm:$0xf]
        %v1387 = vld [vmem:[%s4 + $0x1c] sm:$0xf]
        %v1388 = vld [vmem:[%s4 + $0x20] sm:$0xf]
        %v1389 = vld [vmem:[%s4 + $0x24] sm:$0xf]
        %v1390 = vld [vmem:[%s4 + $0x28] sm:$0xf]
        %v1391 = vld [vmem:[%s4 + $0x2c] sm:$0xf]
        %v1392 = vld [vmem:[%s4 + $0x30] sm:$0xf]
        %v1393 = vld [vmem:[%s4 + $0x34] sm:$0xf]
        %v1394 = vld [vmem:[%s4 + $0x38] sm:$0xf]
        %v1395 = vld [vmem:[%s4 + $0x3c] sm:$0xf]
        %v1412 = vunpack.c.l.b16 %v1380
        %v1413 = vunpack.c.l.b16 %v1381
        %v1414 = vunpack.c.l.b16 %v1382
        %v1415 = vunpack.c.l.b16 %v1383
        %v1416 = vunpack.c.l.b16 %v1384
        %v1417 = vunpack.c.l.b16 %v1385
        %v1418 = vunpack.c.l.b16 %v1386
        %v1419 = vunpack.c.l.b16 %v1387
        %v1420 = vunpack.c.l.b16 %v1388
        %v1421 = vunpack.c.l.b16 %v1389
        %v1422 = vunpack.c.l.b16 %v1390
        %v1423 = vunpack.c.l.b16 %v1391
        %v1424 = vunpack.c.l.b16 %v1392
        %v1425 = vunpack.c.l.b16 %v1393
        %v1426 = vunpack.c.l.b16 %v1394
        %v1427 = vunpack.c.l.b16 %v1395
        %v1428 = vpack.c.b16 %v1413, %v1412
        %v1429 = vpack.c.b16 %v1415, %v1414
        %v1430 = vpack.c.b16 %v1417, %v1416
        %v1431 = vpack.c.b16 %v1419, %v1418
        %v1432 = vpack.c.b16 %v1421, %v1420
        %v1433 = vpack.c.b16 %v1423, %v1422
        %v1434 = vpack.c.b16 %v1425, %v1424
        %v1435 = vpack.c.b16 %v1427, %v1426
        %1444 = vmatprep.subr.bf16.mxu0 0
        %1445 = vmatpush1.bf16.msra.mxu0 %v1428
        %1446 = vmatprep.subr.bf16.mxu0 0
        %1447 = vmatpush1.bf16.msra.mxu0 %v1429
        %1448 = vmatprep.subr.bf16.mxu0 0
        %1449 = vmatpush1.bf16.msra.mxu0 %v1430
        %1450 = vmatprep.subr.bf16.mxu0 0
        %1451 = vmatpush1.bf16.msra.mxu0 %v1431
        %1452 = vmatprep.subr.bf16.mxu0 0
        %1453 = vmatpush1.bf16.msra.mxu0 %v1432
        %1454 = vmatprep.subr.bf16.mxu0 0
        %1455 = vmatpush1.bf16.msra.mxu0 %v1433
        %1456 = vmatprep.subr.bf16.mxu0 0
        %1457 = vmatpush1.bf16.msra.mxu0 %v1434
        %1458 = vmatprep.subr.bf16.mxu0 0
        %1459 = vmatpush1.bf16.msra.mxu0 %v1435
        %1460 = vmatprep.subr.bf16.mxu0 0
        %1461 = vmatpush1.bf16.msra.mxu0 0
        %1462 = vmatprep.subr.bf16.mxu0 0
        %1463 = vmatpush1.bf16.msra.mxu0 0
        %1464 = vmatprep.subr.bf16.mxu0 0
        %1465 = vmatpush1.bf16.msra.mxu0 0
        %1466 = vmatprep.subr.bf16.mxu0 0
        %1467 = vmatpush1.bf16.msra.mxu0 0
        %1468 = vmatprep.subr.bf16.mxu0 0
        %1469 = vmatpush1.bf16.msra.mxu0 0
        %1470 = vmatprep.subr.bf16.mxu0 0
        %1471 = vmatpush1.bf16.msra.mxu0 0
        %1472 = vmatprep.subr.bf16.mxu0 0
        %1473 = vmatpush1.bf16.msra.mxu0 0
        %1474 = vmatprep.subr.bf16.mxu0 0
        %1475 = vmatpush1.bf16.msra.mxu0 0
        %1476 = vmatprep.mubr.bf16.mxu0 0
        %1477 = vmatmul.mubr.bf16.gmra.mrb[0].mxu0 %v1379
        %v1478 = vpop.f32.mrb[0].mxu0
        %v1479 = vadd.f32 0.0, %v1478
        %v1480 = vpop.f32.mrb[0].mxu0
        %v1481 = vpop.f32.mrb[0].mxu0
        %v1482 = vpop.f32.mrb[0].mxu0
        %1483 = vdwg.mxu0
        %v1484 = vadd.f32 %v446, %v1479
        %v1485 = vpack.c.bf16 %v1484, %v1484
        %v1486 = vld [vmem:[%s5] sm:$0xff]
        %v1487 = vld [vmem:[%s5 + $0x8] sm:$0xff]
        %v1488 = vld [vmem:[%s5 + $0x10] sm:$0xff]
        %v1489 = vld [vmem:[%s5 + $0x18] sm:$0xff]
        %v1490 = vld [vmem:[%s5 + $0x20] sm:$0xff]
        %v1491 = vld [vmem:[%s5 + $0x28] sm:$0xff]
        %v1492 = vld [vmem:[%s5 + $0x30] sm:$0xff]
        %v1493 = vld [vmem:[%s5 + $0x38] sm:$0xff]
        %v1494 = vld [vmem:[%s5 + $0x40] sm:$0xff]
        %v1495 = vld [vmem:[%s5 + $0x48] sm:$0xff]
        %v1496 = vld [vmem:[%s5 + $0x50] sm:$0xff]
        %v1497 = vld [vmem:[%s5 + $0x58] sm:$0xff]
        %v1498 = vld [vmem:[%s5 + $0x60] sm:$0xff]
        %v1499 = vld [vmem:[%s5 + $0x68] sm:$0xff]
        %v1500 = vld [vmem:[%s5 + $0x70] sm:$0xff]
        %v1501 = vld [vmem:[%s5 + $0x78] sm:$0xff]
        %v1502 = vld [vmem:[%s5 + $0x80] sm:$0xff]
        %v1503 = vld [vmem:[%s5 + $0x88] sm:$0xff]
        %v1504 = vld [vmem:[%s5 + $0x90] sm:$0xff]
        %v1505 = vld [vmem:[%s5 + $0x98] sm:$0xff]
        %v1506 = vld [vmem:[%s5 + $0xa0] sm:$0xff]
        %v1507 = vld [vmem:[%s5 + $0xa8] sm:$0xff]
        %v1508 = vld [vmem:[%s5 + $0xb0] sm:$0xff]
        %v1509 = vld [vmem:[%s5 + $0xb8] sm:$0xff]
        %v1510 = vld [vmem:[%s5 + $0xc0] sm:$0xff]
        %v1511 = vld [vmem:[%s5 + $0xc8] sm:$0xff]
        %v1512 = vld [vmem:[%s5 + $0xd0] sm:$0xff]
        %v1513 = vld [vmem:[%s5 + $0xd8] sm:$0xff]
        %v1514 = vld [vmem:[%s5 + $0xe0] sm:$0xff]
        %v1515 = vld [vmem:[%s5 + $0xe8] sm:$0xff]
        %v1516 = vld [vmem:[%s5 + $0xf0] sm:$0xff]
        %v1517 = vld [vmem:[%s5 + $0xf8] sm:$0xff]
        %v1518 = vld [vmem:[%s6] sm:$0xf]
        %v1520 = vlaneseq
        %v1521 = vshrl.u32 %v1520, 7
        %v1522 = vsub.s32 0, %v1521
        %v1523 = vrot.slane %v1518, %v1522
        %v1524 = vlaneseq
        %v1525 = vshrl.u32 %v1524, 7
        %v1526 = vsub.s32 1, %v1525
        %v1527 = vrot.slane %v1518, %v1526
        %v1528 = vlaneseq
        %v1529 = vshrl.u32 %v1528, 7
        %v1530 = vsub.s32 2, %v1529
        %v1531 = vrot.slane %v1518, %v1530
        %v1532 = vlaneseq
        %v1533 = vshrl.u32 %v1532, 7
        %v1534 = vsub.s32 3, %v1533
        %v1535 = vrot.slane %v1518, %v1534
        %v1572 = vunpack.c.l.b16 %v1486
        %v1573 = vunpack.c.h.b16 %v1486
        %v1574 = vunpack.c.l.b16 %v1487
        %v1575 = vunpack.c.h.b16 %v1487
        %v1576 = vunpack.c.l.b16 %v1488
        %v1577 = vunpack.c.h.b16 %v1488
        %v1578 = vunpack.c.l.b16 %v1489
        %v1579 = vunpack.c.h.b16 %v1489
        %v1580 = vunpack.c.l.b16 %v1490
        %v1581 = vunpack.c.h.b16 %v1490
        %v1582 = vunpack.c.l.b16 %v1491
        %v1583 = vunpack.c.h.b16 %v1491
        %v1584 = vunpack.c.l.b16 %v1492
        %v1585 = vunpack.c.h.b16 %v1492
        %v1586 = vunpack.c.l.b16 %v1493
        %v1587 = vunpack.c.h.b16 %v1493
        %v1588 = vunpack.c.l.b16 %v1494
        %v1589 = vunpack.c.h.b16 %v1494
        %v1590 = vunpack.c.l.b16 %v1495
        %v1591 = vunpack.c.h.b16 %v1495
        %v1592 = vunpack.c.l.b16 %v1496
        %v1593 = vunpack.c.h.b16 %v1496
        %v1594 = vunpack.c.l.b16 %v1497
        %v1595 = vunpack.c.h.b16 %v1497
        %v1596 = vunpack.c.l.b16 %v1498
        %v1597 = vunpack.c.h.b16 %v1498
        %v1598 = vunpack.c.l.b16 %v1499
        %v1599 = vunpack.c.h.b16 %v1499
        %v1600 = vunpack.c.l.b16 %v1500
        %v1601 = vunpack.c.h.b16 %v1500
        %v1602 = vunpack.c.l.b16 %v1501
        %v1603 = vunpack.c.h.b16 %v1501
        %v1604 = vunpack.c.l.b16 %v1502
        %v1605 = vunpack.c.h.b16 %v1502
        %v1606 = vunpack.c.l.b16 %v1503
        %v1607 = vunpack.c.h.b16 %v1503
        %v1608 = vunpack.c.l.b16 %v1504
        %v1609 = vunpack.c.h.b16 %v1504
        %v1610 = vunpack.c.l.b16 %v1505
        %v1611 = vunpack.c.h.b16 %v1505
        %v1612 = vunpack.c.l.b16 %v1506
        %v1613 = vunpack.c.h.b16 %v1506
        %v1614 = vunpack.c.l.b16 %v1507
        %v1615 = vunpack.c.h.b16 %v1507
        %v1616 = vunpack.c.l.b16 %v1508
        %v1617 = vunpack.c.h.b16 %v1508
        %v1618 = vunpack.c.l.b16 %v1509
        %v1619 = vunpack.c.h.b16 %v1509
        %v1620 = vunpack.c.l.b16 %v1510
        %v1621 = vunpack.c.h.b16 %v1510
        %v1622 = vunpack.c.l.b16 %v1511
        %v1623 = vunpack.c.h.b16 %v1511
        %v1624 = vunpack.c.l.b16 %v1512
        %v1625 = vunpack.c.h.b16 %v1512
        %v1626 = vunpack.c.l.b16 %v1513
        %v1627 = vunpack.c.h.b16 %v1513
        %v1628 = vunpack.c.l.b16 %v1514
        %v1629 = vunpack.c.h.b16 %v1514
        %v1630 = vunpack.c.l.b16 %v1515
        %v1631 = vunpack.c.h.b16 %v1515
        %v1632 = vunpack.c.l.b16 %v1516
        %v1633 = vunpack.c.h.b16 %v1516
        %v1634 = vunpack.c.l.b16 %v1517
        %v1635 = vunpack.c.h.b16 %v1517
        %v1636 = vpack.c.b16 %v1576, %v1572
        %v1637 = vpack.c.b16 %v1577, %v1573
        %v1638 = vpack.c.b16 %v1578, %v1574
        %v1639 = vpack.c.b16 %v1579, %v1575
        %v1640 = vpack.c.b16 %v1584, %v1580
        %v1641 = vpack.c.b16 %v1585, %v1581
        %v1642 = vpack.c.b16 %v1586, %v1582
        %v1643 = vpack.c.b16 %v1587, %v1583
        %v1644 = vpack.c.b16 %v1592, %v1588
        %v1645 = vpack.c.b16 %v1593, %v1589
        %v1646 = vpack.c.b16 %v1594, %v1590
        %v1647 = vpack.c.b16 %v1595, %v1591
        %v1648 = vpack.c.b16 %v1600, %v1596
        %v1649 = vpack.c.b16 %v1601, %v1597
        %v1650 = vpack.c.b16 %v1602, %v1598
        %v1651 = vpack.c.b16 %v1603, %v1599
        %v1652 = vpack.c.b16 %v1608, %v1604
        %v1653 = vpack.c.b16 %v1609, %v1605
        %v1654 = vpack.c.b16 %v1610, %v1606
        %v1655 = vpack.c.b16 %v1611, %v1607
        %v1656 = vpack.c.b16 %v1616, %v1612
        %v1657 = vpack.c.b16 %v1617, %v1613
        %v1658 = vpack.c.b16 %v1618, %v1614
        %v1659 = vpack.c.b16 %v1619, %v1615
        %v1660 = vpack.c.b16 %v1624, %v1620
        %v1661 = vpack.c.b16 %v1625, %v1621
        %v1662 = vpack.c.b16 %v1626, %v1622
        %v1663 = vpack.c.b16 %v1627, %v1623
        %v1664 = vpack.c.b16 %v1632, %v1628
        %v1665 = vpack.c.b16 %v1633, %v1629
        %v1666 = vpack.c.b16 %v1634, %v1630
        %v1667 = vpack.c.b16 %v1635, %v1631
        %1700 = vmatprep.subr.bf16.mxu0 %v1637
        %1701 = vmatpush1.bf16.msra.mxu0 %v1636
        %1702 = vmatprep.subr.bf16.mxu0 %v1641
        %1703 = vmatpush1.bf16.msra.mxu0 %v1640
        %1704 = vmatprep.subr.bf16.mxu0 %v1645
        %1705 = vmatpush1.bf16.msra.mxu0 %v1644
        %1706 = vmatprep.subr.bf16.mxu0 %v1649
        %1707 = vmatpush1.bf16.msra.mxu0 %v1648
        %1708 = vmatprep.subr.bf16.mxu0 %v1653
        %1709 = vmatpush1.bf16.msra.mxu0 %v1652
        %1710 = vmatprep.subr.bf16.mxu0 %v1657
        %1711 = vmatpush1.bf16.msra.mxu0 %v1656
        %1712 = vmatprep.subr.bf16.mxu0 %v1661
        %1713 = vmatpush1.bf16.msra.mxu0 %v1660
        %1714 = vmatprep.subr.bf16.mxu0 %v1665
        %1715 = vmatpush1.bf16.msra.mxu0 %v1664
        %1716 = vmatprep.subr.bf16.mxu0 0
        %1717 = vmatpush1.bf16.msra.mxu0 0
        %1718 = vmatprep.subr.bf16.mxu0 0
        %1719 = vmatpush1.bf16.msra.mxu0 0
        %1720 = vmatprep.subr.bf16.mxu0 0
        %1721 = vmatpush1.bf16.msra.mxu0 0
        %1722 = vmatprep.subr.bf16.mxu0 0
        %1723 = vmatpush1.bf16.msra.mxu0 0
        %1724 = vmatprep.subr.bf16.mxu0 0
        %1725 = vmatpush1.bf16.msra.mxu0 0
        %1726 = vmatprep.subr.bf16.mxu0 0
        %1727 = vmatpush1.bf16.msra.mxu0 0
        %1728 = vmatprep.subr.bf16.mxu0 0
        %1729 = vmatpush1.bf16.msra.mxu0 0
        %1730 = vmatprep.subr.bf16.mxu0 0
        %1731 = vmatpush1.bf16.msra.mxu0 0
        %1732 = vmatprep.mubr.bf16.mxu0 0
        %1733 = vmatmul.mubr.bf16.gmra.mrb[0].mxu0 %v1485
        %v1734 = vpop.f32.mrb[0].mxu0
        %v1735 = vadd.f32 %v1523, %v1734
        %v1736 = vpop.f32.mrb[0].mxu0
        %v1737 = vadd.f32 %v1527, %v1736
        %v1738 = vpop.f32.mrb[0].mxu0
        %v1739 = vpop.f32.mrb[0].mxu0
        %1740 = vdwg.mxu0
        %1741 = vmatprep.subr.bf16.mxu0 %v1639
        %1742 = vmatpush1.bf16.msra.mxu0 %v1638
        %1743 = vmatprep.subr.bf16.mxu0 %v1643
        %1744 = vmatpush1.bf16.msra.mxu0 %v1642
        %1745 = vmatprep.subr.bf16.mxu0 %v1647
        %1746 = vmatpush1.bf16.msra.mxu0 %v1646
        %1747 = vmatprep.subr.bf16.mxu0 %v1651
        %1748 = vmatpush1.bf16.msra.mxu0 %v1650
        %1749 = vmatprep.subr.bf16.mxu0 %v1655
        %1750 = vmatpush1.bf16.msra.mxu0 %v1654
        %1751 = vmatprep.subr.bf16.mxu0 %v1659
        %1752 = vmatpush1.bf16.msra.mxu0 %v1658
        %1753 = vmatprep.subr.bf16.mxu0 %v1663
        %1754 = vmatpush1.bf16.msra.mxu0 %v1662
        %1755 = vmatprep.subr.bf16.mxu0 %v1667
        %1756 = vmatpush1.bf16.msra.mxu0 %v1666
        %1757 = vmatprep.subr.bf16.mxu0 0
        %1758 = vmatpush1.bf16.msra.mxu0 0
        %1759 = vmatprep.subr.bf16.mxu0 0
        %1760 = vmatpush1.bf16.msra.mxu0 0
        %1761 = vmatprep.subr.bf16.mxu0 0
        %1762 = vmatpush1.bf16.msra.mxu0 0
        %1763 = vmatprep.subr.bf16.mxu0 0
        %1764 = vmatpush1.bf16.msra.mxu0 0
        %1765 = vmatprep.subr.bf16.mxu0 0
        %1766 = vmatpush1.bf16.msra.mxu0 0
        %1767 = vmatprep.subr.bf16.mxu0 0
        %1768 = vmatpush1.bf16.msra.mxu0 0
        %1769 = vmatprep.subr.bf16.mxu0 0
        %1770 = vmatpush1.bf16.msra.mxu0 0
        %1771 = vmatprep.subr.bf16.mxu0 0
        %1772 = vmatpush1.bf16.msra.mxu0 0
        %1773 = vmatprep.mubr.bf16.mxu0 0
        %1774 = vmatmul.mubr.bf16.gmra.mrb[0].mxu0 %v1485
        %v1775 = vpop.f32.mrb[0].mxu0
        %v1776 = vadd.f32 %v1531, %v1775
        %v1777 = vpop.f32.mrb[0].mxu0
        %v1778 = vadd.f32 %v1535, %v1777
        %v1779 = vpop.f32.mrb[0].mxu0
        %v1780 = vpop.f32.mrb[0].mxu0
        %1781 = vdwg.mxu0
        %v1782 = vmax.f32 %v1735, 0.0
        %v1783 = vmax.f32 %v1737, 0.0
        %v1784 = vmax.f32 %v1776, 0.0
        %v1785 = vmax.f32 %v1778, 0.0
        %v1786 = vpack.c.bf16 %v1782, %v1782
        %v1787 = vpack.c.bf16 %v1783, %v1783
        %v1788 = vpack.c.bf16 %v1784, %v1784
        %v1789 = vpack.c.bf16 %v1785, %v1785
        %v1790 = vld [vmem:[%s7] sm:$0xf]
        %v1791 = vld [vmem:[%s7 + $0x4] sm:$0xf]
        %v1792 = vld [vmem:[%s7 + $0x8] sm:$0xf]
        %v1793 = vld [vmem:[%s7 + $0xc] sm:$0xf]
        %v1794 = vld [vmem:[%s7 + $0x10] sm:$0xf]
        %v1795 = vld [vmem:[%s7 + $0x14] sm:$0xf]
        %v1796 = vld [vmem:[%s7 + $0x18] sm:$0xf]
        %v1797 = vld [vmem:[%s7 + $0x1c] sm:$0xf]
        %v1798 = vld [vmem:[%s7 + $0x20] sm:$0xf]
        %v1799 = vld [vmem:[%s7 + $0x24] sm:$0xf]
        %v1800 = vld [vmem:[%s7 + $0x28] sm:$0xf]
        %v1801 = vld [vmem:[%s7 + $0x2c] sm:$0xf]
        %v1802 = vld [vmem:[%s7 + $0x30] sm:$0xf]
        %v1803 = vld [vmem:[%s7 + $0x34] sm:$0xf]
        %v1804 = vld [vmem:[%s7 + $0x38] sm:$0xf]
        %v1805 = vld [vmem:[%s7 + $0x3c] sm:$0xf]
        %v1806 = vld [vmem:[%s7 + $0x40] sm:$0xf]
        %v1807 = vld [vmem:[%s7 + $0x44] sm:$0xf]
        %v1808 = vld [vmem:[%s7 + $0x48] sm:$0xf]
        %v1809 = vld [vmem:[%s7 + $0x4c] sm:$0xf]
        %v1810 = vld [vmem:[%s7 + $0x50] sm:$0xf]
        %v1811 = vld [vmem:[%s7 + $0x54] sm:$0xf]
        %v1812 = vld [vmem:[%s7 + $0x58] sm:$0xf]
        %v1813 = vld [vmem:[%s7 + $0x5c] sm:$0xf]
        %v1814 = vld [vmem:[%s7 + $0x60] sm:$0xf]
        %v1815 = vld [vmem:[%s7 + $0x64] sm:$0xf]
        %v1816 = vld [vmem:[%s7 + $0x68] sm:$0xf]
        %v1817 = vld [vmem:[%s7 + $0x6c] sm:$0xf]
        %v1818 = vld [vmem:[%s7 + $0x70] sm:$0xf]
        %v1819 = vld [vmem:[%s7 + $0x74] sm:$0xf]
        %v1820 = vld [vmem:[%s7 + $0x78] sm:$0xf]
        %v1821 = vld [vmem:[%s7 + $0x7c] sm:$0xf]
        %v1822 = vld [vmem:[%s7 + $0x80] sm:$0xf]
        %v1823 = vld [vmem:[%s7 + $0x84] sm:$0xf]
        %v1824 = vld [vmem:[%s7 + $0x88] sm:$0xf]
        %v1825 = vld [vmem:[%s7 + $0x8c] sm:$0xf]
        %v1826 = vld [vmem:[%s7 + $0x90] sm:$0xf]
        %v1827 = vld [vmem:[%s7 + $0x94] sm:$0xf]
        %v1828 = vld [vmem:[%s7 + $0x98] sm:$0xf]
        %v1829 = vld [vmem:[%s7 + $0x9c] sm:$0xf]
        %v1830 = vld [vmem:[%s7 + $0xa0] sm:$0xf]
        %v1831 = vld [vmem:[%s7 + $0xa4] sm:$0xf]
        %v1832 = vld [vmem:[%s7 + $0xa8] sm:$0xf]
        %v1833 = vld [vmem:[%s7 + $0xac] sm:$0xf]
        %v1834 = vld [vmem:[%s7 + $0xb0] sm:$0xf]
        %v1835 = vld [vmem:[%s7 + $0xb4] sm:$0xf]
        %v1836 = vld [vmem:[%s7 + $0xb8] sm:$0xf]
        %v1837 = vld [vmem:[%s7 + $0xbc] sm:$0xf]
        %v1838 = vld [vmem:[%s7 + $0xc0] sm:$0xf]
        %v1839 = vld [vmem:[%s7 + $0xc4] sm:$0xf]
        %v1840 = vld [vmem:[%s7 + $0xc8] sm:$0xf]
        %v1841 = vld [vmem:[%s7 + $0xcc] sm:$0xf]
        %v1842 = vld [vmem:[%s7 + $0xd0] sm:$0xf]
        %v1843 = vld [vmem:[%s7 + $0xd4] sm:$0xf]
        %v1844 = vld [vmem:[%s7 + $0xd8] sm:$0xf]
        %v1845 = vld [vmem:[%s7 + $0xdc] sm:$0xf]
        %v1846 = vld [vmem:[%s7 + $0xe0] sm:$0xf]
        %v1847 = vld [vmem:[%s7 + $0xe4] sm:$0xf]
        %v1848 = vld [vmem:[%s7 + $0xe8] sm:$0xf]
        %v1849 = vld [vmem:[%s7 + $0xec] sm:$0xf]
        %v1850 = vld [vmem:[%s7 + $0xf0] sm:$0xf]
        %v1851 = vld [vmem:[%s7 + $0xf4] sm:$0xf]
        %v1852 = vld [vmem:[%s7 + $0xf8] sm:$0xf]
        %v1853 = vld [vmem:[%s7 + $0xfc] sm:$0xf]
        %v1854 = vld [vmem:[%s8] sm:$0x1]
        %v1856 = vlaneseq
        %v1857 = vshrl.u32 %v1856, 7
        %v1858 = vsub.s32 0, %v1857
        %v1859 = vrot.slane %v1854, %v1858
        %v1925 = vunpack.c.l.b16 %v1790
        %v1926 = vunpack.c.l.b16 %v1791
        %v1927 = vunpack.c.l.b16 %v1792
        %v1928 = vunpack.c.l.b16 %v1793
        %v1929 = vunpack.c.l.b16 %v1794
        %v1930 = vunpack.c.l.b16 %v1795
        %v1931 = vunpack.c.l.b16 %v1796
        %v1932 = vunpack.c.l.b16 %v1797
        %v1933 = vunpack.c.l.b16 %v1798
        %v1934 = vunpack.c.l.b16 %v1799
        %v1935 = vunpack.c.l.b16 %v1800
        %v1936 = vunpack.c.l.b16 %v1801
        %v1937 = vunpack.c.l.b16 %v1802
        %v1938 = vunpack.c.l.b16 %v1803
        %v1939 = vunpack.c.l.b16 %v1804
        %v1940 = vunpack.c.l.b16 %v1805
        %v1941 = vunpack.c.l.b16 %v1806
        %v1942 = vunpack.c.l.b16 %v1807
        %v1943 = vunpack.c.l.b16 %v1808
        %v1944 = vunpack.c.l.b16 %v1809
        %v1945 = vunpack.c.l.b16 %v1810
        %v1946 = vunpack.c.l.b16 %v1811
        %v1947 = vunpack.c.l.b16 %v1812
        %v1948 = vunpack.c.l.b16 %v1813
        %v1949 = vunpack.c.l.b16 %v1814
        %v1950 = vunpack.c.l.b16 %v1815
        %v1951 = vunpack.c.l.b16 %v1816
        %v1952 = vunpack.c.l.b16 %v1817
        %v1953 = vunpack.c.l.b16 %v1818
        %v1954 = vunpack.c.l.b16 %v1819
        %v1955 = vunpack.c.l.b16 %v1820
        %v1956 = vunpack.c.l.b16 %v1821
        %v1957 = vunpack.c.l.b16 %v1822
        %v1958 = vunpack.c.l.b16 %v1823
        %v1959 = vunpack.c.l.b16 %v1824
        %v1960 = vunpack.c.l.b16 %v1825
        %v1961 = vunpack.c.l.b16 %v1826
        %v1962 = vunpack.c.l.b16 %v1827
        %v1963 = vunpack.c.l.b16 %v1828
        %v1964 = vunpack.c.l.b16 %v1829
        %v1965 = vunpack.c.l.b16 %v1830
        %v1966 = vunpack.c.l.b16 %v1831
        %v1967 = vunpack.c.l.b16 %v1832
        %v1968 = vunpack.c.l.b16 %v1833
        %v1969 = vunpack.c.l.b16 %v1834
        %v1970 = vunpack.c.l.b16 %v1835
        %v1971 = vunpack.c.l.b16 %v1836
        %v1972 = vunpack.c.l.b16 %v1837
        %v1973 = vunpack.c.l.b16 %v1838
        %v1974 = vunpack.c.l.b16 %v1839
        %v1975 = vunpack.c.l.b16 %v1840
        %v1976 = vunpack.c.l.b16 %v1841
        %v1977 = vunpack.c.l.b16 %v1842
        %v1978 = vunpack.c.l.b16 %v1843
        %v1979 = vunpack.c.l.b16 %v1844
        %v1980 = vunpack.c.l.b16 %v1845
        %v1981 = vunpack.c.l.b16 %v1846
        %v1982 = vunpack.c.l.b16 %v1847
        %v1983 = vunpack.c.l.b16 %v1848
        %v1984 = vunpack.c.l.b16 %v1849
        %v1985 = vunpack.c.l.b16 %v1850
        %v1986 = vunpack.c.l.b16 %v1851
        %v1987 = vunpack.c.l.b16 %v1852
        %v1988 = vunpack.c.l.b16 %v1853
        %v1989 = vpack.c.b16 %v1926, %v1925
        %v1990 = vpack.c.b16 %v1928, %v1927
        %v1991 = vpack.c.b16 %v1930, %v1929
        %v1992 = vpack.c.b16 %v1932, %v1931
        %v1993 = vpack.c.b16 %v1934, %v1933
        %v1994 = vpack.c.b16 %v1936, %v1935
        %v1995 = vpack.c.b16 %v1938, %v1937
        %v1996 = vpack.c.b16 %v1940, %v1939
        %v1997 = vpack.c.b16 %v1942, %v1941
        %v1998 = vpack.c.b16 %v1944, %v1943
        %v1999 = vpack.c.b16 %v1946, %v1945
        %v2000 = vpack.c.b16 %v1948, %v1947
        %v2001 = vpack.c.b16 %v1950, %v1949
        %v2002 = vpack.c.b16 %v1952, %v1951
        %v2003 = vpack.c.b16 %v1954, %v1953
        %v2004 = vpack.c.b16 %v1956, %v1955
        %v2005 = vpack.c.b16 %v1958, %v1957
        %v2006 = vpack.c.b16 %v1960, %v1959
        %v2007 = vpack.c.b16 %v1962, %v1961
        %v2008 = vpack.c.b16 %v1964, %v1963
        %v2009 = vpack.c.b16 %v1966, %v1965
        %v2010 = vpack.c.b16 %v1968, %v1967
        %v2011 = vpack.c.b16 %v1970, %v1969
        %v2012 = vpack.c.b16 %v1972, %v1971
        %v2013 = vpack.c.b16 %v1974, %v1973
        %v2014 = vpack.c.b16 %v1976, %v1975
        %v2015 = vpack.c.b16 %v1978, %v1977
        %v2016 = vpack.c.b16 %v1980, %v1979
        %v2017 = vpack.c.b16 %v1982, %v1981
        %v2018 = vpack.c.b16 %v1984, %v1983
        %v2019 = vpack.c.b16 %v1986, %v1985
        %v2020 = vpack.c.b16 %v1988, %v1987
        %2053 = vmatprep.subr.bf16.mxu0 0
        %2054 = vmatpush1.bf16.msra.mxu0 %v1989
        %2055 = vmatprep.subr.bf16.mxu0 0
        %2056 = vmatpush1.bf16.msra.mxu0 %v1990
        %2057 = vmatprep.subr.bf16.mxu0 0
        %2058 = vmatpush1.bf16.msra.mxu0 %v1991
        %2059 = vmatprep.subr.bf16.mxu0 0
        %2060 = vmatpush1.bf16.msra.mxu0 %v1992
        %2061 = vmatprep.subr.bf16.mxu0 0
        %2062 = vmatpush1.bf16.msra.mxu0 %v1993
        %2063 = vmatprep.subr.bf16.mxu0 0
        %2064 = vmatpush1.bf16.msra.mxu0 %v1994
        %2065 = vmatprep.subr.bf16.mxu0 0
        %2066 = vmatpush1.bf16.msra.mxu0 %v1995
        %2067 = vmatprep.subr.bf16.mxu0 0
        %2068 = vmatpush1.bf16.msra.mxu0 %v1996
        %2069 = vmatprep.subr.bf16.mxu0 0
        %2070 = vmatpush1.bf16.msra.mxu0 %v1997
        %2071 = vmatprep.subr.bf16.mxu0 0
        %2072 = vmatpush1.bf16.msra.mxu0 %v1998
        %2073 = vmatprep.subr.bf16.mxu0 0
        %2074 = vmatpush1.bf16.msra.mxu0 %v1999
        %2075 = vmatprep.subr.bf16.mxu0 0
        %2076 = vmatpush1.bf16.msra.mxu0 %v2000
        %2077 = vmatprep.subr.bf16.mxu0 0
        %2078 = vmatpush1.bf16.msra.mxu0 %v2001
        %2079 = vmatprep.subr.bf16.mxu0 0
        %2080 = vmatpush1.bf16.msra.mxu0 %v2002
        %2081 = vmatprep.subr.bf16.mxu0 0
        %2082 = vmatpush1.bf16.msra.mxu0 %v2003
        %2083 = vmatprep.subr.bf16.mxu0 0
        %2084 = vmatpush1.bf16.msra.mxu0 %v2004
        %2085 = vmatprep.mubr.bf16.mxu0 %v1787
        %2086 = vmatmul.mubr.bf16.gmra.mrb[0].mxu0 %v1786
        %v2087 = vpop.f32.mrb[0].mxu0
        %v2088 = vadd.f32 %v1859, %v2087
        %v2089 = vpop.f32.mrb[0].mxu0
        %v2090 = vpop.f32.mrb[0].mxu0
        %v2091 = vpop.f32.mrb[0].mxu0
        %2092 = vdwg.mxu0
        %2093 = vmatprep.subr.bf16.mxu0 0
        %2094 = vmatpush1.bf16.msra.mxu0 %v2005
        %2095 = vmatprep.subr.bf16.mxu0 0
        %2096 = vmatpush1.bf16.msra.mxu0 %v2006
        %2097 = vmatprep.subr.bf16.mxu0 0
        %2098 = vmatpush1.bf16.msra.mxu0 %v2007
        %2099 = vmatprep.subr.bf16.mxu0 0
        %2100 = vmatpush1.bf16.msra.mxu0 %v2008
        %2101 = vmatprep.subr.bf16.mxu0 0
        %2102 = vmatpush1.bf16.msra.mxu0 %v2009
        %2103 = vmatprep.subr.bf16.mxu0 0
        %2104 = vmatpush1.bf16.msra.mxu0 %v2010
        %2105 = vmatprep.subr.bf16.mxu0 0
        %2106 = vmatpush1.bf16.msra.mxu0 %v2011
        %2107 = vmatprep.subr.bf16.mxu0 0
        %2108 = vmatpush1.bf16.msra.mxu0 %v2012
        %2109 = vmatprep.subr.bf16.mxu0 0
        %2110 = vmatpush1.bf16.msra.mxu0 %v2013
        %2111 = vmatprep.subr.bf16.mxu0 0
        %2112 = vmatpush1.bf16.msra.mxu0 %v2014
        %2113 = vmatprep.subr.bf16.mxu0 0
        %2114 = vmatpush1.bf16.msra.mxu0 %v2015
        %2115 = vmatprep.subr.bf16.mxu0 0
        %2116 = vmatpush1.bf16.msra.mxu0 %v2016
        %2117 = vmatprep.subr.bf16.mxu0 0
        %2118 = vmatpush1.bf16.msra.mxu0 %v2017
        %2119 = vmatprep.subr.bf16.mxu0 0
        %2120 = vmatpush1.bf16.msra.mxu0 %v2018
        %2121 = vmatprep.subr.bf16.mxu0 0
        %2122 = vmatpush1.bf16.msra.mxu0 %v2019
        %2123 = vmatprep.subr.bf16.mxu0 0
        %2124 = vmatpush1.bf16.msra.mxu0 %v2020
        %2125 = vmatprep.mubr.bf16.mxu0 %v1789
        %2126 = vmatmul.mubr.bf16.gmra.mrb[0].mxu0 %v1788
        %v2127 = vpop.f32.mrb[0].mxu0
        %v2128 = vadd.f32 %v2088, %v2127
        %v2129 = vpop.f32.mrb[0].mxu0
        %v2130 = vpop.f32.mrb[0].mxu0
        %v2131 = vpop.f32.mrb[0].mxu0
        %2132 = vdwg.mxu0
        %v2133 = vadd.f32 %v1484, %v2128
        %v2134 = vpack.c.bf16 %v2133, %v2133
        %s2135 = scalar_lea.vmem %s3, 192
        %v2136 = vld [vmem:[%s2135] sm:$0xff]
        %v2137 = vld [vmem:[%s2135 + $0x8] sm:$0xf]
        %v2138 = vld [vmem:[%s2135 + $0xc] sm:$0xff]
        %v2139 = vld [vmem:[%s2135 + $0x14] sm:$0xf]
        %v2140 = vld [vmem:[%s2135 + $0x18] sm:$0xff]
        %v2141 = vld [vmem:[%s2135 + $0x20] sm:$0xf]
        %v2142 = vld [vmem:[%s2135 + $0x24] sm:$0xff]
        %v2143 = vld [vmem:[%s2135 + $0x2c] sm:$0xf]
        %v2144 = vld [vmem:[%s2135 + $0x30] sm:$0xff]
        %v2145 = vld [vmem:[%s2135 + $0x38] sm:$0xf]
        %v2146 = vld [vmem:[%s2135 + $0x3c] sm:$0xff]
        %v2147 = vld [vmem:[%s2135 + $0x44] sm:$0xf]
        %v2148 = vld [vmem:[%s2135 + $0x48] sm:$0xff]
        %v2149 = vld [vmem:[%s2135 + $0x50] sm:$0xf]
        %v2150 = vld [vmem:[%s2135 + $0x54] sm:$0xff]
        %v2151 = vld [vmem:[%s2135 + $0x5c] sm:$0xf]
        %v2152 = vld [vmem:[%s2135 + $0x60] sm:$0xff]
        %v2153 = vld [vmem:[%s2135 + $0x68] sm:$0xf]
        %v2154 = vld [vmem:[%s2135 + $0x6c] sm:$0xff]
        %v2155 = vld [vmem:[%s2135 + $0x74] sm:$0xf]
        %v2156 = vld [vmem:[%s2135 + $0x78] sm:$0xff]
        %v2157 = vld [vmem:[%s2135 + $0x80] sm:$0xf]
        %v2158 = vld [vmem:[%s2135 + $0x84] sm:$0xff]
        %v2159 = vld [vmem:[%s2135 + $0x8c] sm:$0xf]
        %v2160 = vld [vmem:[%s2135 + $0x90] sm:$0xff]
        %v2161 = vld [vmem:[%s2135 + $0x98] sm:$0xf]
        %v2162 = vld [vmem:[%s2135 + $0x9c] sm:$0xff]
        %v2163 = vld [vmem:[%s2135 + $0xa4] sm:$0xf]
        %v2164 = vld [vmem:[%s2135 + $0xa8] sm:$0xff]
        %v2165 = vld [vmem:[%s2135 + $0xb0] sm:$0xf]
        %v2166 = vld [vmem:[%s2135 + $0xb4] sm:$0xff]
        %v2167 = vld [vmem:[%s2135 + $0xbc] sm:$0xf]
        %v2200 = vunpack.c.l.b16 %v2136
        %v2201 = vunpack.c.h.b16 %v2136
        %v2202 = vunpack.c.l.b16 %v2137
        %v2203 = vunpack.c.l.b16 %v2138
        %v2204 = vunpack.c.h.b16 %v2138
        %v2205 = vunpack.c.l.b16 %v2139
        %v2206 = vunpack.c.l.b16 %v2140
        %v2207 = vunpack.c.h.b16 %v2140
        %v2208 = vunpack.c.l.b16 %v2141
        %v2209 = vunpack.c.l.b16 %v2142
        %v2210 = vunpack.c.h.b16 %v2142
        %v2211 = vunpack.c.l.b16 %v2143
        %v2212 = vunpack.c.l.b16 %v2144
        %v2213 = vunpack.c.h.b16 %v2144
        %v2214 = vunpack.c.l.b16 %v2145
        %v2215 = vunpack.c.l.b16 %v2146
        %v2216 = vunpack.c.h.b16 %v2146
        %v2217 = vunpack.c.l.b16 %v2147
        %v2218 = vunpack.c.l.b16 %v2148
        %v2219 = vunpack.c.h.b16 %v2148
        %v2220 = vunpack.c.l.b16 %v2149
        %v2221 = vunpack.c.l.b16 %v2150
        %v2222 = vunpack.c.h.b16 %v2150
        %v2223 = vunpack.c.l.b16 %v2151
        %v2224 = vunpack.c.l.b16 %v2152
        %v2225 = vunpack.c.h.b16 %v2152
        %v2226 = vunpack.c.l.b16 %v2153
        %v2227 = vunpack.c.l.b16 %v2154
        %v2228 = vunpack.c.h.b16 %v2154
        %v2229 = vunpack.c.l.b16 %v2155
        %v2230 = vunpack.c.l.b16 %v2156
        %v2231 = vunpack.c.h.b16 %v2156
        %v2232 = vunpack.c.l.b16 %v2157
        %v2233 = vunpack.c.l.b16 %v2158
        %v2234 = vunpack.c.h.b16 %v2158
        %v2235 = vunpack.c.l.b16 %v2159
        %v2236 = vunpack.c.l.b16 %v2160
        %v2237 = vunpack.c.h.b16 %v2160
        %v2238 = vunpack.c.l.b16 %v2161
        %v2239 = vunpack.c.l.b16 %v2162
        %v2240 = vunpack.c.h.b16 %v2162
        %v2241 = vunpack.c.l.b16 %v2163
        %v2242 = vunpack.c.l.b16 %v2164
        %v2243 = vunpack.c.h.b16 %v2164
        %v2244 = vunpack.c.l.b16 %v2165
        %v2245 = vunpack.c.l.b16 %v2166
        %v2246 = vunpack.c.h.b16 %v2166
        %v2247 = vunpack.c.l.b16 %v2167
        %v2248 = vpack.c.b16 %v2203, %v2200
        %v2249 = vpack.c.b16 %v2204, %v2201
        %v2250 = vpack.c.b16 %v2205, %v2202
        %v2251 = vpack.c.b16 %v2209, %v2206
        %v2252 = vpack.c.b16 %v2210, %v2207
        %v2253 = vpack.c.b16 %v2211, %v2208
        %v2254 = vpack.c.b16 %v2215, %v2212
        %v2255 = vpack.c.b16 %v2216, %v2213
        %v2256 = vpack.c.b16 %v2217, %v2214
        %v2257 = vpack.c.b16 %v2221, %v2218
        %v2258 = vpack.c.b16 %v2222, %v2219
        %v2259 = vpack.c.b16 %v2223, %v2220
        %v2260 = vpack.c.b16 %v2227, %v2224
        %v2261 = vpack.c.b16 %v2228, %v2225
        %v2262 = vpack.c.b16 %v2229, %v2226
        %v2263 = vpack.c.b16 %v2233, %v2230
        %v2264 = vpack.c.b16 %v2234, %v2231
        %v2265 = vpack.c.b16 %v2235, %v2232
        %v2266 = vpack.c.b16 %v2239, %v2236
        %v2267 = vpack.c.b16 %v2240, %v2237
        %v2268 = vpack.c.b16 %v2241, %v2238
        %v2269 = vpack.c.b16 %v2245, %v2242
        %v2270 = vpack.c.b16 %v2246, %v2243
        %v2271 = vpack.c.b16 %v2247, %v2244
        %2296 = vmatprep.subr.bf16.mxu0 %v2249
        %2297 = vmatpush1.bf16.msra.mxu0 %v2248
        %2298 = vmatprep.subr.bf16.mxu0 %v2252
        %2299 = vmatpush1.bf16.msra.mxu0 %v2251
        %2300 = vmatprep.subr.bf16.mxu0 %v2255
        %2301 = vmatpush1.bf16.msra.mxu0 %v2254
        %2302 = vmatprep.subr.bf16.mxu0 %v2258
        %2303 = vmatpush1.bf16.msra.mxu0 %v2257
        %2304 = vmatprep.subr.bf16.mxu0 %v2261
        %2305 = vmatpush1.bf16.msra.mxu0 %v2260
        %2306 = vmatprep.subr.bf16.mxu0 %v2264
        %2307 = vmatpush1.bf16.msra.mxu0 %v2263
        %2308 = vmatprep.subr.bf16.mxu0 %v2267
        %2309 = vmatpush1.bf16.msra.mxu0 %v2266
        %2310 = vmatprep.subr.bf16.mxu0 %v2270
        %2311 = vmatpush1.bf16.msra.mxu0 %v2269
        %2312 = vmatprep.subr.bf16.mxu0 0
        %2313 = vmatpush1.bf16.msra.mxu0 0
        %2314 = vmatprep.subr.bf16.mxu0 0
        %2315 = vmatpush1.bf16.msra.mxu0 0
        %2316 = vmatprep.subr.bf16.mxu0 0
        %2317 = vmatpush1.bf16.msra.mxu0 0
        %2318 = vmatprep.subr.bf16.mxu0 0
        %2319 = vmatpush1.bf16.msra.mxu0 0
        %2320 = vmatprep.subr.bf16.mxu0 0
        %2321 = vmatpush1.bf16.msra.mxu0 0
        %2322 = vmatprep.subr.bf16.mxu0 0
        %2323 = vmatpush1.bf16.msra.mxu0 0
        %2324 = vmatprep.subr.bf16.mxu0 0
        %2325 = vmatpush1.bf16.msra.mxu0 0
        %2326 = vmatprep.subr.bf16.mxu0 0
        %2327 = vmatpush1.bf16.msra.mxu0 0
        %2328 = vmatprep.mubr.bf16.mxu0 0
        %2329 = vmatmul.mubr.bf16.gmra.mrb[0].mxu0 %v2134
        %v2330 = vpop.f32.mrb[0].mxu0
        %v2331 = vadd.f32 0.0, %v2330
        %v2332 = vpop.f32.mrb[0].mxu0
        %v2333 = vadd.f32 0.0, %v2332
        %v2334 = vpop.f32.mrb[0].mxu0
        %v2335 = vpop.f32.mrb[0].mxu0
        %2336 = vdwg.mxu0
        %2337 = vmatprep.subr.bf16.mxu0 0
        %2338 = vmatpush1.bf16.msra.mxu0 %v2250
        %2339 = vmatprep.subr.bf16.mxu0 0
        %2340 = vmatpush1.bf16.msra.mxu0 %v2253
        %2341 = vmatprep.subr.bf16.mxu0 0
        %2342 = vmatpush1.bf16.msra.mxu0 %v2256
        %2343 = vmatprep.subr.bf16.mxu0 0
        %2344 = vmatpush1.bf16.msra.mxu0 %v2259
        %2345 = vmatprep.subr.bf16.mxu0 0
        %2346 = vmatpush1.bf16.msra.mxu0 %v2262
        %2347 = vmatprep.subr.bf16.mxu0 0
        %2348 = vmatpush1.bf16.msra.mxu0 %v2265
        %2349 = vmatprep.subr.bf16.mxu0 0
        %2350 = vmatpush1.bf16.msra.mxu0 %v2268
        %2351 = vmatprep.subr.bf16.mxu0 0
        %2352 = vmatpush1.bf16.msra.mxu0 %v2271
        %2353 = vmatprep.subr.bf16.mxu0 0
        %2354 = vmatpush1.bf16.msra.mxu0 0
        %2355 = vmatprep.subr.bf16.mxu0 0
        %2356 = vmatpush1.bf16.msra.mxu0 0
        %2357 = vmatprep.subr.bf16.mxu0 0
        %2358 = vmatpush1.bf16.msra.mxu0 0
        %2359 = vmatprep.subr.bf16.mxu0 0
        %2360 = vmatpush1.bf16.msra.mxu0 0
        %2361 = vmatprep.subr.bf16.mxu0 0
        %2362 = vmatpush1.bf16.msra.mxu0 0
        %2363 = vmatprep.subr.bf16.mxu0 0
        %2364 = vmatpush1.bf16.msra.mxu0 0
        %2365 = vmatprep.subr.bf16.mxu0 0
        %2366 = vmatpush1.bf16.msra.mxu0 0
        %2367 = vmatprep.subr.bf16.mxu0 0
        %2368 = vmatpush1.bf16.msra.mxu0 0
        %2369 = vmatprep.mubr.bf16.mxu0 0
        %2370 = vmatmul.mubr.bf16.gmra.mrb[0].mxu0 %v2134
        %v2371 = vpop.f32.mrb[0].mxu0
        %v2372 = vadd.f32 0.0, %v2371
        %v2373 = vpop.f32.mrb[0].mxu0
        %v2374 = vpop.f32.mrb[0].mxu0
        %v2375 = vpop.f32.mrb[0].mxu0
        %2376 = vdwg.mxu0
        %v2378 = vsel %vm693, %v2331, 0
        %v2381 = vsel %vm693, %v2333, 0
        %2383 = vmatprep.subr.mxu0 0.0
        %2384 = vmatpush1.xpose.msra.mxu0 %v2381
        %2385 = vmatprep.subr.mxu0 0.0
        %2386 = vmatpush1.xpose.msra.mxu0 0.0
        %2387 = vmatprep.subr.mxu0 0.0
        %2388 = vmatpush1.xpose.msra.mxu0 0.0
        %2389 = vmatprep.subr.mxu0 0.0
        %2390 = vmatpush1.xpose.msra.mxu0 0.0
        %2391 = vmatprep.subr.mxu0 0.0
        %2392 = vmatpush1.xpose.msra.mxu0 0.0
        %2393 = vmatprep.subr.mxu0 0.0
        %2394 = vmatpush1.xpose.msra.mxu0 0.0
        %2395 = vmatprep.subr.mxu0 0.0
        %2396 = vmatpush1.xpose.msra.mxu0 0.0
        %2397 = vmatprep.subr.mxu0 0.0
        %2398 = vmatpush1.xpose.msra.mxu0 0.0
        %2399 = vmatprep.subr.mxu0 0.0
        %2400 = vmatpush1.xpose.msra.mxu0 0.0
        %2401 = vmatprep.subr.mxu0 0.0
        %2402 = vmatpush1.xpose.msra.mxu0 0.0
        %2403 = vmatprep.subr.mxu0 0.0
        %2404 = vmatpush1.xpose.msra.mxu0 0.0
        %2405 = vmatprep.subr.mxu0 0.0
        %2406 = vmatpush1.xpose.msra.mxu0 0.0
        %2407 = vmatprep.subr.mxu0 0.0
        %2408 = vmatpush1.xpose.msra.mxu0 0.0
        %2409 = vmatprep.subr.mxu0 0.0
        %2410 = vmatpush1.xpose.msra.mxu0 0.0
        %2411 = vmatprep.subr.mxu0 0.0
        %2412 = vmatpush1.xpose.msra.mxu0 0.0
        %2413 = vmatprep.subr.mxu0 0.0
        %2414 = vmatpush1.xpose.msra.mxu0 0.0
        %2415 = vmatprep.subr.mxu0 0.0
        %2416 = vmatpush1.xpose.msra.mxu0 0.0
        %2417 = vmatprep.subr.mxu0 0.0
        %2418 = vmatpush1.xpose.msra.mxu0 0.0
        %2419 = vmatprep.subr.mxu0 0.0
        %2420 = vmatpush1.xpose.msra.mxu0 0.0
        %2421 = vmatprep.subr.mxu0 0.0
        %2422 = vmatpush1.xpose.msra.mxu0 0.0
        %2423 = vmatprep.subr.mxu0 0.0
        %2424 = vmatpush1.xpose.msra.mxu0 0.0
        %2425 = vmatprep.subr.mxu0 0.0
        %2426 = vmatpush1.xpose.msra.mxu0 0.0
        %2427 = vmatprep.subr.mxu0 0.0
        %2428 = vmatpush1.xpose.msra.mxu0 0.0
        %2429 = vmatprep.subr.mxu0 0.0
        %2430 = vmatpush1.xpose.msra.mxu0 0.0
        %2431 = vmatprep.subr.mxu0 0.0
        %2432 = vmatpush1.xpose.msra.mxu0 0.0
        %2433 = vmatprep.subr.mxu0 0.0
        %2434 = vmatpush1.xpose.msra.mxu0 0.0
        %2435 = vmatprep.subr.mxu0 0.0
        %2436 = vmatpush1.xpose.msra.mxu0 0.0
        %2437 = vmatprep.subr.mxu0 0.0
        %2438 = vmatpush1.xpose.msra.mxu0 0.0
        %2439 = vmatprep.subr.mxu0 0.0
        %2440 = vmatpush1.xpose.msra.mxu0 0.0
        %2441 = vmatprep.subr.mxu0 0.0
        %2442 = vmatpush1.xpose.msra.mxu0 0.0
        %2443 = vmatprep.subr.mxu0 0.0
        %2444 = vmatpush1.xpose.msra.mxu0 0.0
        %2445 = vmatprep.subr.mxu0 0.0
        %2446 = vmatpush1.xpose.msra.mxu0 0.0
        %2447 = vmatprep.mubr.f32.mxu0 0.0
        %2448 = vmatmul.mubr.f32.gmra.mrb[0].mxu0 %v2378
        %v2449 = vpop.f32.mrb[0].mxu0
        %v2450 = vadd.f32 0.0, %v2449
        %v2451 = vpop.f32.mrb[0].mxu0
        %2452 = vdwg.mxu0
        %v2453 = vmul.f32 %v2450, 0.17677669
        %v2454 = vadd.f32 %v2453, %v450
        %v2455 = vsel %vm772, %v2454, -inf
        %2456 = vmax.xlane.f32.xlu0 %v2455
        %v2457 = vpop.xlane.xlu0 %2456
        %v2458 = vsub.f32 %v2454, %v2457
        %v2459 = vmul.f32 %v2458, 1.442695
        %v2460 = vpow.pop %v2459
        %v2461 = vsel %vm772, %v2460, 0.0
        %2462 = vadd.xlane.f32.xlu0 %v2461
        %v2463 = vpop.xlane.xlu0 %2462
        %v2464 = vrcp.pop %v2463
        %v2465 = vmul.f32 %v2460, %v2464
        %v2467 = vsel %vm772, %v2465, 0
        %2469 = vmatprep.subr.mxu0 0.0
        %2470 = vmatpush1.msra.mxu0 %v2372
        %2471 = vmatprep.subr.mxu0 0.0
        %2472 = vmatpush1.msra.mxu0 0.0
        %2473 = vmatprep.subr.mxu0 0.0
        %2474 = vmatpush1.msra.mxu0 0.0
        %2475 = vmatprep.subr.mxu0 0.0
        %2476 = vmatpush1.msra.mxu0 0.0
        %2477 = vmatprep.subr.mxu0 0.0
        %2478 = vmatpush1.msra.mxu0 0.0
        %2479 = vmatprep.subr.mxu0 0.0
        %2480 = vmatpush1.msra.mxu0 0.0
        %2481 = vmatprep.subr.mxu0 0.0
        %2482 = vmatpush1.msra.mxu0 0.0
        %2483 = vmatprep.subr.mxu0 0.0
        %2484 = vmatpush1.msra.mxu0 0.0
        %2485 = vmatprep.subr.mxu0 0.0
        %2486 = vmatpush1.msra.mxu0 0.0
        %2487 = vmatprep.subr.mxu0 0.0
        %2488 = vmatpush1.msra.mxu0 0.0
        %2489 = vmatprep.subr.mxu0 0.0
        %2490 = vmatpush1.msra.mxu0 0.0
        %2491 = vmatprep.subr.mxu0 0.0
        %2492 = vmatpush1.msra.mxu0 0.0
        %2493 = vmatprep.subr.mxu0 0.0
        %2494 = vmatpush1.msra.mxu0 0.0
        %2495 = vmatprep.subr.mxu0 0.0
        %2496 = vmatpush1.msra.mxu0 0.0
        %2497 = vmatprep.subr.mxu0 0.0
        %2498 = vmatpush1.msra.mxu0 0.0
        %2499 = vmatprep.subr.mxu0 0.0
        %2500 = vmatpush1.msra.mxu0 0.0
        %2501 = vmatprep.subr.mxu0 0.0
        %2502 = vmatpush1.msra.mxu0 0.0
        %2503 = vmatprep.subr.mxu0 0.0
        %2504 = vmatpush1.msra.mxu0 0.0
        %2505 = vmatprep.subr.mxu0 0.0
        %2506 = vmatpush1.msra.mxu0 0.0
        %2507 = vmatprep.subr.mxu0 0.0
        %2508 = vmatpush1.msra.mxu0 0.0
        %2509 = vmatprep.subr.mxu0 0.0
        %2510 = vmatpush1.msra.mxu0 0.0
        %2511 = vmatprep.subr.mxu0 0.0
        %2512 = vmatpush1.msra.mxu0 0.0
        %2513 = vmatprep.subr.mxu0 0.0
        %2514 = vmatpush1.msra.mxu0 0.0
        %2515 = vmatprep.subr.mxu0 0.0
        %2516 = vmatpush1.msra.mxu0 0.0
        %2517 = vmatprep.subr.mxu0 0.0
        %2518 = vmatpush1.msra.mxu0 0.0
        %2519 = vmatprep.subr.mxu0 0.0
        %2520 = vmatpush1.msra.mxu0 0.0
        %2521 = vmatprep.subr.mxu0 0.0
        %2522 = vmatpush1.msra.mxu0 0.0
        %2523 = vmatprep.subr.mxu0 0.0
        %2524 = vmatpush1.msra.mxu0 0.0
        %2525 = vmatprep.subr.mxu0 0.0
        %2526 = vmatpush1.msra.mxu0 0.0
        %2527 = vmatprep.subr.mxu0 0.0
        %2528 = vmatpush1.msra.mxu0 0.0
        %2529 = vmatprep.subr.mxu0 0.0
        %2530 = vmatpush1.msra.mxu0 0.0
        %2531 = vmatprep.subr.mxu0 0.0
        %2532 = vmatpush1.msra.mxu0 0.0
        %2533 = vmatprep.mubr.f32.mxu0 0.0
        %2534 = vmatmul.mubr.f32.gmra.mrb[0].mxu0 %v2467
        %v2535 = vpop.f32.mrb[0].mxu0
        %v2536 = vadd.f32 0.0, %v2535
        %v2537 = vpop.f32.mrb[0].mxu0
        %2538 = vdwg.mxu0
        %2539 = vst.msk [vmem:[#allocation2] sm:$0xff] %vm693, %v2536
        %2540 = vrot.lane.b32.xlu0 %v2331, 96
        %v2541 = vpop.permute.xlu0 %2540
        %2542 = vrot.lane.b32.xlu0 %v2333, 96
        %v2543 = vpop.permute.xlu0 %2542
        %v2544 = vsel %vm693, %v2541, 0
        %v2546 = vsel %vm693, %v2543, 0
        %2548 = vmatprep.subr.mxu0 0.0
        %2549 = vmatpush1.xpose.msra.mxu0 %v2546
        %2550 = vmatprep.subr.mxu0 0.0
        %2551 = vmatpush1.xpose.msra.mxu0 0.0
        %2552 = vmatprep.subr.mxu0 0.0
        %2553 = vmatpush1.xpose.msra.mxu0 0.0
        %2554 = vmatprep.subr.mxu0 0.0
        %2555 = vmatpush1.xpose.msra.mxu0 0.0
        %2556 = vmatprep.subr.mxu0 0.0
        %2557 = vmatpush1.xpose.msra.mxu0 0.0
        %2558 = vmatprep.subr.mxu0 0.0
        %2559 = vmatpush1.xpose.msra.mxu0 0.0
        %2560 = vmatprep.subr.mxu0 0.0
        %2561 = vmatpush1.xpose.msra.mxu0 0.0
        %2562 = vmatprep.subr.mxu0 0.0
        %2563 = vmatpush1.xpose.msra.mxu0 0.0
        %2564 = vmatprep.subr.mxu0 0.0
        %2565 = vmatpush1.xpose.msra.mxu0 0.0
        %2566 = vmatprep.subr.mxu0 0.0
        %2567 = vmatpush1.xpose.msra.mxu0 0.0
        %2568 = vmatprep.subr.mxu0 0.0
        %2569 = vmatpush1.xpose.msra.mxu0 0.0
        %2570 = vmatprep.subr.mxu0 0.0
        %2571 = vmatpush1.xpose.msra.mxu0 0.0
        %2572 = vmatprep.subr.mxu0 0.0
        %2573 = vmatpush1.xpose.msra.mxu0 0.0
        %2574 = vmatprep.subr.mxu0 0.0
        %2575 = vmatpush1.xpose.msra.mxu0 0.0
        %2576 = vmatprep.subr.mxu0 0.0
        %2577 = vmatpush1.xpose.msra.mxu0 0.0
        %2578 = vmatprep.subr.mxu0 0.0
        %2579 = vmatpush1.xpose.msra.mxu0 0.0
        %2580 = vmatprep.subr.mxu0 0.0
        %2581 = vmatpush1.xpose.msra.mxu0 0.0
        %2582 = vmatprep.subr.mxu0 0.0
        %2583 = vmatpush1.xpose.msra.mxu0 0.0
        %2584 = vmatprep.subr.mxu0 0.0
        %2585 = vmatpush1.xpose.msra.mxu0 0.0
        %2586 = vmatprep.subr.mxu0 0.0
        %2587 = vmatpush1.xpose.msra.mxu0 0.0
        %2588 = vmatprep.subr.mxu0 0.0
        %2589 = vmatpush1.xpose.msra.mxu0 0.0
        %2590 = vmatprep.subr.mxu0 0.0
        %2591 = vmatpush1.xpose.msra.mxu0 0.0
        %2592 = vmatprep.subr.mxu0 0.0
        %2593 = vmatpush1.xpose.msra.mxu0 0.0
        %2594 = vmatprep.subr.mxu0 0.0
        %2595 = vmatpush1.xpose.msra.mxu0 0.0
        %2596 = vmatprep.subr.mxu0 0.0
        %2597 = vmatpush1.xpose.msra.mxu0 0.0
        %2598 = vmatprep.subr.mxu0 0.0
        %2599 = vmatpush1.xpose.msra.mxu0 0.0
        %2600 = vmatprep.subr.mxu0 0.0
        %2601 = vmatpush1.xpose.msra.mxu0 0.0
        %2602 = vmatprep.subr.mxu0 0.0
        %2603 = vmatpush1.xpose.msra.mxu0 0.0
        %2604 = vmatprep.subr.mxu0 0.0
        %2605 = vmatpush1.xpose.msra.mxu0 0.0
        %2606 = vmatprep.subr.mxu0 0.0
        %2607 = vmatpush1.xpose.msra.mxu0 0.0
        %2608 = vmatprep.subr.mxu0 0.0
        %2609 = vmatpush1.xpose.msra.mxu0 0.0
        %2610 = vmatprep.subr.mxu0 0.0
        %2611 = vmatpush1.xpose.msra.mxu0 0.0
        %2612 = vmatprep.mubr.f32.mxu0 0.0
        %2613 = vmatmul.mubr.f32.gmra.mrb[0].mxu0 %v2544
        %v2614 = vpop.f32.mrb[0].mxu0
        %v2615 = vadd.f32 0.0, %v2614
        %v2616 = vpop.f32.mrb[0].mxu0
        %2617 = vdwg.mxu0
        %v2618 = vmul.f32 %v2615, 0.17677669
        %v2619 = vadd.f32 %v2618, %v450
        %v2620 = vsel %vm772, %v2619, -inf
        %2621 = vmax.xlane.f32.xlu0 %v2620
        %v2622 = vpop.xlane.xlu0 %2621
        %v2623 = vsub.f32 %v2619, %v2622
        %v2624 = vmul.f32 %v2623, 1.442695
        %v2625 = vpow.pop %v2624
        %v2626 = vsel %vm772, %v2625, 0.0
        %2627 = vadd.xlane.f32.xlu0 %v2626
        %v2628 = vpop.xlane.xlu0 %2627
        %v2629 = vrcp.pop %v2628
        %v2630 = vmul.f32 %v2625, %v2629
        %2632 = vrot.lane.b32.xlu0 %v2372, 96
        %v2633 = vpop.permute.xlu0 %2632
        %v2636 = vsel %vm772, %v2630, 0
        %2638 = vmatprep.subr.mxu0 0.0
        %2639 = vmatpush1.msra.mxu0 %v2633
        %2640 = vmatprep.subr.mxu0 0.0
        %2641 = vmatpush1.msra.mxu0 0.0
        %2642 = vmatprep.subr.mxu0 0.0
        %2643 = vmatpush1.msra.mxu0 0.0
        %2644 = vmatprep.subr.mxu0 0.0
        %2645 = vmatpush1.msra.mxu0 0.0
        %2646 = vmatprep.subr.mxu0 0.0
        %2647 = vmatpush1.msra.mxu0 0.0
        %2648 = vmatprep.subr.mxu0 0.0
        %2649 = vmatpush1.msra.mxu0 0.0
        %2650 = vmatprep.subr.mxu0 0.0
        %2651 = vmatpush1.msra.mxu0 0.0
        %2652 = vmatprep.subr.mxu0 0.0
        %2653 = vmatpush1.msra.mxu0 0.0
        %2654 = vmatprep.subr.mxu0 0.0
        %2655 = vmatpush1.msra.mxu0 0.0
        %2656 = vmatprep.subr.mxu0 0.0
        %2657 = vmatpush1.msra.mxu0 0.0
        %2658 = vmatprep.subr.mxu0 0.0
        %2659 = vmatpush1.msra.mxu0 0.0
        %2660 = vmatprep.subr.mxu0 0.0
        %2661 = vmatpush1.msra.mxu0 0.0
        %2662 = vmatprep.subr.mxu0 0.0
        %2663 = vmatpush1.msra.mxu0 0.0
        %2664 = vmatprep.subr.mxu0 0.0
        %2665 = vmatpush1.msra.mxu0 0.0
        %2666 = vmatprep.subr.mxu0 0.0
        %2667 = vmatpush1.msra.mxu0 0.0
        %2668 = vmatprep.subr.mxu0 0.0
        %2669 = vmatpush1.msra.mxu0 0.0
        %2670 = vmatprep.subr.mxu0 0.0
        %2671 = vmatpush1.msra.mxu0 0.0
        %2672 = vmatprep.subr.mxu0 0.0
        %2673 = vmatpush1.msra.mxu0 0.0
        %2674 = vmatprep.subr.mxu0 0.0
        %2675 = vmatpush1.msra.mxu0 0.0
        %2676 = vmatprep.subr.mxu0 0.0
        %2677 = vmatpush1.msra.mxu0 0.0
        %2678 = vmatprep.subr.mxu0 0.0
        %2679 = vmatpush1.msra.mxu0 0.0
        %2680 = vmatprep.subr.mxu0 0.0
        %2681 = vmatpush1.msra.mxu0 0.0
        %2682 = vmatprep.subr.mxu0 0.0
        %2683 = vmatpush1.msra.mxu0 0.0
        %2684 = vmatprep.subr.mxu0 0.0
        %2685 = vmatpush1.msra.mxu0 0.0
        %2686 = vmatprep.subr.mxu0 0.0
        %2687 = vmatpush1.msra.mxu0 0.0
        %2688 = vmatprep.subr.mxu0 0.0
        %2689 = vmatpush1.msra.mxu0 0.0
        %2690 = vmatprep.subr.mxu0 0.0
        %2691 = vmatpush1.msra.mxu0 0.0
        %2692 = vmatprep.subr.mxu0 0.0
        %2693 = vmatpush1.msra.mxu0 0.0
        %2694 = vmatprep.subr.mxu0 0.0
        %2695 = vmatpush1.msra.mxu0 0.0
        %2696 = vmatprep.subr.mxu0 0.0
        %2697 = vmatpush1.msra.mxu0 0.0
        %2698 = vmatprep.subr.mxu0 0.0
        %2699 = vmatpush1.msra.mxu0 0.0
        %2700 = vmatprep.subr.mxu0 0.0
        %2701 = vmatpush1.msra.mxu0 0.0
        %2702 = vmatprep.mubr.f32.mxu0 0.0
        %2703 = vmatmul.mubr.f32.gmra.mrb[0].mxu0 %v2636
        %v2704 = vpop.f32.mrb[0].mxu0
        %v2705 = vadd.f32 0.0, %v2704
        %v2706 = vpop.f32.mrb[0].mxu0
        %2707 = vdwg.mxu0
        %2709 = vrot.lane.b32.xlu0 %v2705, 32
        %v2710 = vpop.permute.xlu0 %2709
        %2712 = vst.msk [vmem:[#allocation2] sm:$0xff] %vm1030, %v2710
        %2713 = vrot.lane.b32.xlu0 %v2331, 64
        %v2714 = vpop.permute.xlu0 %2713
        %2715 = vrot.lane.b32.xlu0 %v2333, 64
        %v2716 = vpop.permute.xlu0 %2715
        %v2717 = vsel %vm693, %v2714, 0
        %v2719 = vsel %vm693, %v2716, 0
        %2721 = vmatprep.subr.mxu0 0.0
        %2722 = vmatpush1.xpose.msra.mxu0 %v2719
        %2723 = vmatprep.subr.mxu0 0.0
        %2724 = vmatpush1.xpose.msra.mxu0 0.0
        %2725 = vmatprep.subr.mxu0 0.0
        %2726 = vmatpush1.xpose.msra.mxu0 0.0
        %2727 = vmatprep.subr.mxu0 0.0
        %2728 = vmatpush1.xpose.msra.mxu0 0.0
        %2729 = vmatprep.subr.mxu0 0.0
        %2730 = vmatpush1.xpose.msra.mxu0 0.0
        %2731 = vmatprep.subr.mxu0 0.0
        %2732 = vmatpush1.xpose.msra.mxu0 0.0
        %2733 = vmatprep.subr.mxu0 0.0
        %2734 = vmatpush1.xpose.msra.mxu0 0.0
        %2735 = vmatprep.subr.mxu0 0.0
        %2736 = vmatpush1.xpose.msra.mxu0 0.0
        %2737 = vmatprep.subr.mxu0 0.0
        %2738 = vmatpush1.xpose.msra.mxu0 0.0
        %2739 = vmatprep.subr.mxu0 0.0
        %2740 = vmatpush1.xpose.msra.mxu0 0.0
        %2741 = vmatprep.subr.mxu0 0.0
        %2742 = vmatpush1.xpose.msra.mxu0 0.0
        %2743 = vmatprep.subr.mxu0 0.0
        %2744 = vmatpush1.xpose.msra.mxu0 0.0
        %2745 = vmatprep.subr.mxu0 0.0
        %2746 = vmatpush1.xpose.msra.mxu0 0.0
        %2747 = vmatprep.subr.mxu0 0.0
        %2748 = vmatpush1.xpose.msra.mxu0 0.0
        %2749 = vmatprep.subr.mxu0 0.0
        %2750 = vmatpush1.xpose.msra.mxu0 0.0
        %2751 = vmatprep.subr.mxu0 0.0
        %2752 = vmatpush1.xpose.msra.mxu0 0.0
        %2753 = vmatprep.subr.mxu0 0.0
        %2754 = vmatpush1.xpose.msra.mxu0 0.0
        %2755 = vmatprep.subr.mxu0 0.0
        %2756 = vmatpush1.xpose.msra.mxu0 0.0
        %2757 = vmatprep.subr.mxu0 0.0
        %2758 = vmatpush1.xpose.msra.mxu0 0.0
        %2759 = vmatprep.subr.mxu0 0.0
        %2760 = vmatpush1.xpose.msra.mxu0 0.0
        %2761 = vmatprep.subr.mxu0 0.0
        %2762 = vmatpush1.xpose.msra.mxu0 0.0
        %2763 = vmatprep.subr.mxu0 0.0
        %2764 = vmatpush1.xpose.msra.mxu0 0.0
        %2765 = vmatprep.subr.mxu0 0.0
        %2766 = vmatpush1.xpose.msra.mxu0 0.0
        %2767 = vmatprep.subr.mxu0 0.0
        %2768 = vmatpush1.xpose.msra.mxu0 0.0
        %2769 = vmatprep.subr.mxu0 0.0
        %2770 = vmatpush1.xpose.msra.mxu0 0.0
        %2771 = vmatprep.subr.mxu0 0.0
        %2772 = vmatpush1.xpose.msra.mxu0 0.0
        %2773 = vmatprep.subr.mxu0 0.0
        %2774 = vmatpush1.xpose.msra.mxu0 0.0
        %2775 = vmatprep.subr.mxu0 0.0
        %2776 = vmatpush1.xpose.msra.mxu0 0.0
        %2777 = vmatprep.subr.mxu0 0.0
        %2778 = vmatpush1.xpose.msra.mxu0 0.0
        %2779 = vmatprep.subr.mxu0 0.0
        %2780 = vmatpush1.xpose.msra.mxu0 0.0
        %2781 = vmatprep.subr.mxu0 0.0
        %2782 = vmatpush1.xpose.msra.mxu0 0.0
        %2783 = vmatprep.subr.mxu0 0.0
        %2784 = vmatpush1.xpose.msra.mxu0 0.0
        %2785 = vmatprep.mubr.f32.mxu0 0.0
        %2786 = vmatmul.mubr.f32.gmra.mrb[0].mxu0 %v2717
        %v2787 = vpop.f32.mrb[0].mxu0
        %v2788 = vadd.f32 0.0, %v2787
        %v2789 = vpop.f32.mrb[0].mxu0
        %2790 = vdwg.mxu0
        %v2791 = vmul.f32 %v2788, 0.17677669
        %v2792 = vadd.f32 %v2791, %v450
        %v2793 = vsel %vm772, %v2792, -inf
        %2794 = vmax.xlane.f32.xlu0 %v2793
        %v2795 = vpop.xlane.xlu0 %2794
        %v2796 = vsub.f32 %v2792, %v2795
        %v2797 = vmul.f32 %v2796, 1.442695
        %v2798 = vpow.pop %v2797
        %v2799 = vsel %vm772, %v2798, 0.0
        %2800 = vadd.xlane.f32.xlu0 %v2799
        %v2801 = vpop.xlane.xlu0 %2800
        %v2802 = vrcp.pop %v2801
        %v2803 = vmul.f32 %v2798, %v2802
        %2804 = vrot.lane.b32.xlu0 %v2372, 64
        %v2805 = vpop.permute.xlu0 %2804
        %v2808 = vsel %vm772, %v2803, 0
        %2810 = vmatprep.subr.mxu0 0.0
        %2811 = vmatpush1.msra.mxu0 %v2805
        %2812 = vmatprep.subr.mxu0 0.0
        %2813 = vmatpush1.msra.mxu0 0.0
        %2814 = vmatprep.subr.mxu0 0.0
        %2815 = vmatpush1.msra.mxu0 0.0
        %2816 = vmatprep.subr.mxu0 0.0
        %2817 = vmatpush1.msra.mxu0 0.0
        %2818 = vmatprep.subr.mxu0 0.0
        %2819 = vmatpush1.msra.mxu0 0.0
        %2820 = vmatprep.subr.mxu0 0.0
        %2821 = vmatpush1.msra.mxu0 0.0
        %2822 = vmatprep.subr.mxu0 0.0
        %2823 = vmatpush1.msra.mxu0 0.0
        %2824 = vmatprep.subr.mxu0 0.0
        %2825 = vmatpush1.msra.mxu0 0.0
        %2826 = vmatprep.subr.mxu0 0.0
        %2827 = vmatpush1.msra.mxu0 0.0
        %2828 = vmatprep.subr.mxu0 0.0
        %2829 = vmatpush1.msra.mxu0 0.0
        %2830 = vmatprep.subr.mxu0 0.0
        %2831 = vmatpush1.msra.mxu0 0.0
        %2832 = vmatprep.subr.mxu0 0.0
        %2833 = vmatpush1.msra.mxu0 0.0
        %2834 = vmatprep.subr.mxu0 0.0
        %2835 = vmatpush1.msra.mxu0 0.0
        %2836 = vmatprep.subr.mxu0 0.0
        %2837 = vmatpush1.msra.mxu0 0.0
        %2838 = vmatprep.subr.mxu0 0.0
        %2839 = vmatpush1.msra.mxu0 0.0
        %2840 = vmatprep.subr.mxu0 0.0
        %2841 = vmatpush1.msra.mxu0 0.0
        %2842 = vmatprep.subr.mxu0 0.0
        %2843 = vmatpush1.msra.mxu0 0.0
        %2844 = vmatprep.subr.mxu0 0.0
        %2845 = vmatpush1.msra.mxu0 0.0
        %2846 = vmatprep.subr.mxu0 0.0
        %2847 = vmatpush1.msra.mxu0 0.0
        %2848 = vmatprep.subr.mxu0 0.0
        %2849 = vmatpush1.msra.mxu0 0.0
        %2850 = vmatprep.subr.mxu0 0.0
        %2851 = vmatpush1.msra.mxu0 0.0
        %2852 = vmatprep.subr.mxu0 0.0
        %2853 = vmatpush1.msra.mxu0 0.0
        %2854 = vmatprep.subr.mxu0 0.0
        %2855 = vmatpush1.msra.mxu0 0.0
        %2856 = vmatprep.subr.mxu0 0.0
        %2857 = vmatpush1.msra.mxu0 0.0
        %2858 = vmatprep.subr.mxu0 0.0
        %2859 = vmatpush1.msra.mxu0 0.0
        %2860 = vmatprep.subr.mxu0 0.0
        %2861 = vmatpush1.msra.mxu0 0.0
        %2862 = vmatprep.subr.mxu0 0.0
        %2863 = vmatpush1.msra.mxu0 0.0
        %2864 = vmatprep.subr.mxu0 0.0
        %2865 = vmatpush1.msra.mxu0 0.0
        %2866 = vmatprep.subr.mxu0 0.0
        %2867 = vmatpush1.msra.mxu0 0.0
        %2868 = vmatprep.subr.mxu0 0.0
        %2869 = vmatpush1.msra.mxu0 0.0
        %2870 = vmatprep.subr.mxu0 0.0
        %2871 = vmatpush1.msra.mxu0 0.0
        %2872 = vmatprep.subr.mxu0 0.0
        %2873 = vmatpush1.msra.mxu0 0.0
        %2874 = vmatprep.mubr.f32.mxu0 0.0
        %2875 = vmatmul.mubr.f32.gmra.mrb[0].mxu0 %v2808
        %v2876 = vpop.f32.mrb[0].mxu0
        %v2877 = vadd.f32 0.0, %v2876
        %v2878 = vpop.f32.mrb[0].mxu0
        %2879 = vdwg.mxu0
        %2881 = vrot.lane.b32.xlu0 %v2877, 64
        %v2882 = vpop.permute.xlu0 %2881
        %2884 = vst.msk [vmem:[#allocation2] sm:$0xff] %vm1203, %v2882
        %2885 = vrot.lane.b32.xlu0 %v2331, 32
        %v2886 = vpop.permute.xlu0 %2885
        %2887 = vrot.lane.b32.xlu0 %v2333, 32
        %v2888 = vpop.permute.xlu0 %2887
        %v2889 = vsel %vm693, %v2886, 0
        %v2891 = vsel %vm693, %v2888, 0
        %2893 = vmatprep.subr.mxu0 0.0
        %2894 = vmatpush1.xpose.msra.mxu0 %v2891
        %2895 = vmatprep.subr.mxu0 0.0
        %2896 = vmatpush1.xpose.msra.mxu0 0.0
        %2897 = vmatprep.subr.mxu0 0.0
        %2898 = vmatpush1.xpose.msra.mxu0 0.0
        %2899 = vmatprep.subr.mxu0 0.0
        %2900 = vmatpush1.xpose.msra.mxu0 0.0
        %2901 = vmatprep.subr.mxu0 0.0
        %2902 = vmatpush1.xpose.msra.mxu0 0.0
        %2903 = vmatprep.subr.mxu0 0.0
        %2904 = vmatpush1.xpose.msra.mxu0 0.0
        %2905 = vmatprep.subr.mxu0 0.0
        %2906 = vmatpush1.xpose.msra.mxu0 0.0
        %2907 = vmatprep.subr.mxu0 0.0
        %2908 = vmatpush1.xpose.msra.mxu0 0.0
        %2909 = vmatprep.subr.mxu0 0.0
        %2910 = vmatpush1.xpose.msra.mxu0 0.0
        %2911 = vmatprep.subr.mxu0 0.0
        %2912 = vmatpush1.xpose.msra.mxu0 0.0
        %2913 = vmatprep.subr.mxu0 0.0
        %2914 = vmatpush1.xpose.msra.mxu0 0.0
        %2915 = vmatprep.subr.mxu0 0.0
        %2916 = vmatpush1.xpose.msra.mxu0 0.0
        %2917 = vmatprep.subr.mxu0 0.0
        %2918 = vmatpush1.xpose.msra.mxu0 0.0
        %2919 = vmatprep.subr.mxu0 0.0
        %2920 = vmatpush1.xpose.msra.mxu0 0.0
        %2921 = vmatprep.subr.mxu0 0.0
        %2922 = vmatpush1.xpose.msra.mxu0 0.0
        %2923 = vmatprep.subr.mxu0 0.0
        %2924 = vmatpush1.xpose.msra.mxu0 0.0
        %2925 = vmatprep.subr.mxu0 0.0
        %2926 = vmatpush1.xpose.msra.mxu0 0.0
        %2927 = vmatprep.subr.mxu0 0.0
        %2928 = vmatpush1.xpose.msra.mxu0 0.0
        %2929 = vmatprep.subr.mxu0 0.0
        %2930 = vmatpush1.xpose.msra.mxu0 0.0
        %2931 = vmatprep.subr.mxu0 0.0
        %2932 = vmatpush1.xpose.msra.mxu0 0.0
        %2933 = vmatprep.subr.mxu0 0.0
        %2934 = vmatpush1.xpose.msra.mxu0 0.0
        %2935 = vmatprep.subr.mxu0 0.0
        %2936 = vmatpush1.xpose.msra.mxu0 0.0
        %2937 = vmatprep.subr.mxu0 0.0
        %2938 = vmatpush1.xpose.msra.mxu0 0.0
        %2939 = vmatprep.subr.mxu0 0.0
        %2940 = vmatpush1.xpose.msra.mxu0 0.0
        %2941 = vmatprep.subr.mxu0 0.0
        %2942 = vmatpush1.xpose.msra.mxu0 0.0
        %2943 = vmatprep.subr.mxu0 0.0
        %2944 = vmatpush1.xpose.msra.mxu0 0.0
        %2945 = vmatprep.subr.mxu0 0.0
        %2946 = vmatpush1.xpose.msra.mxu0 0.0
        %2947 = vmatprep.subr.mxu0 0.0
        %2948 = vmatpush1.xpose.msra.mxu0 0.0
        %2949 = vmatprep.subr.mxu0 0.0
        %2950 = vmatpush1.xpose.msra.mxu0 0.0
        %2951 = vmatprep.subr.mxu0 0.0
        %2952 = vmatpush1.xpose.msra.mxu0 0.0
        %2953 = vmatprep.subr.mxu0 0.0
        %2954 = vmatpush1.xpose.msra.mxu0 0.0
        %2955 = vmatprep.subr.mxu0 0.0
        %2956 = vmatpush1.xpose.msra.mxu0 0.0
        %2957 = vmatprep.mubr.f32.mxu0 0.0
        %2958 = vmatmul.mubr.f32.gmra.mrb[0].mxu0 %v2889
        %v2959 = vpop.f32.mrb[0].mxu0
        %v2960 = vadd.f32 0.0, %v2959
        %v2961 = vpop.f32.mrb[0].mxu0
        %2962 = vdwg.mxu0
        %v2963 = vmul.f32 %v2960, 0.17677669
        %v2964 = vadd.f32 %v2963, %v450
        %v2965 = vsel %vm772, %v2964, -inf
        %2966 = vmax.xlane.f32.xlu0 %v2965
        %v2967 = vpop.xlane.xlu0 %2966
        %v2968 = vsub.f32 %v2964, %v2967
        %v2969 = vmul.f32 %v2968, 1.442695
        %v2970 = vpow.pop %v2969
        %v2971 = vsel %vm772, %v2970, 0.0
        %2972 = vadd.xlane.f32.xlu0 %v2971
        %v2973 = vpop.xlane.xlu0 %2972
        %v2974 = vrcp.pop %v2973
        %v2975 = vmul.f32 %v2970, %v2974
        %2976 = vrot.lane.b32.xlu0 %v2372, 32
        %v2977 = vpop.permute.xlu0 %2976
        %v2980 = vsel %vm772, %v2975, 0
        %2982 = vmatprep.subr.mxu0 0.0
        %2983 = vmatpush1.msra.mxu0 %v2977
        %2984 = vmatprep.subr.mxu0 0.0
        %2985 = vmatpush1.msra.mxu0 0.0
        %2986 = vmatprep.subr.mxu0 0.0
        %2987 = vmatpush1.msra.mxu0 0.0
        %2988 = vmatprep.subr.mxu0 0.0
        %2989 = vmatpush1.msra.mxu0 0.0
        %2990 = vmatprep.subr.mxu0 0.0
        %2991 = vmatpush1.msra.mxu0 0.0
        %2992 = vmatprep.subr.mxu0 0.0
        %2993 = vmatpush1.msra.mxu0 0.0
        %2994 = vmatprep.subr.mxu0 0.0
        %2995 = vmatpush1.msra.mxu0 0.0
        %2996 = vmatprep.subr.mxu0 0.0
        %2997 = vmatpush1.msra.mxu0 0.0
        %2998 = vmatprep.subr.mxu0 0.0
        %2999 = vmatpush1.msra.mxu0 0.0
        %3000 = vmatprep.subr.mxu0 0.0
        %3001 = vmatpush1.msra.mxu0 0.0
        %3002 = vmatprep.subr.mxu0 0.0
        %3003 = vmatpush1.msra.mxu0 0.0
        %3004 = vmatprep.subr.mxu0 0.0
        %3005 = vmatpush1.msra.mxu0 0.0
        %3006 = vmatprep.subr.mxu0 0.0
        %3007 = vmatpush1.msra.mxu0 0.0
        %3008 = vmatprep.subr.mxu0 0.0
        %3009 = vmatpush1.msra.mxu0 0.0
        %3010 = vmatprep.subr.mxu0 0.0
        %3011 = vmatpush1.msra.mxu0 0.0
        %3012 = vmatprep.subr.mxu0 0.0
        %3013 = vmatpush1.msra.mxu0 0.0
        %3014 = vmatprep.subr.mxu0 0.0
        %3015 = vmatpush1.msra.mxu0 0.0
        %3016 = vmatprep.subr.mxu0 0.0
        %3017 = vmatpush1.msra.mxu0 0.0
        %3018 = vmatprep.subr.mxu0 0.0
        %3019 = vmatpush1.msra.mxu0 0.0
        %3020 = vmatprep.subr.mxu0 0.0
        %3021 = vmatpush1.msra.mxu0 0.0
        %3022 = vmatprep.subr.mxu0 0.0
        %3023 = vmatpush1.msra.mxu0 0.0
        %3024 = vmatprep.subr.mxu0 0.0
        %3025 = vmatpush1.msra.mxu0 0.0
        %3026 = vmatprep.subr.mxu0 0.0
        %3027 = vmatpush1.msra.mxu0 0.0
        %3028 = vmatprep.subr.mxu0 0.0
        %3029 = vmatpush1.msra.mxu0 0.0
        %3030 = vmatprep.subr.mxu0 0.0
        %3031 = vmatpush1.msra.mxu0 0.0
        %3032 = vmatprep.subr.mxu0 0.0
        %3033 = vmatpush1.msra.mxu0 0.0
        %3034 = vmatprep.subr.mxu0 0.0
        %3035 = vmatpush1.msra.mxu0 0.0
        %3036 = vmatprep.subr.mxu0 0.0
        %3037 = vmatpush1.msra.mxu0 0.0
        %3038 = vmatprep.subr.mxu0 0.0
        %3039 = vmatpush1.msra.mxu0 0.0
        %3040 = vmatprep.subr.mxu0 0.0
        %3041 = vmatpush1.msra.mxu0 0.0
        %3042 = vmatprep.subr.mxu0 0.0
        %3043 = vmatpush1.msra.mxu0 0.0
        %3044 = vmatprep.subr.mxu0 0.0
        %3045 = vmatpush1.msra.mxu0 0.0
        %3046 = vmatprep.mubr.f32.mxu0 0.0
        %3047 = vmatmul.mubr.f32.gmra.mrb[0].mxu0 %v2980
        %v3048 = vpop.f32.mrb[0].mxu0
        %v3049 = vadd.f32 0.0, %v3048
        %v3050 = vpop.f32.mrb[0].mxu0
        %3051 = vdwg.mxu0
        %3053 = vrot.lane.b32.xlu0 %v3049, 96
        %v3054 = vpop.permute.xlu0 %3053
        %3056 = vst.msk [vmem:[#allocation2] sm:$0xff] %vm1376, %v3054
        %v3057 = vld [vmem:[#allocation2] sm:$0xff]
        %v3058 = vpack.c.bf16 %v3057, %v3057
        %s3059 = scalar_lea.vmem %s4, 64
        %v3060 = vld [vmem:[%s3059] sm:$0xf]
        %v3061 = vld [vmem:[%s3059 + $0x4] sm:$0xf]
        %v3062 = vld [vmem:[%s3059 + $0x8] sm:$0xf]
        %v3063 = vld [vmem:[%s3059 + $0xc] sm:$0xf]
        %v3064 = vld [vmem:[%s3059 + $0x10] sm:$0xf]
        %v3065 = vld [vmem:[%s3059 + $0x14] sm:$0xf]
        %v3066 = vld [vmem:[%s3059 + $0x18] sm:$0xf]
        %v3067 = vld [vmem:[%s3059 + $0x1c] sm:$0xf]
        %v3068 = vld [vmem:[%s3059 + $0x20] sm:$0xf]
        %v3069 = vld [vmem:[%s3059 + $0x24] sm:$0xf]
        %v3070 = vld [vmem:[%s3059 + $0x28] sm:$0xf]
        %v3071 = vld [vmem:[%s3059 + $0x2c] sm:$0xf]
        %v3072 = vld [vmem:[%s3059 + $0x30] sm:$0xf]
        %v3073 = vld [vmem:[%s3059 + $0x34] sm:$0xf]
        %v3074 = vld [vmem:[%s3059 + $0x38] sm:$0xf]
        %v3075 = vld [vmem:[%s3059 + $0x3c] sm:$0xf]
        %v3092 = vunpack.c.l.b16 %v3060
        %v3093 = vunpack.c.l.b16 %v3061
        %v3094 = vunpack.c.l.b16 %v3062
        %v3095 = vunpack.c.l.b16 %v3063
        %v3096 = vunpack.c.l.b16 %v3064
        %v3097 = vunpack.c.l.b16 %v3065
        %v3098 = vunpack.c.l.b16 %v3066
        %v3099 = vunpack.c.l.b16 %v3067
        %v3100 = vunpack.c.l.b16 %v3068
        %v3101 = vunpack.c.l.b16 %v3069
        %v3102 = vunpack.c.l.b16 %v3070
        %v3103 = vunpack.c.l.b16 %v3071
        %v3104 = vunpack.c.l.b16 %v3072
        %v3105 = vunpack.c.l.b16 %v3073
        %v3106 = vunpack.c.l.b16 %v3074
        %v3107 = vunpack.c.l.b16 %v3075
        %v3108 = vpack.c.b16 %v3093, %v3092
        %v3109 = vpack.c.b16 %v3095, %v3094
        %v3110 = vpack.c.b16 %v3097, %v3096
        %v3111 = vpack.c.b16 %v3099, %v3098
        %v3112 = vpack.c.b16 %v3101, %v3100
        %v3113 = vpack.c.b16 %v3103, %v3102
        %v3114 = vpack.c.b16 %v3105, %v3104
        %v3115 = vpack.c.b16 %v3107, %v3106
        %3124 = vmatprep.subr.bf16.mxu0 0
        %3125 = vmatpush1.bf16.msra.mxu0 %v3108
        %3126 = vmatprep.subr.bf16.mxu0 0
        %3127 = vmatpush1.bf16.msra.mxu0 %v3109
        %3128 = vmatprep.subr.bf16.mxu0 0
        %3129 = vmatpush1.bf16.msra.mxu0 %v3110
        %3130 = vmatprep.subr.bf16.mxu0 0
        %3131 = vmatpush1.bf16.msra.mxu0 %v3111
        %3132 = vmatprep.subr.bf16.mxu0 0
        %3133 = vmatpush1.bf16.msra.mxu0 %v3112
        %3134 = vmatprep.subr.bf16.mxu0 0
        %3135 = vmatpush1.bf16.msra.mxu0 %v3113
        %3136 = vmatprep.subr.bf16.mxu0 0
        %3137 = vmatpush1.bf16.msra.mxu0 %v3114
        %3138 = vmatprep.subr.bf16.mxu0 0
        %3139 = vmatpush1.bf16.msra.mxu0 %v3115
        %3140 = vmatprep.subr.bf16.mxu0 0
        %3141 = vmatpush1.bf16.msra.mxu0 0
        %3142 = vmatprep.subr.bf16.mxu0 0
        %3143 = vmatpush1.bf16.msra.mxu0 0
        %3144 = vmatprep.subr.bf16.mxu0 0
        %3145 = vmatpush1.bf16.msra.mxu0 0
        %3146 = vmatprep.subr.bf16.mxu0 0
        %3147 = vmatpush1.bf16.msra.mxu0 0
        %3148 = vmatprep.subr.bf16.mxu0 0
        %3149 = vmatpush1.bf16.msra.mxu0 0
        %3150 = vmatprep.subr.bf16.mxu0 0
        %3151 = vmatpush1.bf16.msra.mxu0 0
        %3152 = vmatprep.subr.bf16.mxu0 0
        %3153 = vmatpush1.bf16.msra.mxu0 0
        %3154 = vmatprep.subr.bf16.mxu0 0
        %3155 = vmatpush1.bf16.msra.mxu0 0
        %3156 = vmatprep.mubr.bf16.mxu0 0
        %3157 = vmatmul.mubr.bf16.gmra.mrb[0].mxu0 %v3058
        %v3158 = vpop.f32.mrb[0].mxu0
        %v3159 = vadd.f32 0.0, %v3158
        %v3160 = vpop.f32.mrb[0].mxu0
        %v3161 = vpop.f32.mrb[0].mxu0
        %v3162 = vpop.f32.mrb[0].mxu0
        %3163 = vdwg.mxu0
        %v3164 = vadd.f32 %v2133, %v3159
        %v3165 = vpack.c.bf16 %v3164, %v3164
        %s3166 = scalar_lea.vmem %s5, 256
        %v3167 = vld [vmem:[%s3166] sm:$0xff]
        %v3168 = vld [vmem:[%s3166 + $0x8] sm:$0xff]
        %v3169 = vld [vmem:[%s3166 + $0x10] sm:$0xff]
        %v3170 = vld [vmem:[%s3166 + $0x18] sm:$0xff]
        %v3171 = vld [vmem:[%s3166 + $0x20] sm:$0xff]
        %v3172 = vld [vmem:[%s3166 + $0x28] sm:$0xff]
        %v3173 = vld [vmem:[%s3166 + $0x30] sm:$0xff]
        %v3174 = vld [vmem:[%s3166 + $0x38] sm:$0xff]
        %v3175 = vld [vmem:[%s3166 + $0x40] sm:$0xff]
        %v3176 = vld [vmem:[%s3166 + $0x48] sm:$0xff]
        %v3177 = vld [vmem:[%s3166 + $0x50] sm:$0xff]
        %v3178 = vld [vmem:[%s3166 + $0x58] sm:$0xff]
        %v3179 = vld [vmem:[%s3166 + $0x60] sm:$0xff]
        %v3180 = vld [vmem:[%s3166 + $0x68] sm:$0xff]
        %v3181 = vld [vmem:[%s3166 + $0x70] sm:$0xff]
        %v3182 = vld [vmem:[%s3166 + $0x78] sm:$0xff]
        %v3183 = vld [vmem:[%s3166 + $0x80] sm:$0xff]
        %v3184 = vld [vmem:[%s3166 + $0x88] sm:$0xff]
        %v3185 = vld [vmem:[%s3166 + $0x90] sm:$0xff]
        %v3186 = vld [vmem:[%s3166 + $0x98] sm:$0xff]
        %v3187 = vld [vmem:[%s3166 + $0xa0] sm:$0xff]
        %v3188 = vld [vmem:[%s3166 + $0xa8] sm:$0xff]
        %v3189 = vld [vmem:[%s3166 + $0xb0] sm:$0xff]
        %v3190 = vld [vmem:[%s3166 + $0xb8] sm:$0xff]
        %v3191 = vld [vmem:[%s3166 + $0xc0] sm:$0xff]
        %v3192 = vld [vmem:[%s3166 + $0xc8] sm:$0xff]
        %v3193 = vld [vmem:[%s3166 + $0xd0] sm:$0xff]
        %v3194 = vld [vmem:[%s3166 + $0xd8] sm:$0xff]
        %v3195 = vld [vmem:[%s3166 + $0xe0] sm:$0xff]
        %v3196 = vld [vmem:[%s3166 + $0xe8] sm:$0xff]
        %v3197 = vld [vmem:[%s3166 + $0xf0] sm:$0xff]
        %v3198 = vld [vmem:[%s3166 + $0xf8] sm:$0xff]
        %s3199 = scalar_lea.vmem %s6, 4
        %v3200 = vld [vmem:[%s3199] sm:$0xf]
        %v3202 = vlaneseq
        %v3203 = vshrl.u32 %v3202, 7
        %v3204 = vsub.s32 0, %v3203
        %v3205 = vrot.slane %v3200, %v3204
        %v3206 = vlaneseq
        %v3207 = vshrl.u32 %v3206, 7
        %v3208 = vsub.s32 1, %v3207
        %v3209 = vrot.slane %v3200, %v3208
        %v3210 = vlaneseq
        %v3211 = vshrl.u32 %v3210, 7
        %v3212 = vsub.s32 2, %v3211
        %v3213 = vrot.slane %v3200, %v3212
        %v3214 = vlaneseq
        %v3215 = vshrl.u32 %v3214, 7
        %v3216 = vsub.s32 3, %v3215
        %v3217 = vrot.slane %v3200, %v3216
        %v3254 = vunpack.c.l.b16 %v3167
        %v3255 = vunpack.c.h.b16 %v3167
        %v3256 = vunpack.c.l.b16 %v3168
        %v3257 = vunpack.c.h.b16 %v3168
        %v3258 = vunpack.c.l.b16 %v3169
        %v3259 = vunpack.c.h.b16 %v3169
        %v3260 = vunpack.c.l.b16 %v3170
        %v3261 = vunpack.c.h.b16 %v3170
        %v3262 = vunpack.c.l.b16 %v3171
        %v3263 = vunpack.c.h.b16 %v3171
        %v3264 = vunpack.c.l.b16 %v3172
        %v3265 = vunpack.c.h.b16 %v3172
        %v3266 = vunpack.c.l.b16 %v3173
        %v3267 = vunpack.c.h.b16 %v3173
        %v3268 = vunpack.c.l.b16 %v3174
        %v3269 = vunpack.c.h.b16 %v3174
        %v3270 = vunpack.c.l.b16 %v3175
        %v3271 = vunpack.c.h.b16 %v3175
        %v3272 = vunpack.c.l.b16 %v3176
        %v3273 = vunpack.c.h.b16 %v3176
        %v3274 = vunpack.c.l.b16 %v3177
        %v3275 = vunpack.c.h.b16 %v3177
        %v3276 = vunpack.c.l.b16 %v3178
        %v3277 = vunpack.c.h.b16 %v3178
        %v3278 = vunpack.c.l.b16 %v3179
        %v3279 = vunpack.c.h.b16 %v3179
        %v3280 = vunpack.c.l.b16 %v3180
        %v3281 = vunpack.c.h.b16 %v3180
        %v3282 = vunpack.c.l.b16 %v3181
        %v3283 = vunpack.c.h.b16 %v3181
        %v3284 = vunpack.c.l.b16 %v3182
        %v3285 = vunpack.c.h.b16 %v3182
        %v3286 = vunpack.c.l.b16 %v3183
        %v3287 = vunpack.c.h.b16 %v3183
        %v3288 = vunpack.c.l.b16 %v3184
        %v3289 = vunpack.c.h.b16 %v3184
        %v3290 = vunpack.c.l.b16 %v3185
        %v3291 = vunpack.c.h.b16 %v3185
        %v3292 = vunpack.c.l.b16 %v3186
        %v3293 = vunpack.c.h.b16 %v3186
        %v3294 = vunpack.c.l.b16 %v3187
        %v3295 = vunpack.c.h.b16 %v3187
        %v3296 = vunpack.c.l.b16 %v3188
        %v3297 = vunpack.c.h.b16 %v3188
        %v3298 = vunpack.c.l.b16 %v3189
        %v3299 = vunpack.c.h.b16 %v3189
        %v3300 = vunpack.c.l.b16 %v3190
        %v3301 = vunpack.c.h.b16 %v3190
        %v3302 = vunpack.c.l.b16 %v3191
        %v3303 = vunpack.c.h.b16 %v3191
        %v3304 = vunpack.c.l.b16 %v3192
        %v3305 = vunpack.c.h.b16 %v3192
        %v3306 = vunpack.c.l.b16 %v3193
        %v3307 = vunpack.c.h.b16 %v3193
        %v3308 = vunpack.c.l.b16 %v3194
        %v3309 = vunpack.c.h.b16 %v3194
        %v3310 = vunpack.c.l.b16 %v3195
        %v3311 = vunpack.c.h.b16 %v3195
        %v3312 = vunpack.c.l.b16 %v3196
        %v3313 = vunpack.c.h.b16 %v3196
        %v3314 = vunpack.c.l.b16 %v3197
        %v3315 = vunpack.c.h.b16 %v3197
        %v3316 = vunpack.c.l.b16 %v3198
        %v3317 = vunpack.c.h.b16 %v3198
        %v3318 = vpack.c.b16 %v3258, %v3254
        %v3319 = vpack.c.b16 %v3259, %v3255
        %v3320 = vpack.c.b16 %v3260, %v3256
        %v3321 = vpack.c.b16 %v3261, %v3257
        %v3322 = vpack.c.b16 %v3266, %v3262
        %v3323 = vpack.c.b16 %v3267, %v3263
        %v3324 = vpack.c.b16 %v3268, %v3264
        %v3325 = vpack.c.b16 %v3269, %v3265
        %v3326 = vpack.c.b16 %v3274, %v3270
        %v3327 = vpack.c.b16 %v3275, %v3271
        %v3328 = vpack.c.b16 %v3276, %v3272
        %v3329 = vpack.c.b16 %v3277, %v3273
        %v3330 = vpack.c.b16 %v3282, %v3278
        %v3331 = vpack.c.b16 %v3283, %v3279
        %v3332 = vpack.c.b16 %v3284, %v3280
        %v3333 = vpack.c.b16 %v3285, %v3281
        %v3334 = vpack.c.b16 %v3290, %v3286
        %v3335 = vpack.c.b16 %v3291, %v3287
        %v3336 = vpack.c.b16 %v3292, %v3288
        %v3337 = vpack.c.b16 %v3293, %v3289
        %v3338 = vpack.c.b16 %v3298, %v3294
        %v3339 = vpack.c.b16 %v3299, %v3295
        %v3340 = vpack.c.b16 %v3300, %v3296
        %v3341 = vpack.c.b16 %v3301, %v3297
        %v3342 = vpack.c.b16 %v3306, %v3302
        %v3343 = vpack.c.b16 %v3307, %v3303
        %v3344 = vpack.c.b16 %v3308, %v3304
        %v3345 = vpack.c.b16 %v3309, %v3305
        %v3346 = vpack.c.b16 %v3314, %v3310
        %v3347 = vpack.c.b16 %v3315, %v3311
        %v3348 = vpack.c.b16 %v3316, %v3312
        %v3349 = vpack.c.b16 %v3317, %v3313
        %3382 = vmatprep.subr.bf16.mxu0 %v3319
        %3383 = vmatpush1.bf16.msra.mxu0 %v3318
        %3384 = vmatprep.subr.bf16.mxu0 %v3323
        %3385 = vmatpush1.bf16.msra.mxu0 %v3322
        %3386 = vmatprep.subr.bf16.mxu0 %v3327
        %3387 = vmatpush1.bf16.msra.mxu0 %v3326
        %3388 = vmatprep.subr.bf16.mxu0 %v3331
        %3389 = vmatpush1.bf16.msra.mxu0 %v3330
        %3390 = vmatprep.subr.bf16.mxu0 %v3335
        %3391 = vmatpush1.bf16.msra.mxu0 %v3334
        %3392 = vmatprep.subr.bf16.mxu0 %v3339
        %3393 = vmatpush1.bf16.msra.mxu0 %v3338
        %3394 = vmatprep.subr.bf16.mxu0 %v3343
        %3395 = vmatpush1.bf16.msra.mxu0 %v3342
        %3396 = vmatprep.subr.bf16.mxu0 %v3347
        %3397 = vmatpush1.bf16.msra.mxu0 %v3346
        %3398 = vmatprep.subr.bf16.mxu0 0
        %3399 = vmatpush1.bf16.msra.mxu0 0
        %3400 = vmatprep.subr.bf16.mxu0 0
        %3401 = vmatpush1.bf16.msra.mxu0 0
        %3402 = vmatprep.subr.bf16.mxu0 0
        %3403 = vmatpush1.bf16.msra.mxu0 0
        %3404 = vmatprep.subr.bf16.mxu0 0
        %3405 = vmatpush1.bf16.msra.mxu0 0
        %3406 = vmatprep.subr.bf16.mxu0 0
        %3407 = vmatpush1.bf16.msra.mxu0 0
        %3408 = vmatprep.subr.bf16.mxu0 0
        %3409 = vmatpush1.bf16.msra.mxu0 0
        %3410 = vmatprep.subr.bf16.mxu0 0
        %3411 = vmatpush1.bf16.msra.mxu0 0
        %3412 = vmatprep.subr.bf16.mxu0 0
        %3413 = vmatpush1.bf16.msra.mxu0 0
        %3414 = vmatprep.mubr.bf16.mxu0 0
        %3415 = vmatmul.mubr.bf16.gmra.mrb[0].mxu0 %v3165
        %v3416 = vpop.f32.mrb[0].mxu0
        %v3417 = vadd.f32 %v3205, %v3416
        %v3418 = vpop.f32.mrb[0].mxu0
        %v3419 = vadd.f32 %v3209, %v3418
        %v3420 = vpop.f32.mrb[0].mxu0
        %v3421 = vpop.f32.mrb[0].mxu0
        %3422 = vdwg.mxu0
        %3423 = vmatprep.subr.bf16.mxu0 %v3321
        %3424 = vmatpush1.bf16.msra.mxu0 %v3320
        %3425 = vmatprep.subr.bf16.mxu0 %v3325
        %3426 = vmatpush1.bf16.msra.mxu0 %v3324
        %3427 = vmatprep.subr.bf16.mxu0 %v3329
        %3428 = vmatpush1.bf16.msra.mxu0 %v3328
        %3429 = vmatprep.subr.bf16.mxu0 %v3333
        %3430 = vmatpush1.bf16.msra.mxu0 %v3332
        %3431 = vmatprep.subr.bf16.mxu0 %v3337
        %3432 = vmatpush1.bf16.msra.mxu0 %v3336
        %3433 = vmatprep.subr.bf16.mxu0 %v3341
        %3434 = vmatpush1.bf16.msra.mxu0 %v3340
        %3435 = vmatprep.subr.bf16.mxu0 %v3345
        %3436 = vmatpush1.bf16.msra.mxu0 %v3344
        %3437 = vmatprep.subr.bf16.mxu0 %v3349
        %3438 = vmatpush1.bf16.msra.mxu0 %v3348
        %3439 = vmatprep.subr.bf16.mxu0 0
        %3440 = vmatpush1.bf16.msra.mxu0 0
        %3441 = vmatprep.subr.bf16.mxu0 0
        %3442 = vmatpush1.bf16.msra.mxu0 0
        %3443 = vmatprep.subr.bf16.mxu0 0
        %3444 = vmatpush1.bf16.msra.mxu0 0
        %3445 = vmatprep.subr.bf16.mxu0 0
        %3446 = vmatpush1.bf16.msra.mxu0 0
        %3447 = vmatprep.subr.bf16.mxu0 0
        %3448 = vmatpush1.bf16.msra.mxu0 0
        %3449 = vmatprep.subr.bf16.mxu0 0
        %3450 = vmatpush1.bf16.msra.mxu0 0
        %3451 = vmatprep.subr.bf16.mxu0 0
        %3452 = vmatpush1.bf16.msra.mxu0 0
        %3453 = vmatprep.subr.bf16.mxu0 0
        %3454 = vmatpush1.bf16.msra.mxu0 0
        %3455 = vmatprep.mubr.bf16.mxu0 0
        %3456 = vmatmul.mubr.bf16.gmra.mrb[0].mxu0 %v3165
        %v3457 = vpop.f32.mrb[0].mxu0
        %v3458 = vadd.f32 %v3213, %v3457
        %v3459 = vpop.f32.mrb[0].mxu0
        %v3460 = vadd.f32 %v3217, %v3459
        %v3461 = vpop.f32.mrb[0].mxu0
        %v3462 = vpop.f32.mrb[0].mxu0
        %3463 = vdwg.mxu0
        %v3464 = vmax.f32 %v3417, 0.0
        %v3465 = vmax.f32 %v3419, 0.0
        %v3466 = vmax.f32 %v3458, 0.0
        %v3467 = vmax.f32 %v3460, 0.0
        %v3468 = vpack.c.bf16 %v3464, %v3464
        %v3469 = vpack.c.bf16 %v3465, %v3465
        %v3470 = vpack.c.bf16 %v3466, %v3466
        %v3471 = vpack.c.bf16 %v3467, %v3467
        %s3472 = scalar_lea.vmem %s7, 256
        %v3473 = vld [vmem:[%s3472] sm:$0xf]
        %v3474 = vld [vmem:[%s3472 + $0x4] sm:$0xf]
        %v3475 = vld [vmem:[%s3472 + $0x8] sm:$0xf]
        %v3476 = vld [vmem:[%s3472 + $0xc] sm:$0xf]
        %v3477 = vld [vmem:[%s3472 + $0x10] sm:$0xf]
        %v3478 = vld [vmem:[%s3472 + $0x14] sm:$0xf]
        %v3479 = vld [vmem:[%s3472 + $0x18] sm:$0xf]
        %v3480 = vld [vmem:[%s3472 + $0x1c] sm:$0xf]
        %v3481 = vld [vmem:[%s3472 + $0x20] sm:$0xf]
        %v3482 = vld [vmem:[%s3472 + $0x24] sm:$0xf]
        %v3483 = vld [vmem:[%s3472 + $0x28] sm:$0xf]
        %v3484 = vld [vmem:[%s3472 + $0x2c] sm:$0xf]
        %v3485 = vld [vmem:[%s3472 + $0x30] sm:$0xf]
        %v3486 = vld [vmem:[%s3472 + $0x34] sm:$0xf]
        %v3487 = vld [vmem:[%s3472 + $0x38] sm:$0xf]
        %v3488 = vld [vmem:[%s3472 + $0x3c] sm:$0xf]
        %v3489 = vld [vmem:[%s3472 + $0x40] sm:$0xf]
        %v3490 = vld [vmem:[%s3472 + $0x44] sm:$0xf]
        %v3491 = vld [vmem:[%s3472 + $0x48] sm:$0xf]
        %v3492 = vld [vmem:[%s3472 + $0x4c] sm:$0xf]
        %v3493 = vld [vmem:[%s3472 + $0x50] sm:$0xf]
        %v3494 = vld [vmem:[%s3472 + $0x54] sm:$0xf]
        %v3495 = vld [vmem:[%s3472 + $0x58] sm:$0xf]
        %v3496 = vld [vmem:[%s3472 + $0x5c] sm:$0xf]
        %v3497 = vld [vmem:[%s3472 + $0x60] sm:$0xf]
        %v3498 = vld [vmem:[%s3472 + $0x64] sm:$0xf]
        %v3499 = vld [vmem:[%s3472 + $0x68] sm:$0xf]
        %v3500 = vld [vmem:[%s3472 + $0x6c] sm:$0xf]
        %v3501 = vld [vmem:[%s3472 + $0x70] sm:$0xf]
        %v3502 = vld [vmem:[%s3472 + $0x74] sm:$0xf]
        %v3503 = vld [vmem:[%s3472 + $0x78] sm:$0xf]
        %v3504 = vld [vmem:[%s3472 + $0x7c] sm:$0xf]
        %v3505 = vld [vmem:[%s3472 + $0x80] sm:$0xf]
        %v3506 = vld [vmem:[%s3472 + $0x84] sm:$0xf]
        %v3507 = vld [vmem:[%s3472 + $0x88] sm:$0xf]
        %v3508 = vld [vmem:[%s3472 + $0x8c] sm:$0xf]
        %v3509 = vld [vmem:[%s3472 + $0x90] sm:$0xf]
        %v3510 = vld [vmem:[%s3472 + $0x94] sm:$0xf]
        %v3511 = vld [vmem:[%s3472 + $0x98] sm:$0xf]
        %v3512 = vld [vmem:[%s3472 + $0x9c] sm:$0xf]
        %v3513 = vld [vmem:[%s3472 + $0xa0] sm:$0xf]
        %v3514 = vld [vmem:[%s3472 + $0xa4] sm:$0xf]
        %v3515 = vld [vmem:[%s3472 + $0xa8] sm:$0xf]
        %v3516 = vld [vmem:[%s3472 + $0xac] sm:$0xf]
        %v3517 = vld [vmem:[%s3472 + $0xb0] sm:$0xf]
        %v3518 = vld [vmem:[%s3472 + $0xb4] sm:$0xf]
        %v3519 = vld [vmem:[%s3472 + $0xb8] sm:$0xf]
        %v3520 = vld [vmem:[%s3472 + $0xbc] sm:$0xf]
        %v3521 = vld [vmem:[%s3472 + $0xc0] sm:$0xf]
        %v3522 = vld [vmem:[%s3472 + $0xc4] sm:$0xf]
        %v3523 = vld [vmem:[%s3472 + $0xc8] sm:$0xf]
        %v3524 = vld [vmem:[%s3472 + $0xcc] sm:$0xf]
        %v3525 = vld [vmem:[%s3472 + $0xd0] sm:$0xf]
        %v3526 = vld [vmem:[%s3472 + $0xd4] sm:$0xf]
        %v3527 = vld [vmem:[%s3472 + $0xd8] sm:$0xf]
        %v3528 = vld [vmem:[%s3472 + $0xdc] sm:$0xf]
        %v3529 = vld [vmem:[%s3472 + $0xe0] sm:$0xf]
        %v3530 = vld [vmem:[%s3472 + $0xe4] sm:$0xf]
        %v3531 = vld [vmem:[%s3472 + $0xe8] sm:$0xf]
        %v3532 = vld [vmem:[%s3472 + $0xec] sm:$0xf]
        %v3533 = vld [vmem:[%s3472 + $0xf0] sm:$0xf]
        %v3534 = vld [vmem:[%s3472 + $0xf4] sm:$0xf]
        %v3535 = vld [vmem:[%s3472 + $0xf8] sm:$0xf]
        %v3536 = vld [vmem:[%s3472 + $0xfc] sm:$0xf]
        %s3537 = scalar_lea.vmem %s8, 1
        %v3538 = vld [vmem:[%s3537] sm:$0x1]
        %v3540 = vlaneseq
        %v3541 = vshrl.u32 %v3540, 7
        %v3542 = vsub.s32 0, %v3541
        %v3543 = vrot.slane %v3538, %v3542
        %v3609 = vunpack.c.l.b16 %v3473
        %v3610 = vunpack.c.l.b16 %v3474
        %v3611 = vunpack.c.l.b16 %v3475
        %v3612 = vunpack.c.l.b16 %v3476
        %v3613 = vunpack.c.l.b16 %v3477
        %v3614 = vunpack.c.l.b16 %v3478
        %v3615 = vunpack.c.l.b16 %v3479
        %v3616 = vunpack.c.l.b16 %v3480
        %v3617 = vunpack.c.l.b16 %v3481
        %v3618 = vunpack.c.l.b16 %v3482
        %v3619 = vunpack.c.l.b16 %v3483
        %v3620 = vunpack.c.l.b16 %v3484
        %v3621 = vunpack.c.l.b16 %v3485
        %v3622 = vunpack.c.l.b16 %v3486
        %v3623 = vunpack.c.l.b16 %v3487
        %v3624 = vunpack.c.l.b16 %v3488
        %v3625 = vunpack.c.l.b16 %v3489
        %v3626 = vunpack.c.l.b16 %v3490
        %v3627 = vunpack.c.l.b16 %v3491
        %v3628 = vunpack.c.l.b16 %v3492
        %v3629 = vunpack.c.l.b16 %v3493
        %v3630 = vunpack.c.l.b16 %v3494
        %v3631 = vunpack.c.l.b16 %v3495
        %v3632 = vunpack.c.l.b16 %v3496
        %v3633 = vunpack.c.l.b16 %v3497
        %v3634 = vunpack.c.l.b16 %v3498
        %v3635 = vunpack.c.l.b16 %v3499
        %v3636 = vunpack.c.l.b16 %v3500
        %v3637 = vunpack.c.l.b16 %v3501
        %v3638 = vunpack.c.l.b16 %v3502
        %v3639 = vunpack.c.l.b16 %v3503
        %v3640 = vunpack.c.l.b16 %v3504
        %v3641 = vunpack.c.l.b16 %v3505
        %v3642 = vunpack.c.l.b16 %v3506
        %v3643 = vunpack.c.l.b16 %v3507
        %v3644 = vunpack.c.l.b16 %v3508
        %v3645 = vunpack.c.l.b16 %v3509
        %v3646 = vunpack.c.l.b16 %v3510
        %v3647 = vunpack.c.l.b16 %v3511
        %v3648 = vunpack.c.l.b16 %v3512
        %v3649 = vunpack.c.l.b16 %v3513
        %v3650 = vunpack.c.l.b16 %v3514
        %v3651 = vunpack.c.l.b16 %v3515
        %v3652 = vunpack.c.l.b16 %v3516
        %v3653 = vunpack.c.l.b16 %v3517
        %v3654 = vunpack.c.l.b16 %v3518
        %v3655 = vunpack.c.l.b16 %v3519
        %v3656 = vunpack.c.l.b16 %v3520
        %v3657 = vunpack.c.l.b16 %v3521
        %v3658 = vunpack.c.l.b16 %v3522
        %v3659 = vunpack.c.l.b16 %v3523
        %v3660 = vunpack.c.l.b16 %v3524
        %v3661 = vunpack.c.l.b16 %v3525
        %v3662 = vunpack.c.l.b16 %v3526
        %v3663 = vunpack.c.l.b16 %v3527
        %v3664 = vunpack.c.l.b16 %v3528
        %v3665 = vunpack.c.l.b16 %v3529
        %v3666 = vunpack.c.l.b16 %v3530
        %v3667 = vunpack.c.l.b16 %v3531
        %v3668 = vunpack.c.l.b16 %v3532
        %v3669 = vunpack.c.l.b16 %v3533
        %v3670 = vunpack.c.l.b16 %v3534
        %v3671 = vunpack.c.l.b16 %v3535
        %v3672 = vunpack.c.l.b16 %v3536
        %v3673 = vpack.c.b16 %v3610, %v3609
        %v3674 = vpack.c.b16 %v3612, %v3611
        %v3675 = vpack.c.b16 %v3614, %v3613
        %v3676 = vpack.c.b16 %v3616, %v3615
        %v3677 = vpack.c.b16 %v3618, %v3617
        %v3678 = vpack.c.b16 %v3620, %v3619
        %v3679 = vpack.c.b16 %v3622, %v3621
        %v3680 = vpack.c.b16 %v3624, %v3623
        %v3681 = vpack.c.b16 %v3626, %v3625
        %v3682 = vpack.c.b16 %v3628, %v3627
        %v3683 = vpack.c.b16 %v3630, %v3629
        %v3684 = vpack.c.b16 %v3632, %v3631
        %v3685 = vpack.c.b16 %v3634, %v3633
        %v3686 = vpack.c.b16 %v3636, %v3635
        %v3687 = vpack.c.b16 %v3638, %v3637
        %v3688 = vpack.c.b16 %v3640, %v3639
        %v3689 = vpack.c.b16 %v3642, %v3641
        %v3690 = vpack.c.b16 %v3644, %v3643
        %v3691 = vpack.c.b16 %v3646, %v3645
        %v3692 = vpack.c.b16 %v3648, %v3647
        %v3693 = vpack.c.b16 %v3650, %v3649
        %v3694 = vpack.c.b16 %v3652, %v3651
        %v3695 = vpack.c.b16 %v3654, %v3653
        %v3696 = vpack.c.b16 %v3656, %v3655
        %v3697 = vpack.c.b16 %v3658, %v3657
        %v3698 = vpack.c.b16 %v3660, %v3659
        %v3699 = vpack.c.b16 %v3662, %v3661
        %v3700 = vpack.c.b16 %v3664, %v3663
        %v3701 = vpack.c.b16 %v3666, %v3665
        %v3702 = vpack.c.b16 %v3668, %v3667
        %v3703 = vpack.c.b16 %v3670, %v3669
        %v3704 = vpack.c.b16 %v3672, %v3671
        %3737 = vmatprep.subr.bf16.mxu0 0
        %3738 = vmatpush1.bf16.msra.mxu0 %v3673
        %3739 = vmatprep.subr.bf16.mxu0 0
        %3740 = vmatpush1.bf16.msra.mxu0 %v3674
        %3741 = vmatprep.subr.bf16.mxu0 0
        %3742 = vmatpush1.bf16.msra.mxu0 %v3675
        %3743 = vmatprep.subr.bf16.mxu0 0
        %3744 = vmatpush1.bf16.msra.mxu0 %v3676
        %3745 = vmatprep.subr.bf16.mxu0 0
        %3746 = vmatpush1.bf16.msra.mxu0 %v3677
        %3747 = vmatprep.subr.bf16.mxu0 0
        %3748 = vmatpush1.bf16.msra.mxu0 %v3678
        %3749 = vmatprep.subr.bf16.mxu0 0
        %3750 = vmatpush1.bf16.msra.mxu0 %v3679
        %3751 = vmatprep.subr.bf16.mxu0 0
        %3752 = vmatpush1.bf16.msra.mxu0 %v3680
        %3753 = vmatprep.subr.bf16.mxu0 0
        %3754 = vmatpush1.bf16.msra.mxu0 %v3681
        %3755 = vmatprep.subr.bf16.mxu0 0
        %3756 = vmatpush1.bf16.msra.mxu0 %v3682
        %3757 = vmatprep.subr.bf16.mxu0 0
        %3758 = vmatpush1.bf16.msra.mxu0 %v3683
        %3759 = vmatprep.subr.bf16.mxu0 0
        %3760 = vmatpush1.bf16.msra.mxu0 %v3684
        %3761 = vmatprep.subr.bf16.mxu0 0
        %3762 = vmatpush1.bf16.msra.mxu0 %v3685
        %3763 = vmatprep.subr.bf16.mxu0 0
        %3764 = vmatpush1.bf16.msra.mxu0 %v3686
        %3765 = vmatprep.subr.bf16.mxu0 0
        %3766 = vmatpush1.bf16.msra.mxu0 %v3687
        %3767 = vmatprep.subr.bf16.mxu0 0
        %3768 = vmatpush1.bf16.msra.mxu0 %v3688
        %3769 = vmatprep.mubr.bf16.mxu0 %v3469
        %3770 = vmatmul.mubr.bf16.gmra.mrb[0].mxu0 %v3468
        %v3771 = vpop.f32.mrb[0].mxu0
        %v3772 = vadd.f32 %v3543, %v3771
        %v3773 = vpop.f32.mrb[0].mxu0
        %v3774 = vpop.f32.mrb[0].mxu0
        %v3775 = vpop.f32.mrb[0].mxu0
        %3776 = vdwg.mxu0
        %3777 = vmatprep.subr.bf16.mxu0 0
        %3778 = vmatpush1.bf16.msra.mxu0 %v3689
        %3779 = vmatprep.subr.bf16.mxu0 0
        %3780 = vmatpush1.bf16.msra.mxu0 %v3690
        %3781 = vmatprep.subr.bf16.mxu0 0
        %3782 = vmatpush1.bf16.msra.mxu0 %v3691
        %3783 = vmatprep.subr.bf16.mxu0 0
        %3784 = vmatpush1.bf16.msra.mxu0 %v3692
        %3785 = vmatprep.subr.bf16.mxu0 0
        %3786 = vmatpush1.bf16.msra.mxu0 %v3693
        %3787 = vmatprep.subr.bf16.mxu0 0
        %3788 = vmatpush1.bf16.msra.mxu0 %v3694
        %3789 = vmatprep.subr.bf16.mxu0 0
        %3790 = vmatpush1.bf16.msra.mxu0 %v3695
        %3791 = vmatprep.subr.bf16.mxu0 0
        %3792 = vmatpush1.bf16.msra.mxu0 %v3696
        %3793 = vmatprep.subr.bf16.mxu0 0
        %3794 = vmatpush1.bf16.msra.mxu0 %v3697
        %3795 = vmatprep.subr.bf16.mxu0 0
        %3796 = vmatpush1.bf16.msra.mxu0 %v3698
        %3797 = vmatprep.subr.bf16.mxu0 0
        %3798 = vmatpush1.bf16.msra.mxu0 %v3699
        %3799 = vmatprep.subr.bf16.mxu0 0
        %3800 = vmatpush1.bf16.msra.mxu0 %v3700
        %3801 = vmatprep.subr.bf16.mxu0 0
        %3802 = vmatpush1.bf16.msra.mxu0 %v3701
        %3803 = vmatprep.subr.bf16.mxu0 0
        %3804 = vmatpush1.bf16.msra.mxu0 %v3702
        %3805 = vmatprep.subr.bf16.mxu0 0
        %3806 = vmatpush1.bf16.msra.mxu0 %v3703
        %3807 = vmatprep.subr.bf16.mxu0 0
        %3808 = vmatpush1.bf16.msra.mxu0 %v3704
        %3809 = vmatprep.mubr.bf16.mxu0 %v3471
        %3810 = vmatmul.mubr.bf16.gmra.mrb[0].mxu0 %v3470
        %v3811 = vpop.f32.mrb[0].mxu0
        %v3812 = vadd.f32 %v3772, %v3811
        %v3813 = vpop.f32.mrb[0].mxu0
        %v3814 = vpop.f32.mrb[0].mxu0
        %v3815 = vpop.f32.mrb[0].mxu0
        %3816 = vdwg.mxu0
        %v3817 = vadd.f32 %v3164, %v3812
        %v3818 = vpack.c.bf16 %v3817, %v3817
        %v3819 = vld [vmem:[%s9] sm:$0xf]
        %v3820 = vld [vmem:[%s9 + $0x4] sm:$0xf]
        %v3821 = vld [vmem:[%s9 + $0x8] sm:$0xf]
        %v3822 = vld [vmem:[%s9 + $0xc] sm:$0xf]
        %v3823 = vld [vmem:[%s9 + $0x10] sm:$0xf]
        %v3824 = vld [vmem:[%s9 + $0x14] sm:$0xf]
        %v3825 = vld [vmem:[%s9 + $0x18] sm:$0xf]
        %v3826 = vld [vmem:[%s9 + $0x1c] sm:$0xf]
        %v3827 = vld [vmem:[%s9 + $0x20] sm:$0xf]
        %v3828 = vld [vmem:[%s9 + $0x24] sm:$0xf]
        %v3829 = vld [vmem:[%s9 + $0x28] sm:$0xf]
        %v3830 = vld [vmem:[%s9 + $0x2c] sm:$0xf]
        %v3831 = vld [vmem:[%s9 + $0x30] sm:$0xf]
        %v3832 = vld [vmem:[%s9 + $0x34] sm:$0xf]
        %v3833 = vld [vmem:[%s9 + $0x38] sm:$0xf]
        %v3834 = vld [vmem:[%s9 + $0x3c] sm:$0xf]
        %v3851 = vunpack.c.l.b16 %v3819
        %v3852 = vunpack.c.l.b16 %v3820
        %v3853 = vunpack.c.l.b16 %v3821
        %v3854 = vunpack.c.l.b16 %v3822
        %v3855 = vunpack.c.l.b16 %v3823
        %v3856 = vunpack.c.l.b16 %v3824
        %v3857 = vunpack.c.l.b16 %v3825
        %v3858 = vunpack.c.l.b16 %v3826
        %v3859 = vunpack.c.l.b16 %v3827
        %v3860 = vunpack.c.l.b16 %v3828
        %v3861 = vunpack.c.l.b16 %v3829
        %v3862 = vunpack.c.l.b16 %v3830
        %v3863 = vunpack.c.l.b16 %v3831
        %v3864 = vunpack.c.l.b16 %v3832
        %v3865 = vunpack.c.l.b16 %v3833
        %v3866 = vunpack.c.l.b16 %v3834
        %v3867 = vpack.c.b16 %v3852, %v3851
        %v3868 = vpack.c.b16 %v3854, %v3853
        %v3869 = vpack.c.b16 %v3856, %v3855
        %v3870 = vpack.c.b16 %v3858, %v3857
        %v3871 = vpack.c.b16 %v3860, %v3859
        %v3872 = vpack.c.b16 %v3862, %v3861
        %v3873 = vpack.c.b16 %v3864, %v3863
        %v3874 = vpack.c.b16 %v3866, %v3865
        %3883 = vmatprep.subr.bf16.mxu0 0
        %3884 = vmatpush1.bf16.msra.mxu0 %v3867
        %3885 = vmatprep.subr.bf16.mxu0 0
        %3886 = vmatpush1.bf16.msra.mxu0 %v3868
        %3887 = vmatprep.subr.bf16.mxu0 0
        %3888 = vmatpush1.bf16.msra.mxu0 %v3869
        %3889 = vmatprep.subr.bf16.mxu0 0
        %3890 = vmatpush1.bf16.msra.mxu0 %v3870
        %3891 = vmatprep.subr.bf16.mxu0 0
        %3892 = vmatpush1.bf16.msra.mxu0 %v3871
        %3893 = vmatprep.subr.bf16.mxu0 0
        %3894 = vmatpush1.bf16.msra.mxu0 %v3872
        %3895 = vmatprep.subr.bf16.mxu0 0
        %3896 = vmatpush1.bf16.msra.mxu0 %v3873
        %3897 = vmatprep.subr.bf16.mxu0 0
        %3898 = vmatpush1.bf16.msra.mxu0 %v3874
        %3899 = vmatprep.subr.bf16.mxu0 0
        %3900 = vmatpush1.bf16.msra.mxu0 0
        %3901 = vmatprep.subr.bf16.mxu0 0
        %3902 = vmatpush1.bf16.msra.mxu0 0
        %3903 = vmatprep.subr.bf16.mxu0 0
        %3904 = vmatpush1.bf16.msra.mxu0 0
        %3905 = vmatprep.subr.bf16.mxu0 0
        %3906 = vmatpush1.bf16.msra.mxu0 0
        %3907 = vmatprep.subr.bf16.mxu0 0
        %3908 = vmatpush1.bf16.msra.mxu0 0
        %3909 = vmatprep.subr.bf16.mxu0 0
        %3910 = vmatpush1.bf16.msra.mxu0 0
        %3911 = vmatprep.subr.bf16.mxu0 0
        %3912 = vmatpush1.bf16.msra.mxu0 0
        %3913 = vmatprep.subr.bf16.mxu0 0
        %3914 = vmatpush1.bf16.msra.mxu0 0
        %3915 = vmatprep.mubr.bf16.mxu0 0
        %3916 = vmatmul.mubr.bf16.gmra.mrb[0].mxu0 %v3818
        %v3917 = vpop.f32.mrb[0].mxu0
        %v3918 = vadd.f32 0.0, %v3917
        %v3919 = vpop.f32.mrb[0].mxu0
        %v3920 = vpop.f32.mrb[0].mxu0
        %v3921 = vpop.f32.mrb[0].mxu0
        %3922 = vdwg.mxu0
        %3923 = vst [vmem:[%s317] sm:$0xff] %v3918
        %s3924 = sand.u32 %s227, 1
        %s3925 = scalar_lea.sflag [#allocation6], %s3924
        %s3926 = sand.u32 %s227, 1
        %s3927 = smul.addr %s3926, 8
        %s3928 = scalar_lea.vmem [#allocation5], %s3927
        // Predicated region
        $region57: #{transformer_forward.1} parent=55 // pred_check
          %p3929 = pneg %p237
        $region58: #{transformer_forward.1} parent=55 // pred_check_branch
          %3931 = sbr.rel (%p3929) target = $region60
        $region59: #{transformer_forward.1} parent=55 // pred_region
          %s3933 = ssub.s32 128, 128
          %3934 = vsyncadd %s3925, %s3933
          %s3935 = smul.addr %s30, 128
          %s3936 = scalar_lea.hbm %s10, %s3935
          %s3938 = sshll.u32 %s3928, 4
          %s3939 = int_to_ptr.vmem [resolvable:$true] %s3938
          %3941 = dma.vmem_to_hbm [thread:$0]  %s3939, 128, %s3936, %s3925
        $region60: #{transformer_forward.1} parent=55 // pred_fallthru
          _
      $region56: #{transformer_forward.1} parent=5 // pred_fallthru
        _
      %p3942 = scmp.le.s32.totalorder 2, %s25
      // Predicated region
      $region61: #{transformer_forward.1} parent=5 // pred_check
        %p3943 = pneg %p3942
      $region62: #{transformer_forward.1} parent=5 // pred_check_branch
        %3945 = sbr.rel (%p3943) target = $region64
      $region63: #{transformer_forward.1} parent=5 // pred_region
        %s3946 = ssub.s32 %s25, 2
        // Predicated region
        $region65: #{transformer_forward.1} parent=63 // pred_check
          %p3947 = pneg %p243
        $region66: #{transformer_forward.1} parent=63 // pred_check_branch
          %3949 = sbr.rel (%p3947) target = $region68
        $region67: #{transformer_forward.1} parent=63 // pred_region
          %s3950 = sand.u32 %s228, 1
          %s3951 = scalar_lea.sflag [#allocation6], %s3950
          %s3952 = sand.u32 %s228, 1
          %s3953 = smul.addr %s3952, 8
          %s3954 = scalar_lea.vmem [#allocation5], %s3953
          %3955 = dma.done %s3951, 128
        $region68: #{transformer_forward.1} parent=63 // pred_fallthru
          _
      $region64: #{transformer_forward.1} parent=5 // pred_fallthru
        _
    $region6: #{transformer_forward.1} parent=1 // loop_footer
      %s29 = sadd.s32 1, %s25
    $region7: #{transformer_forward.1} parent=1 // loop_footer_branch
      %24 = sbr.rel target = $region3
    $region8: #{transformer_forward.1} parent=1 // loop_exit
      _
    %3956 = vsyncpa [#allocation6], 1
    %s3957 = scalar_lea.sflag [#allocation6], 1
    %3958 = vsyncpa %s3957, 1

</llo_original>
